<compile_context>
chip_gen: v5e
topology: v5e:2x2
jax: 0.10.0
libtpu: 0.0.40
codegen_flags: <defaults>
</compile_context>

<pallas_src>
import numpy as np
import jax
import jax.numpy as jnp
from jax.experimental import pallas as pl
from jax.experimental.pallas import tpu as pltpu

BIKE_SIZE = 50                                   # stand-in for get_Parameter('bike_size')
FEATURE_SIZES = [2, 1, 1, 200 + BIKE_SIZE, 7, 24, 2]
FIELD_SIZE = 7
BN_EPS = 1e-5

# Fields 1 and 2 are statically dead (index and value both forced to 0 by the aliasing
# in the PyTorch forward) -> they contribute exactly zero to every accumulator.
# Active fields are split into:
#   * PACKED_FIELDS: small vocabularies packed into one shared 128-row K segment
#   * BIG_FIELD:     the 250-entry vocabulary, in its own 256-row K segment
PACKED_FIELDS = (0, 4, 5, 6)
BIG_FIELD = 3

_offs, _o = [], 0
for _i in PACKED_FIELDS:
    _offs.append(_o)
    _o += FEATURE_SIZES[_i]
PACKED_OFFSETS = tuple(_offs)                    # (0, 2, 9, 33)


def _round_up(x, m):
    return ((x + m - 1) // m) * m


K_A = _round_up(_o, 128)                         # 128-row packed segment
K_B = _round_up(FEATURE_SIZES[BIG_FIELD], 128)   # 256-row segment for field 3


def make_kernel(E, K_a, K_b, H1, num_deep_rest, num_packed):
    """Fused FM + deep-MLP + concat kernel for one row-tile of tokens."""

    def kernel(idx_ref, tab_a_ref, tab_b_ref, b1_ref, *rest):
        deep_refs = rest[:2 * num_deep_rest]                 # (w2, b2, w3, b3, ...)
        wc2_ref = rest[2 * num_deep_rest]                    # Wc rows F: (2E, E)
        bc_ref = rest[2 * num_deep_rest + 1]                 # (1, E)
        out_ref = rest[2 * num_deep_rest + 2]

        idx = idx_ref[...]                                   # (tm, num_packed + 1) int32
        tm = idx.shape[0]

        # Segment A: four small-vocab fields share one K_a-row segment -> one multi-hot
        # (per-field row offsets were added host-side, so the hot lanes are distinct).
        iota_a = jax.lax.broadcasted_iota(jnp.int32, (tm, K_a), 1)
        hot = iota_a == idx[:, 0:1]
        for a in range(1, num_packed):
            hot = jnp.logical_or(hot, iota_a == idx[:, a:a + 1])
        oh_a = hot.astype(jnp.bfloat16)                      # 0/1 exact in bf16

        # Segment B: the large-vocab field (field 3), its own K_b-row one-hot.
        iota_b = jax.lax.broadcasted_iota(jnp.int32, (tm, K_b), 1)
        oh_b = (iota_b == idx[:, num_packed:num_packed + 1]).astype(jnp.bfloat16)

        # bf16 hi/lo table pair: two bf16 MXU passes per segment, f32 accumulation,
        # reconstructs the f32 table rows exactly enough (one-hot gather is exact per half).
        acc = jnp.dot(oh_a, tab_a_ref[0], preferred_element_type=jnp.float32)
        acc = acc + jnp.dot(oh_a, tab_a_ref[1], preferred_element_type=jnp.float32)
        acc = acc + jnp.dot(oh_b, tab_b_ref[0], preferred_element_type=jnp.float32)
        acc = acc + jnp.dot(oh_b, tab_b_ref[1], preferred_element_type=jnp.float32)

        deep_pre = acc[:, :H1]                               # sum_i s_i @ W1_block_i
        sum_emb = acc[:, H1:H1 + E]                          # sum_i s_i
        sum_sq = acc[:, H1 + E:H1 + 2 * E]                   # sum_i s_i * s_i
        first_part = acc[:, H1 + 2 * E:H1 + 3 * E]           # fm_first @ Wc[:F]

        fm_second = 0.5 * (sum_emb * sum_emb - sum_sq)

        # deep MLP: Linear (+ folded eval-mode BatchNorm1d) + ReLU, kept in f32
        deep_out = jnp.maximum(deep_pre + b1_ref[...], 0.0)
        for l in range(num_deep_rest):
            w = deep_refs[2 * l][...]
            b = deep_refs[2 * l + 1][...]
            deep_out = jnp.maximum(
                jnp.dot(deep_out, w, preferred_element_type=jnp.float32) + b, 0.0)

        # fused epilogue: one (tm, 2E) @ (2E, E) matmul instead of two K=E matmuls
        cat = jnp.concatenate([fm_second, deep_out], axis=1)            # (tm, 2E)
        out_ref[...] = (first_part
                        + jnp.dot(cat, wc2_ref[...], preferred_element_type=jnp.float32)
                        + bc_ref[...])

    return kernel


def init_params(key, E, hidden_dim):
    assert hidden_dim[-1] == E, "concat Linear requires hidden_dim[-1] == embedding_size"
    V_pad = _round_up(max(FEATURE_SIZES), 128)
    keys = jax.random.split(key, 4)

    # FM embedding tables (nn.Embedding default ~ N(0,1)), zero-padded to V_pad rows.
    ftab = jnp.zeros((FIELD_SIZE, V_pad), jnp.float32)
    stab = jnp.zeros((FIELD_SIZE, V_pad, E), jnp.float32)
    for i, fs in enumerate(FEATURE_SIZES):
        k1, k2 = jax.random.split(jax.random.fold_in(keys[0], i))
        ftab = ftab.at[i, :fs].set(jax.random.normal(k1, (fs,), jnp.float32))
        stab = stab.at[i, :fs, :].set(jax.random.normal(k2, (fs, E), jnp.float32))

    # Deep part: Linear + eval-mode BatchNorm1d folded into effective (W, b).
    all_dims = [FIELD_SIZE * E] + list(hidden_dim)
    deep_w_eff, deep_b_eff = [], []
    for li in range(1, len(all_dims)):
        din, dout = all_dims[li - 1], all_dims[li]
        kw, kb, kg, kbe = jax.random.split(jax.random.fold_in(keys[1], li), 4)
        bound = 1.0 / np.sqrt(din)
        w = jax.random.uniform(kw, (din, dout), jnp.float32, -bound, bound)
        b = jax.random.uniform(kb, (dout,), jnp.float32, -bound, bound)
        gamma = 1.0 + 0.1 * jax.random.normal(kg, (dout,), jnp.float32)
        beta = 0.1 * jax.random.normal(kbe, (dout,), jnp.float32)
        running_mean = jnp.zeros((dout,), jnp.float32)
        running_var = jnp.ones((dout,), jnp.float32)
        scale = gamma / jnp.sqrt(running_var + BN_EPS)
        deep_w_eff.append(w * scale[None, :])
        deep_b_eff.append((b - running_mean) * scale + beta)

    din = FIELD_SIZE + 2 * E
    bound = 1.0 / np.sqrt(din)
    wc = jax.random.uniform(keys[2], (din, E), jnp.float32, -bound, bound)
    bc = jax.random.uniform(keys[3], (E,), jnp.float32, -bound, bound)

    return dict(E=E, hidden_dim=list(hidden_dim), ftab=ftab, stab=stab,
                deep_w_eff=deep_w_eff, deep_b_eff=deep_b_eff, wc=wc, bc=bc)


def _build_fused_tables(params):
    """Two K-packed gather tables (bf16 hi/lo pairs), lanes = [deep_pre|s|s^2|first] pad 128."""
    E = params["E"]
    H1 = params["hidden_dim"][0]
    stab, ftab = params["stab"], params["ftab"]
    w1, wc = params["deep_w_eff"][0], params["wc"]
    ncols = H1 + 3 * E
    ncols_pad = _round_up(ncols, 128)

    def field_block(i):
        fs = FEATURE_SIZES[i]
        s = stab[i, :fs]                                          # (fs, E)
        deep_cols = s @ w1[i * E:(i + 1) * E, :]                  # (fs, H1)
        first_cols = ftab[i, :fs][:, None] * wc[i, :][None, :]    # (fs, E)
        blk = jnp.concatenate([deep_cols, s, s * s, first_cols], axis=1)
        return jnp.pad(blk, ((0, 0), (0, ncols_pad - ncols)))

    tab_a = jnp.zeros((K_A, ncols_pad), jnp.float32)
    for i, off in zip(PACKED_FIELDS, PACKED_OFFSETS):
        tab_a = tab_a.at[off:off + FEATURE_SIZES[i]].set(field_block(i))

    tab_b = jnp.zeros((K_B, ncols_pad), jnp.float32)
    tab_b = tab_b.at[:FEATURE_SIZES[BIG_FIELD]].set(field_block(BIG_FIELD))

    def hi_lo(t):
        hi = t.astype(jnp.bfloat16)
        lo = (t - hi.astype(jnp.float32)).astype(jnp.bfloat16)
        return jnp.stack([hi, lo], axis=0)                        # (2, K, ncols_pad)

    return hi_lo(tab_a), hi_lo(tab_b)


def _indices_and_values(covariate):
    """Full 7-field indices/values mirroring the PyTorch aliasing (used by the reference)."""
    B, T, N, F = covariate.shape
    M = B * T * N
    feat = covariate.reshape(M, F)
    idx = feat.at[:, 1:3].set(0.0).astype(jnp.int32)
    vals = jnp.ones((M, F), jnp.float32).at[:, 1:3].set(0.0)
    return idx, vals


def _token_indices(covariate):
    """Live-field indices only; packed fields carry their K-segment row offsets."""
    B, T, N, F = covariate.shape
    feat = covariate.reshape(B * T * N, F).astype(jnp.int32)
    packed = jnp.stack([feat[:, i] + off
                        for i, off in zip(PACKED_FIELDS, PACKED_OFFSETS)], axis=1)
    big = feat[:, BIG_FIELD:BIG_FIELD + 1]
    return jnp.concatenate([packed, big], axis=1)                 # (M, 5) int32


def feature_embedding_forward(covariate, params, *, tm=1024):
    B, T, N, F = covariate.shape
    assert F == FIELD_SIZE
    E = params["E"]
    hidden = params["hidden_dim"]
    H1 = hidden[0]
    num_deep_rest = len(hidden) - 1
    num_packed = len(PACKED_FIELDS)

    M = B * T * N
    # Cap tm so the 'parallel' grid axis has >= 2 steps when possible (v7x has 2 TCs);
    # keep tm a multiple of 8 for sublane alignment.
    tm = max(8, min(tm, _round_up(pl.cdiv(M, 2), 8)))
    M_pad = pl.cdiv(M, tm) * tm                 # pad rows (index 0 is valid; sliced off)

    idx = _token_indices(covariate)
    if M_pad != M:
        idx = jnp.pad(idx, ((0, M_pad - M), (0, 0)))

    tab_a, tab_b = _build_fused_tables(params)   # bf16 (2, K_A, 128) and (2, K_B, 128)
    wc2 = params["wc"][FIELD_SIZE:, :]           # (2E, E)
    bc = params["bc"].reshape(1, E)
    b1 = params["deep_b_eff"][0].reshape(1, H1)

    num_idx_cols = idx.shape[1]
    in_specs = [
        pl.BlockSpec((tm, num_idx_cols), lambda m: (m, 0)),
        pl.BlockSpec(tab_a.shape, lambda m: (0, 0, 0)),
        pl.BlockSpec(tab_b.shape, lambda m: (0, 0, 0)),
        pl.BlockSpec((1, H1), lambda m: (0, 0)),
    ]
    args = [idx, tab_a, tab_b, b1]
    for w, b in zip(params["deep_w_eff"][1:], params["deep_b_eff"][1:]):
        b2 = b.reshape(1, -1)
        in_specs.append(pl.BlockSpec(w.shape, lambda m: (0, 0)))
        in_specs.append(pl.BlockSpec(b2.shape, lambda m: (0, 0)))
        args.append(w)
        args.append(b2)
    in_specs.append(pl.BlockSpec(wc2.shape, lambda m: (0, 0)))
    in_specs.append(pl.BlockSpec(bc.shape, lambda m: (0, 0)))
    args.append(wc2)
    args.append(bc)

    kernel = make_kernel(E, K_A, K_B, H1, num_deep_rest, num_packed)

    out = pl.pallas_call(
        kernel,
        out_shape=jax.ShapeDtypeStruct((M_pad, E), jnp.float32),
        grid_spec=pltpu.PrefetchScalarGridSpec(
            num_scalar_prefetch=0,
            grid=(M_pad // tm,),
            in_specs=in_specs,
            out_specs=pl.BlockSpec((tm, E), lambda m: (m, 0)),
        ),
        compiler_params=pltpu.CompilerParams(
            dimension_semantics=("parallel",),
            # Working set per tile is only a few MiB even at tm=2048; 32 MiB leaves
            # plenty of headroom while staying inside v7x's 64 MiB physical VMEM.
            vmem_limit_bytes=32 * 1024 * 1024,
        ),
    )(*args)
    return out[:M].reshape(B, T, N, E)


def reference_forward(covariate, params):
    """Pure-JAX mirror of the PyTorch forward (type='all'), for correctness checking."""
    B, T, N, F = covariate.shape
    E = params["E"]
    idx, vals = _indices_and_values(covariate)

    first = jnp.stack([params["ftab"][i][idx[:, i]] * vals[:, i]
                       for i in range(F)], axis=1)                       # (M, 7)
    sec = [params["stab"][i][idx[:, i]] * vals[:, i:i + 1]
           for i in range(F)]                                            # each (M, E)
    sum_emb = sum(sec)
    fm_second = 0.5 * (sum_emb * sum_emb - sum(s * s for s in sec))
    deep = jnp.concatenate(sec, axis=1)
    for w, b in zip(params["deep_w_eff"], params["deep_b_eff"]):
        deep = jnp.maximum(deep @ w + b, 0.0)
    cat = jnp.concatenate([first, fm_second, deep], axis=1)
    out = cat @ params["wc"] + params["bc"]
    return out.reshape(B, T, N, E)


if __name__ == "__main__":
    key = jax.random.PRNGKey(0)
    kp, kc = jax.random.split(key)

    E = 16
    hidden_dim = [32, 16]                      # last hidden dim must equal E
    params = init_params(kp, E, hidden_dim)

    B, T, N = 2, 8, 64                         # M = 1024 tokens -> tm capped to 512, 2 grid steps
    ks = jax.random.split(kc, 7)
    f0 = jax.random.randint(ks[0], (B, T, N), 0, FEATURE_SIZES[0]).astype(jnp.float32)
    f1 = jax.random.uniform(ks[1], (B, T, N), jnp.float32)          # continuous (zeroed by alias bug)
    f2 = jax.random.uniform(ks[2], (B, T, N), jnp.float32)          # continuous (zeroed by alias bug)
    f3 = jax.random.randint(ks[3], (B, T, N), 0, FEATURE_SIZES[3]).astype(jnp.float32)
    f4 = jax.random.randint(ks[4], (B, T, N), 0, FEATURE_SIZES[4]).astype(jnp.float32)
    f5 = jax.random.randint(ks[5], (B, T, N), 0, FEATURE_SIZES[5]).astype(jnp.float32)
    f6 = jax.random.randint(ks[6], (B, T, N), 0, FEATURE_SIZES[6]).astype(jnp.float32)
    covariate = jnp.stack([f0, f1, f2, f3, f4, f5, f6], axis=-1)    # (B, T, N, 7)

    out = feature_embedding_forward(covariate, params)
    out = jax.block_until_ready(out)

    ref = reference_forward(covariate, params)
    np.testing.assert_allclose(np.asarray(out), np.asarray(ref), rtol=2e-3, atol=2e-3)

    print("KERNEL_OK")
</pallas_src>

<mosaic_0001>
module attributes {stable_mosaic.version = 11 : i64} {
  func.func @kernel(%arg0: i32, %arg1: memref<512x5xi32, #tpu.memory_space<vmem>>, %arg2: memref<2x128x128xbf16, #tpu.memory_space<vmem>>, %arg3: memref<2x256x128xbf16, #tpu.memory_space<vmem>>, %arg4: memref<1x32xf32, #tpu.memory_space<vmem>>, %arg5: memref<32x16xf32, #tpu.memory_space<vmem>>, %arg6: memref<1x16xf32, #tpu.memory_space<vmem>>, %arg7: memref<32x16xf32, #tpu.memory_space<vmem>>, %arg8: memref<1x16xf32, #tpu.memory_space<vmem>>, %arg9: memref<512x16xf32, #tpu.memory_space<vmem>>) attributes {dimension_semantics = [#tpu.dimension_semantics<parallel>], iteration_bounds = array<i64: 2>, scalar_prefetch = 0 : i64, scratch_operands = 0 : i64, tpu.core_type = #tpu.core_type<tc>, window_params = [{transform_indices = @transform_0, window_bounds = array<i64: 512, 5>}, {pipeline_mode = #tpu.pipeline_mode<synchronous>, transform_indices = @transform_1, window_bounds = array<i64: 2, 128, 128>}, {pipeline_mode = #tpu.pipeline_mode<synchronous>, transform_indices = @transform_2, window_bounds = array<i64: 2, 256, 128>}, {pipeline_mode = #tpu.pipeline_mode<synchronous>, transform_indices = @transform_3, window_bounds = array<i64: 1, 32>}, {pipeline_mode = #tpu.pipeline_mode<synchronous>, transform_indices = @transform_4, window_bounds = array<i64: 32, 16>}, {pipeline_mode = #tpu.pipeline_mode<synchronous>, transform_indices = @transform_5, window_bounds = array<i64: 1, 16>}, {pipeline_mode = #tpu.pipeline_mode<synchronous>, transform_indices = @transform_6, window_bounds = array<i64: 32, 16>}, {pipeline_mode = #tpu.pipeline_mode<synchronous>, transform_indices = @transform_7, window_bounds = array<i64: 1, 16>}, {transform_indices = @transform_8, window_bounds = array<i64: 512, 16>}]} {
    %c0 = arith.constant 0 : index
    %c0_0 = arith.constant 0 : index
    %0 = vector.load %arg1[%c0, %c0_0] : memref<512x5xi32, #tpu.memory_space<vmem>>, vector<512x5xi32>
    %1 = tpu.iota {dimensions = array<i32: 1>} : vector<512x128xi32>
    %2 = vector.extract_strided_slice %0 {offsets = [0, 0], sizes = [512, 1], strides = [1, 1]} : vector<512x5xi32> to vector<512x1xi32>
    %3 = vector.broadcast %2 : vector<512x1xi32> to vector<512x128xi32>
    %4 = arith.cmpi eq, %1, %3 : vector<512x128xi32>
    %5 = vector.extract_strided_slice %0 {offsets = [0, 1], sizes = [512, 1], strides = [1, 1]} : vector<512x5xi32> to vector<512x1xi32>
    %6 = vector.broadcast %5 : vector<512x1xi32> to vector<512x128xi32>
    %7 = arith.cmpi eq, %1, %6 : vector<512x128xi32>
    %8 = arith.ori %4, %7 : vector<512x128xi1>
    %9 = vector.extract_strided_slice %0 {offsets = [0, 2], sizes = [512, 1], strides = [1, 1]} : vector<512x5xi32> to vector<512x1xi32>
    %10 = vector.broadcast %9 : vector<512x1xi32> to vector<512x128xi32>
    %11 = arith.cmpi eq, %1, %10 : vector<512x128xi32>
    %12 = arith.ori %8, %11 : vector<512x128xi1>
    %13 = vector.extract_strided_slice %0 {offsets = [0, 3], sizes = [512, 1], strides = [1, 1]} : vector<512x5xi32> to vector<512x1xi32>
    %14 = vector.broadcast %13 : vector<512x1xi32> to vector<512x128xi32>
    %15 = arith.cmpi eq, %1, %14 : vector<512x128xi32>
    %16 = arith.ori %12, %15 : vector<512x128xi1>
    %17 = arith.extui %16 : vector<512x128xi1> to vector<512x128xi32>
    %18 = arith.sitofp %17 : vector<512x128xi32> to vector<512x128xf32>
    %19 = arith.truncf %18 : vector<512x128xf32> to vector<512x128xbf16>
    %20 = tpu.iota {dimensions = array<i32: 1>} : vector<512x256xi32>
    %21 = vector.extract_strided_slice %0 {offsets = [0, 4], sizes = [512, 1], strides = [1, 1]} : vector<512x5xi32> to vector<512x1xi32>
    %22 = vector.broadcast %21 : vector<512x1xi32> to vector<512x256xi32>
    %23 = arith.cmpi eq, %20, %22 : vector<512x256xi32>
    %24 = arith.extui %23 : vector<512x256xi1> to vector<512x256xi32>
    %25 = arith.sitofp %24 : vector<512x256xi32> to vector<512x256xf32>
    %26 = arith.truncf %25 : vector<512x256xf32> to vector<512x256xbf16>
    %c0_1 = arith.constant 0 : index
    %c0_2 = arith.constant 0 : index
    %c0_3 = arith.constant 0 : index
    %27 = vector.load %arg2[%c0_1, %c0_2, %c0_3] : memref<2x128x128xbf16, #tpu.memory_space<vmem>>, vector<1x128x128xbf16>
    %28 = vector.shape_cast %27 : vector<1x128x128xbf16> to vector<128x128xbf16>
    %cst = arith.constant dense<0.000000e+00> : vector<512x128xf32>
    %29 = tpu.matmul %19, %28, %cst {dimension_numbers = #tpu.dot_dimension_numbers<[1], [0], [0], [1], [0, 0, 1, 1], [], []>} : vector<512x128xbf16>, vector<128x128xbf16>, vector<512x128xf32> -> vector<512x128xf32>
    %c1 = arith.constant 1 : index
    %c0_4 = arith.constant 0 : index
    %c0_5 = arith.constant 0 : index
    %30 = vector.load %arg2[%c1, %c0_4, %c0_5] : memref<2x128x128xbf16, #tpu.memory_space<vmem>>, vector<1x128x128xbf16>
    %31 = vector.shape_cast %30 : vector<1x128x128xbf16> to vector<128x128xbf16>
    %cst_6 = arith.constant dense<0.000000e+00> : vector<512x128xf32>
    %32 = tpu.matmul %19, %31, %cst_6 {dimension_numbers = #tpu.dot_dimension_numbers<[1], [0], [0], [1], [0, 0, 1, 1], [], []>} : vector<512x128xbf16>, vector<128x128xbf16>, vector<512x128xf32> -> vector<512x128xf32>
    %33 = arith.addf %29, %32 : vector<512x128xf32>
    %c0_7 = arith.constant 0 : index
    %c0_8 = arith.constant 0 : index
    %c0_9 = arith.constant 0 : index
    %34 = vector.load %arg3[%c0_7, %c0_8, %c0_9] : memref<2x256x128xbf16, #tpu.memory_space<vmem>>, vector<1x256x128xbf16>
    %35 = vector.shape_cast %34 : vector<1x256x128xbf16> to vector<256x128xbf16>
    %cst_10 = arith.constant dense<0.000000e+00> : vector<512x128xf32>
    %36 = tpu.matmul %26, %35, %cst_10 {dimension_numbers = #tpu.dot_dimension_numbers<[1], [0], [0], [1], [0, 0, 1, 1], [], []>} : vector<512x256xbf16>, vector<256x128xbf16>, vector<512x128xf32> -> vector<512x128xf32>
    %37 = arith.addf %33, %36 : vector<512x128xf32>
    %c1_11 = arith.constant 1 : index
    %c0_12 = arith.constant 0 : index
    %c0_13 = arith.constant 0 : index
    %38 = vector.load %arg3[%c1_11, %c0_12, %c0_13] : memref<2x256x128xbf16, #tpu.memory_space<vmem>>, vector<1x256x128xbf16>
    %39 = vector.shape_cast %38 : vector<1x256x128xbf16> to vector<256x128xbf16>
    %cst_14 = arith.constant dense<0.000000e+00> : vector<512x128xf32>
    %40 = tpu.matmul %26, %39, %cst_14 {dimension_numbers = #tpu.dot_dimension_numbers<[1], [0], [0], [1], [0, 0, 1, 1], [], []>} : vector<512x256xbf16>, vector<256x128xbf16>, vector<512x128xf32> -> vector<512x128xf32>
    %41 = arith.addf %37, %40 : vector<512x128xf32>
    %42 = vector.extract_strided_slice %41 {offsets = [0, 0], sizes = [512, 32], strides = [1, 1]} : vector<512x128xf32> to vector<512x32xf32>
    %43 = vector.extract_strided_slice %41 {offsets = [0, 32], sizes = [512, 16], strides = [1, 1]} : vector<512x128xf32> to vector<512x16xf32>
    %44 = vector.extract_strided_slice %41 {offsets = [0, 48], sizes = [512, 16], strides = [1, 1]} : vector<512x128xf32> to vector<512x16xf32>
    %45 = vector.extract_strided_slice %41 {offsets = [0, 64], sizes = [512, 16], strides = [1, 1]} : vector<512x128xf32> to vector<512x16xf32>
    %46 = arith.mulf %43, %43 : vector<512x16xf32>
    %47 = arith.subf %46, %44 : vector<512x16xf32>
    %cst_15 = arith.constant 5.000000e-01 : f32
    %48 = vector.broadcast %cst_15 : f32 to vector<512x16xf32>
    %49 = arith.mulf %48, %47 : vector<512x16xf32>
    %c0_16 = arith.constant 0 : index
    %c0_17 = arith.constant 0 : index
    %50 = vector.load %arg4[%c0_16, %c0_17] : memref<1x32xf32, #tpu.memory_space<vmem>>, vector<1x32xf32>
    %51 = vector.broadcast %50 : vector<1x32xf32> to vector<512x32xf32>
    %52 = arith.addf %42, %51 : vector<512x32xf32>
    %cst_18 = arith.constant 0.000000e+00 : f32
    %53 = vector.broadcast %cst_18 : f32 to vector<512x32xf32>
    %54 = arith.maximumf %52, %53 : vector<512x32xf32>
    %c0_19 = arith.constant 0 : index
    %c0_20 = arith.constant 0 : index
    %55 = vector.load %arg5[%c0_19, %c0_20] : memref<32x16xf32, #tpu.memory_space<vmem>>, vector<32x16xf32>
    %c0_21 = arith.constant 0 : index
    %c0_22 = arith.constant 0 : index
    %56 = vector.load %arg6[%c0_21, %c0_22] : memref<1x16xf32, #tpu.memory_space<vmem>>, vector<1x16xf32>
    %cst_23 = arith.constant dense<0.000000e+00> : vector<512x16xf32>
    %57 = tpu.matmul %54, %55, %cst_23 {dimension_numbers = #tpu.dot_dimension_numbers<[1], [0], [0], [1], [0, 0, 1, 1], [], []>} : vector<512x32xf32>, vector<32x16xf32>, vector<512x16xf32> -> vector<512x16xf32>
    %58 = vector.broadcast %56 : vector<1x16xf32> to vector<512x16xf32>
    %59 = arith.addf %57, %58 : vector<512x16xf32>
    %cst_24 = arith.constant 0.000000e+00 : f32
    %60 = vector.broadcast %cst_24 : f32 to vector<512x16xf32>
    %61 = arith.maximumf %59, %60 : vector<512x16xf32>
    %62 = tpu.concatenate %49, %61 in 1 : vector<512x16xf32>, vector<512x16xf32> -> vector<512x32xf32>
    %c0_25 = arith.constant 0 : index
    %c0_26 = arith.constant 0 : index
    %63 = vector.load %arg7[%c0_25, %c0_26] : memref<32x16xf32, #tpu.memory_space<vmem>>, vector<32x16xf32>
    %cst_27 = arith.constant dense<0.000000e+00> : vector<512x16xf32>
    %64 = tpu.matmul %62, %63, %cst_27 {dimension_numbers = #tpu.dot_dimension_numbers<[1], [0], [0], [1], [0, 0, 1, 1], [], []>} : vector<512x32xf32>, vector<32x16xf32>, vector<512x16xf32> -> vector<512x16xf32>
    %65 = arith.addf %45, %64 : vector<512x16xf32>
    %c0_28 = arith.constant 0 : index
    %c0_29 = arith.constant 0 : index
    %66 = vector.load %arg8[%c0_28, %c0_29] : memref<1x16xf32, #tpu.memory_space<vmem>>, vector<1x16xf32>
    %67 = vector.broadcast %66 : vector<1x16xf32> to vector<512x16xf32>
    %68 = arith.addf %65, %67 : vector<512x16xf32>
    %c0_30 = arith.constant 0 : index
    %c0_31 = arith.constant 0 : index
    %69 = vector.load %arg9[%c0_30, %c0_31] : memref<512x16xf32, #tpu.memory_space<vmem>>, vector<512x16xf32>
    tpu.vector_store %arg9[%c0_30, %c0_31], %68 {strides = array<i32>} : memref<512x16xf32, #tpu.memory_space<vmem>>, vector<512x16xf32>,
    return
  }
  func.func @transform_0(%arg0: i32) -> (i32, i32) {
    %c0_i32 = arith.constant 0 : i32
    %c0_i32_0 = arith.constant 0 : i32
    return %arg0, %c0_i32 : i32, i32
  }
  func.func @transform_1(%arg0: i32) -> (i32, i32, i32) {
    %c0_i32 = arith.constant 0 : i32
    %c0_i32_0 = arith.constant 0 : i32
    %c0_i32_1 = arith.constant 0 : i32
    %c0_i32_2 = arith.constant 0 : i32
    return %c0_i32, %c0_i32_0, %c0_i32_1 : i32, i32, i32
  }
  func.func @transform_2(%arg0: i32) -> (i32, i32, i32) {
    %c0_i32 = arith.constant 0 : i32
    %c0_i32_0 = arith.constant 0 : i32
    %c0_i32_1 = arith.constant 0 : i32
    %c0_i32_2 = arith.constant 0 : i32
    return %c0_i32, %c0_i32_0, %c0_i32_1 : i32, i32, i32
  }
  func.func @transform_3(%arg0: i32) -> (i32, i32) {
    %c0_i32 = arith.constant 0 : i32
    %c0_i32_0 = arith.constant 0 : i32
    %c0_i32_1 = arith.constant 0 : i32
    return %c0_i32, %c0_i32_0 : i32, i32
  }
  func.func @transform_4(%arg0: i32) -> (i32, i32) {
    %c0_i32 = arith.constant 0 : i32
    %c0_i32_0 = arith.constant 0 : i32
    %c0_i32_1 = arith.constant 0 : i32
    return %c0_i32, %c0_i32_0 : i32, i32
  }
  func.func @transform_5(%arg0: i32) -> (i32, i32) {
    %c0_i32 = arith.constant 0 : i32
    %c0_i32_0 = arith.constant 0 : i32
    %c0_i32_1 = arith.constant 0 : i32
    return %c0_i32, %c0_i32_0 : i32, i32
  }
  func.func @transform_6(%arg0: i32) -> (i32, i32) {
    %c0_i32 = arith.constant 0 : i32
    %c0_i32_0 = arith.constant 0 : i32
    %c0_i32_1 = arith.constant 0 : i32
    return %c0_i32, %c0_i32_0 : i32, i32
  }
  func.func @transform_7(%arg0: i32) -> (i32, i32) {
    %c0_i32 = arith.constant 0 : i32
    %c0_i32_0 = arith.constant 0 : i32
    %c0_i32_1 = arith.constant 0 : i32
    return %c0_i32, %c0_i32_0 : i32, i32
  }
  func.func @transform_8(%arg0: i32) -> (i32, i32) {
    %c0_i32 = arith.constant 0 : i32
    %c0_i32_0 = arith.constant 0 : i32
    return %arg0, %c0_i32 : i32, i32
  }
}

</mosaic_0001>

<llo_original>
// kernel: tpu_custom_call.1
$region0: #{tpu_custom_call.1}
  #allocation0 [shape = 'u32[]', space=smem, size = 0x4, offset = 0x4, fixed_abs, tag = 'smem constant byte address 0x4 - core index']
  #allocation1 [shape = 'u32[72,128]{1,0:T(1,128)}', space=vmem, size = 0x9000, scoped, tag = 'internal scratch']
  %s0 = inlined_call_operand.vmem [shape: s32[1024,5], index: 0, kind: input, shape index: {}]
  %s1 = inlined_call_operand.vmem [shape: bf16[2,128,128], index: 1, kind: input, shape index: {}]
  %s2 = inlined_call_operand.vmem [shape: bf16[2,256,128], index: 2, kind: input, shape index: {}]
  %s3 = inlined_call_operand.vmem [shape: f32[1,32], index: 3, kind: input, shape index: {}]
  %s4 = inlined_call_operand.vmem [shape: f32[32,16], index: 4, kind: input, shape index: {}]
  %s5 = inlined_call_operand.vmem [shape: f32[1,16], index: 5, kind: input, shape index: {}]
  %s6 = inlined_call_operand.vmem [shape: f32[32,16], index: 6, kind: input, shape index: {}]
  %s7 = inlined_call_operand.vmem [shape: f32[1,16], index: 7, kind: input, shape index: {}]
  %s8 = inlined_call_operand.vmem [shape: f32[1024,16], index: 8, kind: output, shape index: {}]
  %s9 = sld [smem:[#allocation0]]
  $region65: #{tpu_custom_call.1} parent=0
    _
  %s11 = ssub.s32 1, %s9
  %s12 = scalar_select 0, %s11, %s9
  loop: start=0, step=1, limit=4
  $region2: #{tpu_custom_call.1} parent=0 // loop_pre_header
    _
  $region3: #{tpu_custom_call.1} parent=0 // loop_header
    %s14 = sphi 0, %s18
    %p15 = scmp.ge.s32.totalorder %s14, 4
    %s24 = sphi 0, %s26
    %s27 = sphi 0, %s24
    %s28 = sphi 0, %s27
    %s44 = sphi 0, %s28
    %s48 = sphi 0, %s48
    %s50 = sphi 0, %s48
    %s51 = sphi 0, %s50
    %s65 = sphi 0, %s51
    %s69 = sphi 0, %s69
    %s71 = sphi 0, %s69
    %s72 = sphi 0, %s71
    %s86 = sphi 0, %s72
    %s90 = sphi 0, %s90
    %s92 = sphi 0, %s90
    %s93 = sphi 0, %s92
    %s107 = sphi 0, %s93
    %s111 = sphi 0, %s111
    %s113 = sphi 0, %s111
    %s114 = sphi 0, %s113
    %s128 = sphi 0, %s114
    %s132 = sphi 0, %s132
    %s134 = sphi 0, %s132
    %s135 = sphi 0, %s134
    %s149 = sphi 0, %s135
    %s153 = sphi 0, %s153
    %s155 = sphi 0, %s153
    %s156 = sphi 0, %s155
    %s170 = sphi 0, %s156
    %s174 = sphi 0, %s174
    %s176 = sphi 0, %s174
    %s177 = sphi 0, %s176
    %s191 = sphi 0, %s177
    %s197 = sphi 0, %s199
    %s200 = sphi 0, %s197
    %s201 = sphi 0, %s200
    %s217 = sphi 0, %s201
  $region4: #{tpu_custom_call.1} parent=0 // loop_header_branch
    %17 = sbr.rel (%p15) target = $region8
  $region5: #{tpu_custom_call.1} parent=0 // loop_body
    %s19 = ssub.s32 %s14, 1
    %s20 = ssub.s32 %s14, 2
    %s21 = sadd.s32 %s14, 1
    %s22 = ssub.s32 %s14, %s21
    %p23 = scmp.eq.s32.totalorder %s22, 0
    %s25 = sadd.s32 %s24, 1
    %s26 = scalar_select %p23, %s24, %s25
    %p29 = pneg %p23
    %p30 = scmp.eq.s32.totalorder %s14, 1
    %p31 = por %p29, %p30
    %p32 = scmp.ne.s32.totalorder %s24, %s27
    %p33 = scmp.eq.s32.totalorder %s14, 0
    %p34 = por %p32, %p33
    %p35 = scmp.ne.s32.totalorder %s24, %s27
    %p36 = scmp.eq.s32.totalorder %s19, 1
    %p37 = por %p35, %p36
    %p38 = scmp.ne.s32.totalorder %s27, %s28
    %p39 = scmp.eq.s32.totalorder %s19, 0
    %p40 = por %p38, %p39
    %p41 = scmp.ne.s32.totalorder %s27, %s28
    %p42 = scmp.eq.s32.totalorder %s20, 1
    %p43 = por %p41, %p42
    %p45 = scmp.ne.s32.totalorder %s28, %s44
    %p46 = scmp.eq.s32.totalorder %s20, 0
    %p47 = por %p45, %p46
    %s49 = sadd.s32 %s48, 1
    %p52 = scmp.eq.s32.totalorder %s14, 1
    %p53 = scmp.ne.s32.totalorder %s48, %s50
    %p54 = scmp.eq.s32.totalorder %s14, 0
    %p55 = por %p53, %p54
    %p56 = scmp.ne.s32.totalorder %s48, %s50
    %p57 = scmp.eq.s32.totalorder %s19, 1
    %p58 = por %p56, %p57
    %p59 = scmp.ne.s32.totalorder %s50, %s51
    %p60 = scmp.eq.s32.totalorder %s19, 0
    %p61 = por %p59, %p60
    %p62 = scmp.ne.s32.totalorder %s50, %s51
    %p63 = scmp.eq.s32.totalorder %s20, 1
    %p64 = por %p62, %p63
    %p66 = scmp.ne.s32.totalorder %s51, %s65
    %p67 = scmp.eq.s32.totalorder %s20, 0
    %p68 = por %p66, %p67
    %s70 = sadd.s32 %s69, 1
    %p73 = scmp.eq.s32.totalorder %s14, 1
    %p74 = scmp.ne.s32.totalorder %s69, %s71
    %p75 = scmp.eq.s32.totalorder %s14, 0
    %p76 = por %p74, %p75
    %p77 = scmp.ne.s32.totalorder %s69, %s71
    %p78 = scmp.eq.s32.totalorder %s19, 1
    %p79 = por %p77, %p78
    %p80 = scmp.ne.s32.totalorder %s71, %s72
    %p81 = scmp.eq.s32.totalorder %s19, 0
    %p82 = por %p80, %p81
    %p83 = scmp.ne.s32.totalorder %s71, %s72
    %p84 = scmp.eq.s32.totalorder %s20, 1
    %p85 = por %p83, %p84
    %p87 = scmp.ne.s32.totalorder %s72, %s86
    %p88 = scmp.eq.s32.totalorder %s20, 0
    %p89 = por %p87, %p88
    %s91 = sadd.s32 %s90, 1
    %p94 = scmp.eq.s32.totalorder %s14, 1
    %p95 = scmp.ne.s32.totalorder %s90, %s92
    %p96 = scmp.eq.s32.totalorder %s14, 0
    %p97 = por %p95, %p96
    %p98 = scmp.ne.s32.totalorder %s90, %s92
    %p99 = scmp.eq.s32.totalorder %s19, 1
    %p100 = por %p98, %p99
    %p101 = scmp.ne.s32.totalorder %s92, %s93
    %p102 = scmp.eq.s32.totalorder %s19, 0
    %p103 = por %p101, %p102
    %p104 = scmp.ne.s32.totalorder %s92, %s93
    %p105 = scmp.eq.s32.totalorder %s20, 1
    %p106 = por %p104, %p105
    %p108 = scmp.ne.s32.totalorder %s93, %s107
    %p109 = scmp.eq.s32.totalorder %s20, 0
    %p110 = por %p108, %p109
    %s112 = sadd.s32 %s111, 1
    %p115 = scmp.eq.s32.totalorder %s14, 1
    %p116 = scmp.ne.s32.totalorder %s111, %s113
    %p117 = scmp.eq.s32.totalorder %s14, 0
    %p118 = por %p116, %p117
    %p119 = scmp.ne.s32.totalorder %s111, %s113
    %p120 = scmp.eq.s32.totalorder %s19, 1
    %p121 = por %p119, %p120
    %p122 = scmp.ne.s32.totalorder %s113, %s114
    %p123 = scmp.eq.s32.totalorder %s19, 0
    %p124 = por %p122, %p123
    %p125 = scmp.ne.s32.totalorder %s113, %s114
    %p126 = scmp.eq.s32.totalorder %s20, 1
    %p127 = por %p125, %p126
    %p129 = scmp.ne.s32.totalorder %s114, %s128
    %p130 = scmp.eq.s32.totalorder %s20, 0
    %p131 = por %p129, %p130
    %s133 = sadd.s32 %s132, 1
    %p136 = scmp.eq.s32.totalorder %s14, 1
    %p137 = scmp.ne.s32.totalorder %s132, %s134
    %p138 = scmp.eq.s32.totalorder %s14, 0
    %p139 = por %p137, %p138
    %p140 = scmp.ne.s32.totalorder %s132, %s134
    %p141 = scmp.eq.s32.totalorder %s19, 1
    %p142 = por %p140, %p141
    %p143 = scmp.ne.s32.totalorder %s134, %s135
    %p144 = scmp.eq.s32.totalorder %s19, 0
    %p145 = por %p143, %p144
    %p146 = scmp.ne.s32.totalorder %s134, %s135
    %p147 = scmp.eq.s32.totalorder %s20, 1
    %p148 = por %p146, %p147
    %p150 = scmp.ne.s32.totalorder %s135, %s149
    %p151 = scmp.eq.s32.totalorder %s20, 0
    %p152 = por %p150, %p151
    %s154 = sadd.s32 %s153, 1
    %p157 = scmp.eq.s32.totalorder %s14, 1
    %p158 = scmp.ne.s32.totalorder %s153, %s155
    %p159 = scmp.eq.s32.totalorder %s14, 0
    %p160 = por %p158, %p159
    %p161 = scmp.ne.s32.totalorder %s153, %s155
    %p162 = scmp.eq.s32.totalorder %s19, 1
    %p163 = por %p161, %p162
    %p164 = scmp.ne.s32.totalorder %s155, %s156
    %p165 = scmp.eq.s32.totalorder %s19, 0
    %p166 = por %p164, %p165
    %p167 = scmp.ne.s32.totalorder %s155, %s156
    %p168 = scmp.eq.s32.totalorder %s20, 1
    %p169 = por %p167, %p168
    %p171 = scmp.ne.s32.totalorder %s156, %s170
    %p172 = scmp.eq.s32.totalorder %s20, 0
    %p173 = por %p171, %p172
    %s175 = sadd.s32 %s174, 1
    %p178 = scmp.eq.s32.totalorder %s14, 1
    %p179 = scmp.ne.s32.totalorder %s174, %s176
    %p180 = scmp.eq.s32.totalorder %s14, 0
    %p181 = por %p179, %p180
    %p182 = scmp.ne.s32.totalorder %s174, %s176
    %p183 = scmp.eq.s32.totalorder %s19, 1
    %p184 = por %p182, %p183
    %p185 = scmp.ne.s32.totalorder %s176, %s177
    %p186 = scmp.eq.s32.totalorder %s19, 0
    %p187 = por %p185, %p186
    %p188 = scmp.ne.s32.totalorder %s176, %s177
    %p189 = scmp.eq.s32.totalorder %s20, 1
    %p190 = por %p188, %p189
    %p192 = scmp.ne.s32.totalorder %s177, %s191
    %p193 = scmp.eq.s32.totalorder %s20, 0
    %p194 = por %p192, %p193
    %s195 = ssub.s32 %s14, %s21
    %p196 = scmp.eq.s32.totalorder %s195, 0
    %s198 = sadd.s32 %s197, 1
    %s199 = scalar_select %p196, %s197, %s198
    %p202 = pneg %p196
    %p203 = scmp.eq.s32.totalorder %s14, 1
    %p204 = por %p202, %p203
    %p205 = scmp.ne.s32.totalorder %s197, %s200
    %p206 = scmp.eq.s32.totalorder %s14, 0
    %p207 = por %p205, %p206
    %p208 = scmp.ne.s32.totalorder %s197, %s200
    %p209 = scmp.eq.s32.totalorder %s19, 1
    %p210 = por %p208, %p209
    %p211 = scmp.ne.s32.totalorder %s200, %s201
    %p212 = scmp.eq.s32.totalorder %s19, 0
    %p213 = por %p211, %p212
    %p214 = scmp.ne.s32.totalorder %s200, %s201
    %p215 = scmp.eq.s32.totalorder %s20, 1
    %p216 = por %p214, %p215
    %p218 = scmp.ne.s32.totalorder %s201, %s217
    %p219 = scmp.eq.s32.totalorder %s20, 0
    %p220 = por %p218, %p219
    %p221 = scmp.le.s32.totalorder 1, %s14
    %p222 = scmp.lt.s32.totalorder %s14, 3
    %p223 = pnand %p221, %p222
    %p224 = pneg %p223
    // Predicated region
    $region9: #{tpu_custom_call.1} parent=5 // pred_check
      _
    $region10: #{tpu_custom_call.1} parent=5 // pred_check_branch
      %226 = sbr.rel (%p223) target = $region12
    $region11: #{tpu_custom_call.1} parent=5 // pred_region
      %s227 = ssub.s32 %s14, 1
      // Predicated region
      $region13: #{tpu_custom_call.1} parent=11 // pred_check
        %p228 = pneg %p61
      $region14: #{tpu_custom_call.1} parent=11 // pred_check_branch
        %230 = sbr.rel (%p228) target = $region16
      $region15: #{tpu_custom_call.1} parent=11 // pred_region
        _
      $region16: #{tpu_custom_call.1} parent=11 // pred_fallthru
        _
      // Predicated region
      $region17: #{tpu_custom_call.1} parent=11 // pred_check
        %p231 = pneg %p82
      $region18: #{tpu_custom_call.1} parent=11 // pred_check_branch
        %233 = sbr.rel (%p231) target = $region20
      $region19: #{tpu_custom_call.1} parent=11 // pred_region
        _
      $region20: #{tpu_custom_call.1} parent=11 // pred_fallthru
        _
      // Predicated region
      $region21: #{tpu_custom_call.1} parent=11 // pred_check
        %p234 = pneg %p103
      $region22: #{tpu_custom_call.1} parent=11 // pred_check_branch
        %236 = sbr.rel (%p234) target = $region24
      $region23: #{tpu_custom_call.1} parent=11 // pred_region
        _
      $region24: #{tpu_custom_call.1} parent=11 // pred_fallthru
        _
      // Predicated region
      $region25: #{tpu_custom_call.1} parent=11 // pred_check
        %p237 = pneg %p124
      $region26: #{tpu_custom_call.1} parent=11 // pred_check_branch
        %239 = sbr.rel (%p237) target = $region28
      $region27: #{tpu_custom_call.1} parent=11 // pred_region
        _
      $region28: #{tpu_custom_call.1} parent=11 // pred_fallthru
        _
      // Predicated region
      $region29: #{tpu_custom_call.1} parent=11 // pred_check
        %p240 = pneg %p145
      $region30: #{tpu_custom_call.1} parent=11 // pred_check_branch
        %242 = sbr.rel (%p240) target = $region32
      $region31: #{tpu_custom_call.1} parent=11 // pred_region
        _
      $region32: #{tpu_custom_call.1} parent=11 // pred_fallthru
        _
      // Predicated region
      $region33: #{tpu_custom_call.1} parent=11 // pred_check
        %p243 = pneg %p166
      $region34: #{tpu_custom_call.1} parent=11 // pred_check_branch
        %245 = sbr.rel (%p243) target = $region36
      $region35: #{tpu_custom_call.1} parent=11 // pred_region
        _
      $region36: #{tpu_custom_call.1} parent=11 // pred_fallthru
        _
      // Predicated region
      $region37: #{tpu_custom_call.1} parent=11 // pred_check
        %p246 = pneg %p187
      $region38: #{tpu_custom_call.1} parent=11 // pred_check_branch
        %248 = sbr.rel (%p246) target = $region40
      $region39: #{tpu_custom_call.1} parent=11 // pred_region
        _
      $region40: #{tpu_custom_call.1} parent=11 // pred_fallthru
        _
    $region12: #{tpu_custom_call.1} parent=5 // pred_fallthru
      _
    %p249 = scmp.lt.s32.totalorder %s14, 2
    // Predicated region
    $region41: #{tpu_custom_call.1} parent=5 // pred_check
      %p250 = pneg %p249
    $region42: #{tpu_custom_call.1} parent=5 // pred_check_branch
      %252 = sbr.rel (%p250) target = $region44
    $region43: #{tpu_custom_call.1} parent=5 // pred_region
      // Predicated region
      $region45: #{tpu_custom_call.1} parent=43 // pred_check
        %p253 = pneg %p34
      $region46: #{tpu_custom_call.1} parent=43 // pred_check_branch
        %255 = sbr.rel (%p253) target = $region48
      $region47: #{tpu_custom_call.1} parent=43 // pred_region
        %s256 = smul.u32 64, %s14
        %p257 = scmp.lt.s32.totalorder %s256, 127
        %s258 = scalar_select %p257, %s256, 127
        %s259 = smul.addr %s258, 8
        %s260 = scalar_lea.vmem %s0, %s259
        %s261 = smul.u32 64, %s14
      $region48: #{tpu_custom_call.1} parent=43 // pred_fallthru
        _
    $region44: #{tpu_custom_call.1} parent=5 // pred_fallthru
      _
    %p262 = scmp.le.s32.totalorder 1, %s14
    %p263 = scmp.lt.s32.totalorder %s14, 3
    %p264 = pnand %p262, %p263
    %p265 = pneg %p264
    // Predicated region
    $region49: #{tpu_custom_call.1} parent=5 // pred_check
      _
    $region50: #{tpu_custom_call.1} parent=5 // pred_check_branch
      %267 = sbr.rel (%p264) target = $region52
    $region51: #{tpu_custom_call.1} parent=5 // pred_region
      %s268 = ssub.s32 %s14, 1
      %s269 = smul.u32 64, %s19
      %p270 = scmp.lt.s32.totalorder %s269, 127
      %s271 = scalar_select %p270, %s269, 127
      %s272 = smul.addr %s271, 8
      %s273 = scalar_lea.vmem %s0, %s272
      %p274 = pneg %p40
      %p275 = pneg %p37
      %p276 = pneg %p61
      %p277 = pneg %p58
      %p278 = pneg %p82
      %p279 = pneg %p79
      %p280 = pneg %p103
      %p281 = pneg %p100
      %p282 = pneg %p124
      %p283 = pneg %p121
      %p284 = pneg %p145
      %p285 = pneg %p142
      %p286 = pneg %p166
      %p287 = pneg %p163
      %p288 = pneg %p187
      %p289 = pneg %p184
      %p290 = pneg %p213
      %p291 = pneg %p210
      %s292 = smul.u32 64, %s19
      %p293 = scmp.lt.s32.totalorder %s292, 127
      %s294 = scalar_select %p293, %s292, 127
      %s295 = smul.addr %s294, 8
      %s296 = scalar_lea.vmem %s8, %s295
      %s297 = smul.u32 64, %s19
      %p298 = scmp.lt.s32.totalorder %s297, 127
      %s299 = scalar_select %p298, %s297, 127
      %s300 = smul.addr %s299, 8
      %s301 = scalar_lea.vmem %s0, %s300
      %s302 = smul.u32 64, %s19
      %s303 = smul.u32 64, %s19
      %p304 = scmp.lt.s32.totalorder %s303, 127
      %s305 = scalar_select %p304, %s303, 127
      %s306 = smul.addr %s305, 8
      %s307 = scalar_lea.vmem %s8, %s306
      %s308 = smul.u32 64, %s19
      %v309 = vld [vmem:[%s301] sm:$0xff]
      %v310 = vld [vmem:[%s301 + $0x8] sm:$0xff]
      %v311 = vld [vmem:[%s301 + $0x10] sm:$0xff]
      %v312 = vld [vmem:[%s301 + $0x18] sm:$0xff]
      %v313 = vld [vmem:[%s301 + $0x20] sm:$0xff]
      %v314 = vld [vmem:[%s301 + $0x28] sm:$0xff]
      %v315 = vld [vmem:[%s301 + $0x30] sm:$0xff]
      %v316 = vld [vmem:[%s301 + $0x38] sm:$0xff]
      %v317 = vld [vmem:[%s301 + $0x40] sm:$0xff]
      %v318 = vld [vmem:[%s301 + $0x48] sm:$0xff]
      %v319 = vld [vmem:[%s301 + $0x50] sm:$0xff]
      %v320 = vld [vmem:[%s301 + $0x58] sm:$0xff]
      %v321 = vld [vmem:[%s301 + $0x60] sm:$0xff]
      %v322 = vld [vmem:[%s301 + $0x68] sm:$0xff]
      %v323 = vld [vmem:[%s301 + $0x70] sm:$0xff]
      %v324 = vld [vmem:[%s301 + $0x78] sm:$0xff]
      %v325 = vld [vmem:[%s301 + $0x80] sm:$0xff]
      %v326 = vld [vmem:[%s301 + $0x88] sm:$0xff]
      %v327 = vld [vmem:[%s301 + $0x90] sm:$0xff]
      %v328 = vld [vmem:[%s301 + $0x98] sm:$0xff]
      %v329 = vld [vmem:[%s301 + $0xa0] sm:$0xff]
      %v330 = vld [vmem:[%s301 + $0xa8] sm:$0xff]
      %v331 = vld [vmem:[%s301 + $0xb0] sm:$0xff]
      %v332 = vld [vmem:[%s301 + $0xb8] sm:$0xff]
      %v333 = vld [vmem:[%s301 + $0xc0] sm:$0xff]
      %v334 = vld [vmem:[%s301 + $0xc8] sm:$0xff]
      %v335 = vld [vmem:[%s301 + $0xd0] sm:$0xff]
      %v336 = vld [vmem:[%s301 + $0xd8] sm:$0xff]
      %v337 = vld [vmem:[%s301 + $0xe0] sm:$0xff]
      %v338 = vld [vmem:[%s301 + $0xe8] sm:$0xff]
      %v339 = vld [vmem:[%s301 + $0xf0] sm:$0xff]
      %v340 = vld [vmem:[%s301 + $0xf8] sm:$0xff]
      %v341 = vld [vmem:[%s301 + $0x100] sm:$0xff]
      %v342 = vld [vmem:[%s301 + $0x108] sm:$0xff]
      %v343 = vld [vmem:[%s301 + $0x110] sm:$0xff]
      %v344 = vld [vmem:[%s301 + $0x118] sm:$0xff]
      %v345 = vld [vmem:[%s301 + $0x120] sm:$0xff]
      %v346 = vld [vmem:[%s301 + $0x128] sm:$0xff]
      %v347 = vld [vmem:[%s301 + $0x130] sm:$0xff]
      %v348 = vld [vmem:[%s301 + $0x138] sm:$0xff]
      %v349 = vld [vmem:[%s301 + $0x140] sm:$0xff]
      %v350 = vld [vmem:[%s301 + $0x148] sm:$0xff]
      %v351 = vld [vmem:[%s301 + $0x150] sm:$0xff]
      %v352 = vld [vmem:[%s301 + $0x158] sm:$0xff]
      %v353 = vld [vmem:[%s301 + $0x160] sm:$0xff]
      %v354 = vld [vmem:[%s301 + $0x168] sm:$0xff]
      %v355 = vld [vmem:[%s301 + $0x170] sm:$0xff]
      %v356 = vld [vmem:[%s301 + $0x178] sm:$0xff]
      %v357 = vld [vmem:[%s301 + $0x180] sm:$0xff]
      %v358 = vld [vmem:[%s301 + $0x188] sm:$0xff]
      %v359 = vld [vmem:[%s301 + $0x190] sm:$0xff]
      %v360 = vld [vmem:[%s301 + $0x198] sm:$0xff]
      %v361 = vld [vmem:[%s301 + $0x1a0] sm:$0xff]
      %v362 = vld [vmem:[%s301 + $0x1a8] sm:$0xff]
      %v363 = vld [vmem:[%s301 + $0x1b0] sm:$0xff]
      %v364 = vld [vmem:[%s301 + $0x1b8] sm:$0xff]
      %v365 = vld [vmem:[%s301 + $0x1c0] sm:$0xff]
      %v366 = vld [vmem:[%s301 + $0x1c8] sm:$0xff]
      %v367 = vld [vmem:[%s301 + $0x1d0] sm:$0xff]
      %v368 = vld [vmem:[%s301 + $0x1d8] sm:$0xff]
      %v369 = vld [vmem:[%s301 + $0x1e0] sm:$0xff]
      %v370 = vld [vmem:[%s301 + $0x1e8] sm:$0xff]
      %v371 = vld [vmem:[%s301 + $0x1f0] sm:$0xff]
      %v372 = vld [vmem:[%s301 + $0x1f8] sm:$0xff]
      %v373 = vlaneseq
      %v374 = vand.u32 %v373, 127
      %375 = vset.pattern.permute.xlu0 0
      %376 = vperm.xlu0 %375, %v309
      %v377 = vpop.permute.xlu0 %376
      %378 = vset.pattern.permute.xlu0 0
      %379 = vperm.xlu0 %378, %v310
      %v380 = vpop.permute.xlu0 %379
      %381 = vset.pattern.permute.xlu0 0
      %382 = vperm.xlu0 %381, %v311
      %v383 = vpop.permute.xlu0 %382
      %384 = vset.pattern.permute.xlu0 0
      %385 = vperm.xlu0 %384, %v312
      %v386 = vpop.permute.xlu0 %385
      %387 = vset.pattern.permute.xlu0 0
      %388 = vperm.xlu0 %387, %v313
      %v389 = vpop.permute.xlu0 %388
      %390 = vset.pattern.permute.xlu0 0
      %391 = vperm.xlu0 %390, %v314
      %v392 = vpop.permute.xlu0 %391
      %393 = vset.pattern.permute.xlu0 0
      %394 = vperm.xlu0 %393, %v315
      %v395 = vpop.permute.xlu0 %394
      %396 = vset.pattern.permute.xlu0 0
      %397 = vperm.xlu0 %396, %v316
      %v398 = vpop.permute.xlu0 %397
      %399 = vset.pattern.permute.xlu0 0
      %400 = vperm.xlu0 %399, %v317
      %v401 = vpop.permute.xlu0 %400
      %402 = vset.pattern.permute.xlu0 0
      %403 = vperm.xlu0 %402, %v318
      %v404 = vpop.permute.xlu0 %403
      %405 = vset.pattern.permute.xlu0 0
      %406 = vperm.xlu0 %405, %v319
      %v407 = vpop.permute.xlu0 %406
      %408 = vset.pattern.permute.xlu0 0
      %409 = vperm.xlu0 %408, %v320
      %v410 = vpop.permute.xlu0 %409
      %411 = vset.pattern.permute.xlu0 0
      %412 = vperm.xlu0 %411, %v321
      %v413 = vpop.permute.xlu0 %412
      %414 = vset.pattern.permute.xlu0 0
      %415 = vperm.xlu0 %414, %v322
      %v416 = vpop.permute.xlu0 %415
      %417 = vset.pattern.permute.xlu0 0
      %418 = vperm.xlu0 %417, %v323
      %v419 = vpop.permute.xlu0 %418
      %420 = vset.pattern.permute.xlu0 0
      %421 = vperm.xlu0 %420, %v324
      %v422 = vpop.permute.xlu0 %421
      %423 = vset.pattern.permute.xlu0 0
      %424 = vperm.xlu0 %423, %v325
      %v425 = vpop.permute.xlu0 %424
      %426 = vset.pattern.permute.xlu0 0
      %427 = vperm.xlu0 %426, %v326
      %v428 = vpop.permute.xlu0 %427
      %429 = vset.pattern.permute.xlu0 0
      %430 = vperm.xlu0 %429, %v327
      %v431 = vpop.permute.xlu0 %430
      %432 = vset.pattern.permute.xlu0 0
      %433 = vperm.xlu0 %432, %v328
      %v434 = vpop.permute.xlu0 %433
      %435 = vset.pattern.permute.xlu0 0
      %436 = vperm.xlu0 %435, %v329
      %v437 = vpop.permute.xlu0 %436
      %438 = vset.pattern.permute.xlu0 0
      %439 = vperm.xlu0 %438, %v330
      %v440 = vpop.permute.xlu0 %439
      %441 = vset.pattern.permute.xlu0 0
      %442 = vperm.xlu0 %441, %v331
      %v443 = vpop.permute.xlu0 %442
      %444 = vset.pattern.permute.xlu0 0
      %445 = vperm.xlu0 %444, %v332
      %v446 = vpop.permute.xlu0 %445
      %447 = vset.pattern.permute.xlu0 0
      %448 = vperm.xlu0 %447, %v333
      %v449 = vpop.permute.xlu0 %448
      %450 = vset.pattern.permute.xlu0 0
      %451 = vperm.xlu0 %450, %v334
      %v452 = vpop.permute.xlu0 %451
      %453 = vset.pattern.permute.xlu0 0
      %454 = vperm.xlu0 %453, %v335
      %v455 = vpop.permute.xlu0 %454
      %456 = vset.pattern.permute.xlu0 0
      %457 = vperm.xlu0 %456, %v336
      %v458 = vpop.permute.xlu0 %457
      %459 = vset.pattern.permute.xlu0 0
      %460 = vperm.xlu0 %459, %v337
      %v461 = vpop.permute.xlu0 %460
      %462 = vset.pattern.permute.xlu0 0
      %463 = vperm.xlu0 %462, %v338
      %v464 = vpop.permute.xlu0 %463
      %465 = vset.pattern.permute.xlu0 0
      %466 = vperm.xlu0 %465, %v339
      %v467 = vpop.permute.xlu0 %466
      %468 = vset.pattern.permute.xlu0 0
      %469 = vperm.xlu0 %468, %v340
      %v470 = vpop.permute.xlu0 %469
      %471 = vset.pattern.permute.xlu0 0
      %472 = vperm.xlu0 %471, %v341
      %v473 = vpop.permute.xlu0 %472
      %474 = vset.pattern.permute.xlu0 0
      %475 = vperm.xlu0 %474, %v342
      %v476 = vpop.permute.xlu0 %475
      %477 = vset.pattern.permute.xlu0 0
      %478 = vperm.xlu0 %477, %v343
      %v479 = vpop.permute.xlu0 %478
      %480 = vset.pattern.permute.xlu0 0
      %481 = vperm.xlu0 %480, %v344
      %v482 = vpop.permute.xlu0 %481
      %483 = vset.pattern.permute.xlu0 0
      %484 = vperm.xlu0 %483, %v345
      %v485 = vpop.permute.xlu0 %484
      %486 = vset.pattern.permute.xlu0 0
      %487 = vperm.xlu0 %486, %v346
      %v488 = vpop.permute.xlu0 %487
      %489 = vset.pattern.permute.xlu0 0
      %490 = vperm.xlu0 %489, %v347
      %v491 = vpop.permute.xlu0 %490
      %492 = vset.pattern.permute.xlu0 0
      %493 = vperm.xlu0 %492, %v348
      %v494 = vpop.permute.xlu0 %493
      %495 = vset.pattern.permute.xlu0 0
      %496 = vperm.xlu0 %495, %v349
      %v497 = vpop.permute.xlu0 %496
      %498 = vset.pattern.permute.xlu0 0
      %499 = vperm.xlu0 %498, %v350
      %v500 = vpop.permute.xlu0 %499
      %501 = vset.pattern.permute.xlu0 0
      %502 = vperm.xlu0 %501, %v351
      %v503 = vpop.permute.xlu0 %502
      %504 = vset.pattern.permute.xlu0 0
      %505 = vperm.xlu0 %504, %v352
      %v506 = vpop.permute.xlu0 %505
      %507 = vset.pattern.permute.xlu0 0
      %508 = vperm.xlu0 %507, %v353
      %v509 = vpop.permute.xlu0 %508
      %510 = vset.pattern.permute.xlu0 0
      %511 = vperm.xlu0 %510, %v354
      %v512 = vpop.permute.xlu0 %511
      %513 = vset.pattern.permute.xlu0 0
      %514 = vperm.xlu0 %513, %v355
      %v515 = vpop.permute.xlu0 %514
      %516 = vset.pattern.permute.xlu0 0
      %517 = vperm.xlu0 %516, %v356
      %v518 = vpop.permute.xlu0 %517
      %519 = vset.pattern.permute.xlu0 0
      %520 = vperm.xlu0 %519, %v357
      %v521 = vpop.permute.xlu0 %520
      %522 = vset.pattern.permute.xlu0 0
      %523 = vperm.xlu0 %522, %v358
      %v524 = vpop.permute.xlu0 %523
      %525 = vset.pattern.permute.xlu0 0
      %526 = vperm.xlu0 %525, %v359
      %v527 = vpop.permute.xlu0 %526
      %528 = vset.pattern.permute.xlu0 0
      %529 = vperm.xlu0 %528, %v360
      %v530 = vpop.permute.xlu0 %529
      %531 = vset.pattern.permute.xlu0 0
      %532 = vperm.xlu0 %531, %v361
      %v533 = vpop.permute.xlu0 %532
      %534 = vset.pattern.permute.xlu0 0
      %535 = vperm.xlu0 %534, %v362
      %v536 = vpop.permute.xlu0 %535
      %537 = vset.pattern.permute.xlu0 0
      %538 = vperm.xlu0 %537, %v363
      %v539 = vpop.permute.xlu0 %538
      %540 = vset.pattern.permute.xlu0 0
      %541 = vperm.xlu0 %540, %v364
      %v542 = vpop.permute.xlu0 %541
      %543 = vset.pattern.permute.xlu0 0
      %544 = vperm.xlu0 %543, %v365
      %v545 = vpop.permute.xlu0 %544
      %546 = vset.pattern.permute.xlu0 0
      %547 = vperm.xlu0 %546, %v366
      %v548 = vpop.permute.xlu0 %547
      %549 = vset.pattern.permute.xlu0 0
      %550 = vperm.xlu0 %549, %v367
      %v551 = vpop.permute.xlu0 %550
      %552 = vset.pattern.permute.xlu0 0
      %553 = vperm.xlu0 %552, %v368
      %v554 = vpop.permute.xlu0 %553
      %555 = vset.pattern.permute.xlu0 0
      %556 = vperm.xlu0 %555, %v369
      %v557 = vpop.permute.xlu0 %556
      %558 = vset.pattern.permute.xlu0 0
      %559 = vperm.xlu0 %558, %v370
      %v560 = vpop.permute.xlu0 %559
      %561 = vset.pattern.permute.xlu0 0
      %562 = vperm.xlu0 %561, %v371
      %v563 = vpop.permute.xlu0 %562
      %564 = vset.pattern.permute.xlu0 0
      %565 = vperm.xlu0 %564, %v372
      %v566 = vpop.permute.xlu0 %565
      %vm567 = vcmp.eq.s32.totalorder %v374, %v377
      %vm568 = vcmp.eq.s32.totalorder %v374, %v380
      %vm569 = vcmp.eq.s32.totalorder %v374, %v383
      %vm570 = vcmp.eq.s32.totalorder %v374, %v386
      %vm571 = vcmp.eq.s32.totalorder %v374, %v389
      %vm572 = vcmp.eq.s32.totalorder %v374, %v392
      %vm573 = vcmp.eq.s32.totalorder %v374, %v395
      %vm574 = vcmp.eq.s32.totalorder %v374, %v398
      %vm575 = vcmp.eq.s32.totalorder %v374, %v401
      %vm576 = vcmp.eq.s32.totalorder %v374, %v404
      %vm577 = vcmp.eq.s32.totalorder %v374, %v407
      %vm578 = vcmp.eq.s32.totalorder %v374, %v410
      %vm579 = vcmp.eq.s32.totalorder %v374, %v413
      %vm580 = vcmp.eq.s32.totalorder %v374, %v416
      %vm581 = vcmp.eq.s32.totalorder %v374, %v419
      %vm582 = vcmp.eq.s32.totalorder %v374, %v422
      %vm583 = vcmp.eq.s32.totalorder %v374, %v425
      %vm584 = vcmp.eq.s32.totalorder %v374, %v428
      %vm585 = vcmp.eq.s32.totalorder %v374, %v431
      %vm586 = vcmp.eq.s32.totalorder %v374, %v434
      %vm587 = vcmp.eq.s32.totalorder %v374, %v437
      %vm588 = vcmp.eq.s32.totalorder %v374, %v440
      %vm589 = vcmp.eq.s32.totalorder %v374, %v443
      %vm590 = vcmp.eq.s32.totalorder %v374, %v446
      %vm591 = vcmp.eq.s32.totalorder %v374, %v449
      %vm592 = vcmp.eq.s32.totalorder %v374, %v452
      %vm593 = vcmp.eq.s32.totalorder %v374, %v455
      %vm594 = vcmp.eq.s32.totalorder %v374, %v458
      %vm595 = vcmp.eq.s32.totalorder %v374, %v461
      %vm596 = vcmp.eq.s32.totalorder %v374, %v464
      %vm597 = vcmp.eq.s32.totalorder %v374, %v467
      %vm598 = vcmp.eq.s32.totalorder %v374, %v470
      %vm599 = vcmp.eq.s32.totalorder %v374, %v473
      %vm600 = vcmp.eq.s32.totalorder %v374, %v476
      %vm601 = vcmp.eq.s32.totalorder %v374, %v479
      %vm602 = vcmp.eq.s32.totalorder %v374, %v482
      %vm603 = vcmp.eq.s32.totalorder %v374, %v485
      %vm604 = vcmp.eq.s32.totalorder %v374, %v488
      %vm605 = vcmp.eq.s32.totalorder %v374, %v491
      %vm606 = vcmp.eq.s32.totalorder %v374, %v494
      %vm607 = vcmp.eq.s32.totalorder %v374, %v497
      %vm608 = vcmp.eq.s32.totalorder %v374, %v500
      %vm609 = vcmp.eq.s32.totalorder %v374, %v503
      %vm610 = vcmp.eq.s32.totalorder %v374, %v506
      %vm611 = vcmp.eq.s32.totalorder %v374, %v509
      %vm612 = vcmp.eq.s32.totalorder %v374, %v512
      %vm613 = vcmp.eq.s32.totalorder %v374, %v515
      %vm614 = vcmp.eq.s32.totalorder %v374, %v518
      %vm615 = vcmp.eq.s32.totalorder %v374, %v521
      %vm616 = vcmp.eq.s32.totalorder %v374, %v524
      %vm617 = vcmp.eq.s32.totalorder %v374, %v527
      %vm618 = vcmp.eq.s32.totalorder %v374, %v530
      %vm619 = vcmp.eq.s32.totalorder %v374, %v533
      %vm620 = vcmp.eq.s32.totalorder %v374, %v536
      %vm621 = vcmp.eq.s32.totalorder %v374, %v539
      %vm622 = vcmp.eq.s32.totalorder %v374, %v542
      %vm623 = vcmp.eq.s32.totalorder %v374, %v545
      %vm624 = vcmp.eq.s32.totalorder %v374, %v548
      %vm625 = vcmp.eq.s32.totalorder %v374, %v551
      %vm626 = vcmp.eq.s32.totalorder %v374, %v554
      %vm627 = vcmp.eq.s32.totalorder %v374, %v557
      %vm628 = vcmp.eq.s32.totalorder %v374, %v560
      %vm629 = vcmp.eq.s32.totalorder %v374, %v563
      %vm630 = vcmp.eq.s32.totalorder %v374, %v566
      %631 = vset.pattern.permute.xlu0 1
      %632 = vperm.xlu0 %631, %v309
      %v633 = vpop.permute.xlu0 %632
      %634 = vset.pattern.permute.xlu0 1
      %635 = vperm.xlu0 %634, %v310
      %v636 = vpop.permute.xlu0 %635
      %637 = vset.pattern.permute.xlu0 1
      %638 = vperm.xlu0 %637, %v311
      %v639 = vpop.permute.xlu0 %638
      %640 = vset.pattern.permute.xlu0 1
      %641 = vperm.xlu0 %640, %v312
      %v642 = vpop.permute.xlu0 %641
      %643 = vset.pattern.permute.xlu0 1
      %644 = vperm.xlu0 %643, %v313
      %v645 = vpop.permute.xlu0 %644
      %646 = vset.pattern.permute.xlu0 1
      %647 = vperm.xlu0 %646, %v314
      %v648 = vpop.permute.xlu0 %647
      %649 = vset.pattern.permute.xlu0 1
      %650 = vperm.xlu0 %649, %v315
      %v651 = vpop.permute.xlu0 %650
      %652 = vset.pattern.permute.xlu0 1
      %653 = vperm.xlu0 %652, %v316
      %v654 = vpop.permute.xlu0 %653
      %655 = vset.pattern.permute.xlu0 1
      %656 = vperm.xlu0 %655, %v317
      %v657 = vpop.permute.xlu0 %656
      %658 = vset.pattern.permute.xlu0 1
      %659 = vperm.xlu0 %658, %v318
      %v660 = vpop.permute.xlu0 %659
      %661 = vset.pattern.permute.xlu0 1
      %662 = vperm.xlu0 %661, %v319
      %v663 = vpop.permute.xlu0 %662
      %664 = vset.pattern.permute.xlu0 1
      %665 = vperm.xlu0 %664, %v320
      %v666 = vpop.permute.xlu0 %665
      %667 = vset.pattern.permute.xlu0 1
      %668 = vperm.xlu0 %667, %v321
      %v669 = vpop.permute.xlu0 %668
      %670 = vset.pattern.permute.xlu0 1
      %671 = vperm.xlu0 %670, %v322
      %v672 = vpop.permute.xlu0 %671
      %673 = vset.pattern.permute.xlu0 1
      %674 = vperm.xlu0 %673, %v323
      %v675 = vpop.permute.xlu0 %674
      %676 = vset.pattern.permute.xlu0 1
      %677 = vperm.xlu0 %676, %v324
      %v678 = vpop.permute.xlu0 %677
      %679 = vset.pattern.permute.xlu0 1
      %680 = vperm.xlu0 %679, %v325
      %v681 = vpop.permute.xlu0 %680
      %682 = vset.pattern.permute.xlu0 1
      %683 = vperm.xlu0 %682, %v326
      %v684 = vpop.permute.xlu0 %683
      %685 = vset.pattern.permute.xlu0 1
      %686 = vperm.xlu0 %685, %v327
      %v687 = vpop.permute.xlu0 %686
      %688 = vset.pattern.permute.xlu0 1
      %689 = vperm.xlu0 %688, %v328
      %v690 = vpop.permute.xlu0 %689
      %691 = vset.pattern.permute.xlu0 1
      %692 = vperm.xlu0 %691, %v329
      %v693 = vpop.permute.xlu0 %692
      %694 = vset.pattern.permute.xlu0 1
      %695 = vperm.xlu0 %694, %v330
      %v696 = vpop.permute.xlu0 %695
      %697 = vset.pattern.permute.xlu0 1
      %698 = vperm.xlu0 %697, %v331
      %v699 = vpop.permute.xlu0 %698
      %700 = vset.pattern.permute.xlu0 1
      %701 = vperm.xlu0 %700, %v332
      %v702 = vpop.permute.xlu0 %701
      %703 = vset.pattern.permute.xlu0 1
      %704 = vperm.xlu0 %703, %v333
      %v705 = vpop.permute.xlu0 %704
      %706 = vset.pattern.permute.xlu0 1
      %707 = vperm.xlu0 %706, %v334
      %v708 = vpop.permute.xlu0 %707
      %709 = vset.pattern.permute.xlu0 1
      %710 = vperm.xlu0 %709, %v335
      %v711 = vpop.permute.xlu0 %710
      %712 = vset.pattern.permute.xlu0 1
      %713 = vperm.xlu0 %712, %v336
      %v714 = vpop.permute.xlu0 %713
      %715 = vset.pattern.permute.xlu0 1
      %716 = vperm.xlu0 %715, %v337
      %v717 = vpop.permute.xlu0 %716
      %718 = vset.pattern.permute.xlu0 1
      %719 = vperm.xlu0 %718, %v338
      %v720 = vpop.permute.xlu0 %719
      %721 = vset.pattern.permute.xlu0 1
      %722 = vperm.xlu0 %721, %v339
      %v723 = vpop.permute.xlu0 %722
      %724 = vset.pattern.permute.xlu0 1
      %725 = vperm.xlu0 %724, %v340
      %v726 = vpop.permute.xlu0 %725
      %727 = vset.pattern.permute.xlu0 1
      %728 = vperm.xlu0 %727, %v341
      %v729 = vpop.permute.xlu0 %728
      %730 = vset.pattern.permute.xlu0 1
      %731 = vperm.xlu0 %730, %v342
      %v732 = vpop.permute.xlu0 %731
      %733 = vset.pattern.permute.xlu0 1
      %734 = vperm.xlu0 %733, %v343
      %v735 = vpop.permute.xlu0 %734
      %736 = vset.pattern.permute.xlu0 1
      %737 = vperm.xlu0 %736, %v344
      %v738 = vpop.permute.xlu0 %737
      %739 = vset.pattern.permute.xlu0 1
      %740 = vperm.xlu0 %739, %v345
      %v741 = vpop.permute.xlu0 %740
      %742 = vset.pattern.permute.xlu0 1
      %743 = vperm.xlu0 %742, %v346
      %v744 = vpop.permute.xlu0 %743
      %745 = vset.pattern.permute.xlu0 1
      %746 = vperm.xlu0 %745, %v347
      %v747 = vpop.permute.xlu0 %746
      %748 = vset.pattern.permute.xlu0 1
      %749 = vperm.xlu0 %748, %v348
      %v750 = vpop.permute.xlu0 %749
      %751 = vset.pattern.permute.xlu0 1
      %752 = vperm.xlu0 %751, %v349
      %v753 = vpop.permute.xlu0 %752
      %754 = vset.pattern.permute.xlu0 1
      %755 = vperm.xlu0 %754, %v350
      %v756 = vpop.permute.xlu0 %755
      %757 = vset.pattern.permute.xlu0 1
      %758 = vperm.xlu0 %757, %v351
      %v759 = vpop.permute.xlu0 %758
      %760 = vset.pattern.permute.xlu0 1
      %761 = vperm.xlu0 %760, %v352
      %v762 = vpop.permute.xlu0 %761
      %763 = vset.pattern.permute.xlu0 1
      %764 = vperm.xlu0 %763, %v353
      %v765 = vpop.permute.xlu0 %764
      %766 = vset.pattern.permute.xlu0 1
      %767 = vperm.xlu0 %766, %v354
      %v768 = vpop.permute.xlu0 %767
      %769 = vset.pattern.permute.xlu0 1
      %770 = vperm.xlu0 %769, %v355
      %v771 = vpop.permute.xlu0 %770
      %772 = vset.pattern.permute.xlu0 1
      %773 = vperm.xlu0 %772, %v356
      %v774 = vpop.permute.xlu0 %773
      %775 = vset.pattern.permute.xlu0 1
      %776 = vperm.xlu0 %775, %v357
      %v777 = vpop.permute.xlu0 %776
      %778 = vset.pattern.permute.xlu0 1
      %779 = vperm.xlu0 %778, %v358
      %v780 = vpop.permute.xlu0 %779
      %781 = vset.pattern.permute.xlu0 1
      %782 = vperm.xlu0 %781, %v359
      %v783 = vpop.permute.xlu0 %782
      %784 = vset.pattern.permute.xlu0 1
      %785 = vperm.xlu0 %784, %v360
      %v786 = vpop.permute.xlu0 %785
      %787 = vset.pattern.permute.xlu0 1
      %788 = vperm.xlu0 %787, %v361
      %v789 = vpop.permute.xlu0 %788
      %790 = vset.pattern.permute.xlu0 1
      %791 = vperm.xlu0 %790, %v362
      %v792 = vpop.permute.xlu0 %791
      %793 = vset.pattern.permute.xlu0 1
      %794 = vperm.xlu0 %793, %v363
      %v795 = vpop.permute.xlu0 %794
      %796 = vset.pattern.permute.xlu0 1
      %797 = vperm.xlu0 %796, %v364
      %v798 = vpop.permute.xlu0 %797
      %799 = vset.pattern.permute.xlu0 1
      %800 = vperm.xlu0 %799, %v365
      %v801 = vpop.permute.xlu0 %800
      %802 = vset.pattern.permute.xlu0 1
      %803 = vperm.xlu0 %802, %v366
      %v804 = vpop.permute.xlu0 %803
      %805 = vset.pattern.permute.xlu0 1
      %806 = vperm.xlu0 %805, %v367
      %v807 = vpop.permute.xlu0 %806
      %808 = vset.pattern.permute.xlu0 1
      %809 = vperm.xlu0 %808, %v368
      %v810 = vpop.permute.xlu0 %809
      %811 = vset.pattern.permute.xlu0 1
      %812 = vperm.xlu0 %811, %v369
      %v813 = vpop.permute.xlu0 %812
      %814 = vset.pattern.permute.xlu0 1
      %815 = vperm.xlu0 %814, %v370
      %v816 = vpop.permute.xlu0 %815
      %817 = vset.pattern.permute.xlu0 1
      %818 = vperm.xlu0 %817, %v371
      %v819 = vpop.permute.xlu0 %818
      %820 = vset.pattern.permute.xlu0 1
      %821 = vperm.xlu0 %820, %v372
      %v822 = vpop.permute.xlu0 %821
      %vm823 = vcmp.eq.s32.totalorder %v374, %v633
      %vm824 = vcmp.eq.s32.totalorder %v374, %v636
      %vm825 = vcmp.eq.s32.totalorder %v374, %v639
      %vm826 = vcmp.eq.s32.totalorder %v374, %v642
      %vm827 = vcmp.eq.s32.totalorder %v374, %v645
      %vm828 = vcmp.eq.s32.totalorder %v374, %v648
      %vm829 = vcmp.eq.s32.totalorder %v374, %v651
      %vm830 = vcmp.eq.s32.totalorder %v374, %v654
      %vm831 = vcmp.eq.s32.totalorder %v374, %v657
      %vm832 = vcmp.eq.s32.totalorder %v374, %v660
      %vm833 = vcmp.eq.s32.totalorder %v374, %v663
      %vm834 = vcmp.eq.s32.totalorder %v374, %v666
      %vm835 = vcmp.eq.s32.totalorder %v374, %v669
      %vm836 = vcmp.eq.s32.totalorder %v374, %v672
      %vm837 = vcmp.eq.s32.totalorder %v374, %v675
      %vm838 = vcmp.eq.s32.totalorder %v374, %v678
      %vm839 = vcmp.eq.s32.totalorder %v374, %v681
      %vm840 = vcmp.eq.s32.totalorder %v374, %v684
      %vm841 = vcmp.eq.s32.totalorder %v374, %v687
      %vm842 = vcmp.eq.s32.totalorder %v374, %v690
      %vm843 = vcmp.eq.s32.totalorder %v374, %v693
      %vm844 = vcmp.eq.s32.totalorder %v374, %v696
      %vm845 = vcmp.eq.s32.totalorder %v374, %v699
      %vm846 = vcmp.eq.s32.totalorder %v374, %v702
      %vm847 = vcmp.eq.s32.totalorder %v374, %v705
      %vm848 = vcmp.eq.s32.totalorder %v374, %v708
      %vm849 = vcmp.eq.s32.totalorder %v374, %v711
      %vm850 = vcmp.eq.s32.totalorder %v374, %v714
      %vm851 = vcmp.eq.s32.totalorder %v374, %v717
      %vm852 = vcmp.eq.s32.totalorder %v374, %v720
      %vm853 = vcmp.eq.s32.totalorder %v374, %v723
      %vm854 = vcmp.eq.s32.totalorder %v374, %v726
      %vm855 = vcmp.eq.s32.totalorder %v374, %v729
      %vm856 = vcmp.eq.s32.totalorder %v374, %v732
      %vm857 = vcmp.eq.s32.totalorder %v374, %v735
      %vm858 = vcmp.eq.s32.totalorder %v374, %v738
      %vm859 = vcmp.eq.s32.totalorder %v374, %v741
      %vm860 = vcmp.eq.s32.totalorder %v374, %v744
      %vm861 = vcmp.eq.s32.totalorder %v374, %v747
      %vm862 = vcmp.eq.s32.totalorder %v374, %v750
      %vm863 = vcmp.eq.s32.totalorder %v374, %v753
      %vm864 = vcmp.eq.s32.totalorder %v374, %v756
      %vm865 = vcmp.eq.s32.totalorder %v374, %v759
      %vm866 = vcmp.eq.s32.totalorder %v374, %v762
      %vm867 = vcmp.eq.s32.totalorder %v374, %v765
      %vm868 = vcmp.eq.s32.totalorder %v374, %v768
      %vm869 = vcmp.eq.s32.totalorder %v374, %v771
      %vm870 = vcmp.eq.s32.totalorder %v374, %v774
      %vm871 = vcmp.eq.s32.totalorder %v374, %v777
      %vm872 = vcmp.eq.s32.totalorder %v374, %v780
      %vm873 = vcmp.eq.s32.totalorder %v374, %v783
      %vm874 = vcmp.eq.s32.totalorder %v374, %v786
      %vm875 = vcmp.eq.s32.totalorder %v374, %v789
      %vm876 = vcmp.eq.s32.totalorder %v374, %v792
      %vm877 = vcmp.eq.s32.totalorder %v374, %v795
      %vm878 = vcmp.eq.s32.totalorder %v374, %v798
      %vm879 = vcmp.eq.s32.totalorder %v374, %v801
      %vm880 = vcmp.eq.s32.totalorder %v374, %v804
      %vm881 = vcmp.eq.s32.totalorder %v374, %v807
      %vm882 = vcmp.eq.s32.totalorder %v374, %v810
      %vm883 = vcmp.eq.s32.totalorder %v374, %v813
      %vm884 = vcmp.eq.s32.totalorder %v374, %v816
      %vm885 = vcmp.eq.s32.totalorder %v374, %v819
      %vm886 = vcmp.eq.s32.totalorder %v374, %v822
      %vm887 = vmor %vm567, %vm823
      %vm888 = vmor %vm568, %vm824
      %vm889 = vmor %vm569, %vm825
      %vm890 = vmor %vm570, %vm826
      %vm891 = vmor %vm571, %vm827
      %vm892 = vmor %vm572, %vm828
      %vm893 = vmor %vm573, %vm829
      %vm894 = vmor %vm574, %vm830
      %vm895 = vmor %vm575, %vm831
      %vm896 = vmor %vm576, %vm832
      %vm897 = vmor %vm577, %vm833
      %vm898 = vmor %vm578, %vm834
      %vm899 = vmor %vm579, %vm835
      %vm900 = vmor %vm580, %vm836
      %vm901 = vmor %vm581, %vm837
      %vm902 = vmor %vm582, %vm838
      %vm903 = vmor %vm583, %vm839
      %vm904 = vmor %vm584, %vm840
      %vm905 = vmor %vm585, %vm841
      %vm906 = vmor %vm586, %vm842
      %vm907 = vmor %vm587, %vm843
      %vm908 = vmor %vm588, %vm844
      %vm909 = vmor %vm589, %vm845
      %vm910 = vmor %vm590, %vm846
      %vm911 = vmor %vm591, %vm847
      %vm912 = vmor %vm592, %vm848
      %vm913 = vmor %vm593, %vm849
      %vm914 = vmor %vm594, %vm850
      %vm915 = vmor %vm595, %vm851
      %vm916 = vmor %vm596, %vm852
      %vm917 = vmor %vm597, %vm853
      %vm918 = vmor %vm598, %vm854
      %vm919 = vmor %vm599, %vm855
      %vm920 = vmor %vm600, %vm856
      %vm921 = vmor %vm601, %vm857
      %vm922 = vmor %vm602, %vm858
      %vm923 = vmor %vm603, %vm859
      %vm924 = vmor %vm604, %vm860
      %vm925 = vmor %vm605, %vm861
      %vm926 = vmor %vm606, %vm862
      %vm927 = vmor %vm607, %vm863
      %vm928 = vmor %vm608, %vm864
      %vm929 = vmor %vm609, %vm865
      %vm930 = vmor %vm610, %vm866
      %vm931 = vmor %vm611, %vm867
      %vm932 = vmor %vm612, %vm868
      %vm933 = vmor %vm613, %vm869
      %vm934 = vmor %vm614, %vm870
      %vm935 = vmor %vm615, %vm871
      %vm936 = vmor %vm616, %vm872
      %vm937 = vmor %vm617, %vm873
      %vm938 = vmor %vm618, %vm874
      %vm939 = vmor %vm619, %vm875
      %vm940 = vmor %vm620, %vm876
      %vm941 = vmor %vm621, %vm877
      %vm942 = vmor %vm622, %vm878
      %vm943 = vmor %vm623, %vm879
      %vm944 = vmor %vm624, %vm880
      %vm945 = vmor %vm625, %vm881
      %vm946 = vmor %vm626, %vm882
      %vm947 = vmor %vm627, %vm883
      %vm948 = vmor %vm628, %vm884
      %vm949 = vmor %vm629, %vm885
      %vm950 = vmor %vm630, %vm886
      %951 = vset.pattern.permute.xlu0 2
      %952 = vperm.xlu0 %951, %v309
      %v953 = vpop.permute.xlu0 %952
      %954 = vset.pattern.permute.xlu0 2
      %955 = vperm.xlu0 %954, %v310
      %v956 = vpop.permute.xlu0 %955
      %957 = vset.pattern.permute.xlu0 2
      %958 = vperm.xlu0 %957, %v311
      %v959 = vpop.permute.xlu0 %958
      %960 = vset.pattern.permute.xlu0 2
      %961 = vperm.xlu0 %960, %v312
      %v962 = vpop.permute.xlu0 %961
      %963 = vset.pattern.permute.xlu0 2
      %964 = vperm.xlu0 %963, %v313
      %v965 = vpop.permute.xlu0 %964
      %966 = vset.pattern.permute.xlu0 2
      %967 = vperm.xlu0 %966, %v314
      %v968 = vpop.permute.xlu0 %967
      %969 = vset.pattern.permute.xlu0 2
      %970 = vperm.xlu0 %969, %v315
      %v971 = vpop.permute.xlu0 %970
      %972 = vset.pattern.permute.xlu0 2
      %973 = vperm.xlu0 %972, %v316
      %v974 = vpop.permute.xlu0 %973
      %975 = vset.pattern.permute.xlu0 2
      %976 = vperm.xlu0 %975, %v317
      %v977 = vpop.permute.xlu0 %976
      %978 = vset.pattern.permute.xlu0 2
      %979 = vperm.xlu0 %978, %v318
      %v980 = vpop.permute.xlu0 %979
      %981 = vset.pattern.permute.xlu0 2
      %982 = vperm.xlu0 %981, %v319
      %v983 = vpop.permute.xlu0 %982
      %984 = vset.pattern.permute.xlu0 2
      %985 = vperm.xlu0 %984, %v320
      %v986 = vpop.permute.xlu0 %985
      %987 = vset.pattern.permute.xlu0 2
      %988 = vperm.xlu0 %987, %v321
      %v989 = vpop.permute.xlu0 %988
      %990 = vset.pattern.permute.xlu0 2
      %991 = vperm.xlu0 %990, %v322
      %v992 = vpop.permute.xlu0 %991
      %993 = vset.pattern.permute.xlu0 2
      %994 = vperm.xlu0 %993, %v323
      %v995 = vpop.permute.xlu0 %994
      %996 = vset.pattern.permute.xlu0 2
      %997 = vperm.xlu0 %996, %v324
      %v998 = vpop.permute.xlu0 %997
      %999 = vset.pattern.permute.xlu0 2
      %1000 = vperm.xlu0 %999, %v325
      %v1001 = vpop.permute.xlu0 %1000
      %1002 = vset.pattern.permute.xlu0 2
      %1003 = vperm.xlu0 %1002, %v326
      %v1004 = vpop.permute.xlu0 %1003
      %1005 = vset.pattern.permute.xlu0 2
      %1006 = vperm.xlu0 %1005, %v327
      %v1007 = vpop.permute.xlu0 %1006
      %1008 = vset.pattern.permute.xlu0 2
      %1009 = vperm.xlu0 %1008, %v328
      %v1010 = vpop.permute.xlu0 %1009
      %1011 = vset.pattern.permute.xlu0 2
      %1012 = vperm.xlu0 %1011, %v329
      %v1013 = vpop.permute.xlu0 %1012
      %1014 = vset.pattern.permute.xlu0 2
      %1015 = vperm.xlu0 %1014, %v330
      %v1016 = vpop.permute.xlu0 %1015
      %1017 = vset.pattern.permute.xlu0 2
      %1018 = vperm.xlu0 %1017, %v331
      %v1019 = vpop.permute.xlu0 %1018
      %1020 = vset.pattern.permute.xlu0 2
      %1021 = vperm.xlu0 %1020, %v332
      %v1022 = vpop.permute.xlu0 %1021
      %1023 = vset.pattern.permute.xlu0 2
      %1024 = vperm.xlu0 %1023, %v333
      %v1025 = vpop.permute.xlu0 %1024
      %1026 = vset.pattern.permute.xlu0 2
      %1027 = vperm.xlu0 %1026, %v334
      %v1028 = vpop.permute.xlu0 %1027
      %1029 = vset.pattern.permute.xlu0 2
      %1030 = vperm.xlu0 %1029, %v335
      %v1031 = vpop.permute.xlu0 %1030
      %1032 = vset.pattern.permute.xlu0 2
      %1033 = vperm.xlu0 %1032, %v336
      %v1034 = vpop.permute.xlu0 %1033
      %1035 = vset.pattern.permute.xlu0 2
      %1036 = vperm.xlu0 %1035, %v337
      %v1037 = vpop.permute.xlu0 %1036
      %1038 = vset.pattern.permute.xlu0 2
      %1039 = vperm.xlu0 %1038, %v338
      %v1040 = vpop.permute.xlu0 %1039
      %1041 = vset.pattern.permute.xlu0 2
      %1042 = vperm.xlu0 %1041, %v339
      %v1043 = vpop.permute.xlu0 %1042
      %1044 = vset.pattern.permute.xlu0 2
      %1045 = vperm.xlu0 %1044, %v340
      %v1046 = vpop.permute.xlu0 %1045
      %1047 = vset.pattern.permute.xlu0 2
      %1048 = vperm.xlu0 %1047, %v341
      %v1049 = vpop.permute.xlu0 %1048
      %1050 = vset.pattern.permute.xlu0 2
      %1051 = vperm.xlu0 %1050, %v342
      %v1052 = vpop.permute.xlu0 %1051
      %1053 = vset.pattern.permute.xlu0 2
      %1054 = vperm.xlu0 %1053, %v343
      %v1055 = vpop.permute.xlu0 %1054
      %1056 = vset.pattern.permute.xlu0 2
      %1057 = vperm.xlu0 %1056, %v344
      %v1058 = vpop.permute.xlu0 %1057
      %1059 = vset.pattern.permute.xlu0 2
      %1060 = vperm.xlu0 %1059, %v345
      %v1061 = vpop.permute.xlu0 %1060
      %1062 = vset.pattern.permute.xlu0 2
      %1063 = vperm.xlu0 %1062, %v346
      %v1064 = vpop.permute.xlu0 %1063
      %1065 = vset.pattern.permute.xlu0 2
      %1066 = vperm.xlu0 %1065, %v347
      %v1067 = vpop.permute.xlu0 %1066
      %1068 = vset.pattern.permute.xlu0 2
      %1069 = vperm.xlu0 %1068, %v348
      %v1070 = vpop.permute.xlu0 %1069
      %1071 = vset.pattern.permute.xlu0 2
      %1072 = vperm.xlu0 %1071, %v349
      %v1073 = vpop.permute.xlu0 %1072
      %1074 = vset.pattern.permute.xlu0 2
      %1075 = vperm.xlu0 %1074, %v350
      %v1076 = vpop.permute.xlu0 %1075
      %1077 = vset.pattern.permute.xlu0 2
      %1078 = vperm.xlu0 %1077, %v351
      %v1079 = vpop.permute.xlu0 %1078
      %1080 = vset.pattern.permute.xlu0 2
      %1081 = vperm.xlu0 %1080, %v352
      %v1082 = vpop.permute.xlu0 %1081
      %1083 = vset.pattern.permute.xlu0 2
      %1084 = vperm.xlu0 %1083, %v353
      %v1085 = vpop.permute.xlu0 %1084
      %1086 = vset.pattern.permute.xlu0 2
      %1087 = vperm.xlu0 %1086, %v354
      %v1088 = vpop.permute.xlu0 %1087
      %1089 = vset.pattern.permute.xlu0 2
      %1090 = vperm.xlu0 %1089, %v355
      %v1091 = vpop.permute.xlu0 %1090
      %1092 = vset.pattern.permute.xlu0 2
      %1093 = vperm.xlu0 %1092, %v356
      %v1094 = vpop.permute.xlu0 %1093
      %1095 = vset.pattern.permute.xlu0 2
      %1096 = vperm.xlu0 %1095, %v357
      %v1097 = vpop.permute.xlu0 %1096
      %1098 = vset.pattern.permute.xlu0 2
      %1099 = vperm.xlu0 %1098, %v358
      %v1100 = vpop.permute.xlu0 %1099
      %1101 = vset.pattern.permute.xlu0 2
      %1102 = vperm.xlu0 %1101, %v359
      %v1103 = vpop.permute.xlu0 %1102
      %1104 = vset.pattern.permute.xlu0 2
      %1105 = vperm.xlu0 %1104, %v360
      %v1106 = vpop.permute.xlu0 %1105
      %1107 = vset.pattern.permute.xlu0 2
      %1108 = vperm.xlu0 %1107, %v361
      %v1109 = vpop.permute.xlu0 %1108
      %1110 = vset.pattern.permute.xlu0 2
      %1111 = vperm.xlu0 %1110, %v362
      %v1112 = vpop.permute.xlu0 %1111
      %1113 = vset.pattern.permute.xlu0 2
      %1114 = vperm.xlu0 %1113, %v363
      %v1115 = vpop.permute.xlu0 %1114
      %1116 = vset.pattern.permute.xlu0 2
      %1117 = vperm.xlu0 %1116, %v364
      %v1118 = vpop.permute.xlu0 %1117
      %1119 = vset.pattern.permute.xlu0 2
      %1120 = vperm.xlu0 %1119, %v365
      %v1121 = vpop.permute.xlu0 %1120
      %1122 = vset.pattern.permute.xlu0 2
      %1123 = vperm.xlu0 %1122, %v366
      %v1124 = vpop.permute.xlu0 %1123
      %1125 = vset.pattern.permute.xlu0 2
      %1126 = vperm.xlu0 %1125, %v367
      %v1127 = vpop.permute.xlu0 %1126
      %1128 = vset.pattern.permute.xlu0 2
      %1129 = vperm.xlu0 %1128, %v368
      %v1130 = vpop.permute.xlu0 %1129
      %1131 = vset.pattern.permute.xlu0 2
      %1132 = vperm.xlu0 %1131, %v369
      %v1133 = vpop.permute.xlu0 %1132
      %1134 = vset.pattern.permute.xlu0 2
      %1135 = vperm.xlu0 %1134, %v370
      %v1136 = vpop.permute.xlu0 %1135
      %1137 = vset.pattern.permute.xlu0 2
      %1138 = vperm.xlu0 %1137, %v371
      %v1139 = vpop.permute.xlu0 %1138
      %1140 = vset.pattern.permute.xlu0 2
      %1141 = vperm.xlu0 %1140, %v372
      %v1142 = vpop.permute.xlu0 %1141
      %vm1143 = vcmp.eq.s32.totalorder %v374, %v953
      %vm1144 = vcmp.eq.s32.totalorder %v374, %v956
      %vm1145 = vcmp.eq.s32.totalorder %v374, %v959
      %vm1146 = vcmp.eq.s32.totalorder %v374, %v962
      %vm1147 = vcmp.eq.s32.totalorder %v374, %v965
      %vm1148 = vcmp.eq.s32.totalorder %v374, %v968
      %vm1149 = vcmp.eq.s32.totalorder %v374, %v971
      %vm1150 = vcmp.eq.s32.totalorder %v374, %v974
      %vm1151 = vcmp.eq.s32.totalorder %v374, %v977
      %vm1152 = vcmp.eq.s32.totalorder %v374, %v980
      %vm1153 = vcmp.eq.s32.totalorder %v374, %v983
      %vm1154 = vcmp.eq.s32.totalorder %v374, %v986
      %vm1155 = vcmp.eq.s32.totalorder %v374, %v989
      %vm1156 = vcmp.eq.s32.totalorder %v374, %v992
      %vm1157 = vcmp.eq.s32.totalorder %v374, %v995
      %vm1158 = vcmp.eq.s32.totalorder %v374, %v998
      %vm1159 = vcmp.eq.s32.totalorder %v374, %v1001
      %vm1160 = vcmp.eq.s32.totalorder %v374, %v1004
      %vm1161 = vcmp.eq.s32.totalorder %v374, %v1007
      %vm1162 = vcmp.eq.s32.totalorder %v374, %v1010
      %vm1163 = vcmp.eq.s32.totalorder %v374, %v1013
      %vm1164 = vcmp.eq.s32.totalorder %v374, %v1016
      %vm1165 = vcmp.eq.s32.totalorder %v374, %v1019
      %vm1166 = vcmp.eq.s32.totalorder %v374, %v1022
      %vm1167 = vcmp.eq.s32.totalorder %v374, %v1025
      %vm1168 = vcmp.eq.s32.totalorder %v374, %v1028
      %vm1169 = vcmp.eq.s32.totalorder %v374, %v1031
      %vm1170 = vcmp.eq.s32.totalorder %v374, %v1034
      %vm1171 = vcmp.eq.s32.totalorder %v374, %v1037
      %vm1172 = vcmp.eq.s32.totalorder %v374, %v1040
      %vm1173 = vcmp.eq.s32.totalorder %v374, %v1043
      %vm1174 = vcmp.eq.s32.totalorder %v374, %v1046
      %vm1175 = vcmp.eq.s32.totalorder %v374, %v1049
      %vm1176 = vcmp.eq.s32.totalorder %v374, %v1052
      %vm1177 = vcmp.eq.s32.totalorder %v374, %v1055
      %vm1178 = vcmp.eq.s32.totalorder %v374, %v1058
      %vm1179 = vcmp.eq.s32.totalorder %v374, %v1061
      %vm1180 = vcmp.eq.s32.totalorder %v374, %v1064
      %vm1181 = vcmp.eq.s32.totalorder %v374, %v1067
      %vm1182 = vcmp.eq.s32.totalorder %v374, %v1070
      %vm1183 = vcmp.eq.s32.totalorder %v374, %v1073
      %vm1184 = vcmp.eq.s32.totalorder %v374, %v1076
      %vm1185 = vcmp.eq.s32.totalorder %v374, %v1079
      %vm1186 = vcmp.eq.s32.totalorder %v374, %v1082
      %vm1187 = vcmp.eq.s32.totalorder %v374, %v1085
      %vm1188 = vcmp.eq.s32.totalorder %v374, %v1088
      %vm1189 = vcmp.eq.s32.totalorder %v374, %v1091
      %vm1190 = vcmp.eq.s32.totalorder %v374, %v1094
      %vm1191 = vcmp.eq.s32.totalorder %v374, %v1097
      %vm1192 = vcmp.eq.s32.totalorder %v374, %v1100
      %vm1193 = vcmp.eq.s32.totalorder %v374, %v1103
      %vm1194 = vcmp.eq.s32.totalorder %v374, %v1106
      %vm1195 = vcmp.eq.s32.totalorder %v374, %v1109
      %vm1196 = vcmp.eq.s32.totalorder %v374, %v1112
      %vm1197 = vcmp.eq.s32.totalorder %v374, %v1115
      %vm1198 = vcmp.eq.s32.totalorder %v374, %v1118
      %vm1199 = vcmp.eq.s32.totalorder %v374, %v1121
      %vm1200 = vcmp.eq.s32.totalorder %v374, %v1124
      %vm1201 = vcmp.eq.s32.totalorder %v374, %v1127
      %vm1202 = vcmp.eq.s32.totalorder %v374, %v1130
      %vm1203 = vcmp.eq.s32.totalorder %v374, %v1133
      %vm1204 = vcmp.eq.s32.totalorder %v374, %v1136
      %vm1205 = vcmp.eq.s32.totalorder %v374, %v1139
      %vm1206 = vcmp.eq.s32.totalorder %v374, %v1142
      %vm1207 = vmor %vm887, %vm1143
      %vm1208 = vmor %vm888, %vm1144
      %vm1209 = vmor %vm889, %vm1145
      %vm1210 = vmor %vm890, %vm1146
      %vm1211 = vmor %vm891, %vm1147
      %vm1212 = vmor %vm892, %vm1148
      %vm1213 = vmor %vm893, %vm1149
      %vm1214 = vmor %vm894, %vm1150
      %vm1215 = vmor %vm895, %vm1151
      %vm1216 = vmor %vm896, %vm1152
      %vm1217 = vmor %vm897, %vm1153
      %vm1218 = vmor %vm898, %vm1154
      %vm1219 = vmor %vm899, %vm1155
      %vm1220 = vmor %vm900, %vm1156
      %vm1221 = vmor %vm901, %vm1157
      %vm1222 = vmor %vm902, %vm1158
      %vm1223 = vmor %vm903, %vm1159
      %vm1224 = vmor %vm904, %vm1160
      %vm1225 = vmor %vm905, %vm1161
      %vm1226 = vmor %vm906, %vm1162
      %vm1227 = vmor %vm907, %vm1163
      %vm1228 = vmor %vm908, %vm1164
      %vm1229 = vmor %vm909, %vm1165
      %vm1230 = vmor %vm910, %vm1166
      %vm1231 = vmor %vm911, %vm1167
      %vm1232 = vmor %vm912, %vm1168
      %vm1233 = vmor %vm913, %vm1169
      %vm1234 = vmor %vm914, %vm1170
      %vm1235 = vmor %vm915, %vm1171
      %vm1236 = vmor %vm916, %vm1172
      %vm1237 = vmor %vm917, %vm1173
      %vm1238 = vmor %vm918, %vm1174
      %vm1239 = vmor %vm919, %vm1175
      %vm1240 = vmor %vm920, %vm1176
      %vm1241 = vmor %vm921, %vm1177
      %vm1242 = vmor %vm922, %vm1178
      %vm1243 = vmor %vm923, %vm1179
      %vm1244 = vmor %vm924, %vm1180
      %vm1245 = vmor %vm925, %vm1181
      %vm1246 = vmor %vm926, %vm1182
      %vm1247 = vmor %vm927, %vm1183
      %vm1248 = vmor %vm928, %vm1184
      %vm1249 = vmor %vm929, %vm1185
      %vm1250 = vmor %vm930, %vm1186
      %vm1251 = vmor %vm931, %vm1187
      %vm1252 = vmor %vm932, %vm1188
      %vm1253 = vmor %vm933, %vm1189
      %vm1254 = vmor %vm934, %vm1190
      %vm1255 = vmor %vm935, %vm1191
      %vm1256 = vmor %vm936, %vm1192
      %vm1257 = vmor %vm937, %vm1193
      %vm1258 = vmor %vm938, %vm1194
      %vm1259 = vmor %vm939, %vm1195
      %vm1260 = vmor %vm940, %vm1196
      %vm1261 = vmor %vm941, %vm1197
      %vm1262 = vmor %vm942, %vm1198
      %vm1263 = vmor %vm943, %vm1199
      %vm1264 = vmor %vm944, %vm1200
      %vm1265 = vmor %vm945, %vm1201
      %vm1266 = vmor %vm946, %vm1202
      %vm1267 = vmor %vm947, %vm1203
      %vm1268 = vmor %vm948, %vm1204
      %vm1269 = vmor %vm949, %vm1205
      %vm1270 = vmor %vm950, %vm1206
      %1271 = vset.pattern.permute.xlu0 3
      %1272 = vperm.xlu0 %1271, %v309
      %v1273 = vpop.permute.xlu0 %1272
      %1274 = vset.pattern.permute.xlu0 3
      %1275 = vperm.xlu0 %1274, %v310
      %v1276 = vpop.permute.xlu0 %1275
      %1277 = vset.pattern.permute.xlu0 3
      %1278 = vperm.xlu0 %1277, %v311
      %v1279 = vpop.permute.xlu0 %1278
      %1280 = vset.pattern.permute.xlu0 3
      %1281 = vperm.xlu0 %1280, %v312
      %v1282 = vpop.permute.xlu0 %1281
      %1283 = vset.pattern.permute.xlu0 3
      %1284 = vperm.xlu0 %1283, %v313
      %v1285 = vpop.permute.xlu0 %1284
      %1286 = vset.pattern.permute.xlu0 3
      %1287 = vperm.xlu0 %1286, %v314
      %v1288 = vpop.permute.xlu0 %1287
      %1289 = vset.pattern.permute.xlu0 3
      %1290 = vperm.xlu0 %1289, %v315
      %v1291 = vpop.permute.xlu0 %1290
      %1292 = vset.pattern.permute.xlu0 3
      %1293 = vperm.xlu0 %1292, %v316
      %v1294 = vpop.permute.xlu0 %1293
      %1295 = vset.pattern.permute.xlu0 3
      %1296 = vperm.xlu0 %1295, %v317
      %v1297 = vpop.permute.xlu0 %1296
      %1298 = vset.pattern.permute.xlu0 3
      %1299 = vperm.xlu0 %1298, %v318
      %v1300 = vpop.permute.xlu0 %1299
      %1301 = vset.pattern.permute.xlu0 3
      %1302 = vperm.xlu0 %1301, %v319
      %v1303 = vpop.permute.xlu0 %1302
      %1304 = vset.pattern.permute.xlu0 3
      %1305 = vperm.xlu0 %1304, %v320
      %v1306 = vpop.permute.xlu0 %1305
      %1307 = vset.pattern.permute.xlu0 3
      %1308 = vperm.xlu0 %1307, %v321
      %v1309 = vpop.permute.xlu0 %1308
      %1310 = vset.pattern.permute.xlu0 3
      %1311 = vperm.xlu0 %1310, %v322
      %v1312 = vpop.permute.xlu0 %1311
      %1313 = vset.pattern.permute.xlu0 3
      %1314 = vperm.xlu0 %1313, %v323
      %v1315 = vpop.permute.xlu0 %1314
      %1316 = vset.pattern.permute.xlu0 3
      %1317 = vperm.xlu0 %1316, %v324
      %v1318 = vpop.permute.xlu0 %1317
      %1319 = vset.pattern.permute.xlu0 3
      %1320 = vperm.xlu0 %1319, %v325
      %v1321 = vpop.permute.xlu0 %1320
      %1322 = vset.pattern.permute.xlu0 3
      %1323 = vperm.xlu0 %1322, %v326
      %v1324 = vpop.permute.xlu0 %1323
      %1325 = vset.pattern.permute.xlu0 3
      %1326 = vperm.xlu0 %1325, %v327
      %v1327 = vpop.permute.xlu0 %1326
      %1328 = vset.pattern.permute.xlu0 3
      %1329 = vperm.xlu0 %1328, %v328
      %v1330 = vpop.permute.xlu0 %1329
      %1331 = vset.pattern.permute.xlu0 3
      %1332 = vperm.xlu0 %1331, %v329
      %v1333 = vpop.permute.xlu0 %1332
      %1334 = vset.pattern.permute.xlu0 3
      %1335 = vperm.xlu0 %1334, %v330
      %v1336 = vpop.permute.xlu0 %1335
      %1337 = vset.pattern.permute.xlu0 3
      %1338 = vperm.xlu0 %1337, %v331
      %v1339 = vpop.permute.xlu0 %1338
      %1340 = vset.pattern.permute.xlu0 3
      %1341 = vperm.xlu0 %1340, %v332
      %v1342 = vpop.permute.xlu0 %1341
      %1343 = vset.pattern.permute.xlu0 3
      %1344 = vperm.xlu0 %1343, %v333
      %v1345 = vpop.permute.xlu0 %1344
      %1346 = vset.pattern.permute.xlu0 3
      %1347 = vperm.xlu0 %1346, %v334
      %v1348 = vpop.permute.xlu0 %1347
      %1349 = vset.pattern.permute.xlu0 3
      %1350 = vperm.xlu0 %1349, %v335
      %v1351 = vpop.permute.xlu0 %1350
      %1352 = vset.pattern.permute.xlu0 3
      %1353 = vperm.xlu0 %1352, %v336
      %v1354 = vpop.permute.xlu0 %1353
      %1355 = vset.pattern.permute.xlu0 3
      %1356 = vperm.xlu0 %1355, %v337
      %v1357 = vpop.permute.xlu0 %1356
      %1358 = vset.pattern.permute.xlu0 3
      %1359 = vperm.xlu0 %1358, %v338
      %v1360 = vpop.permute.xlu0 %1359
      %1361 = vset.pattern.permute.xlu0 3
      %1362 = vperm.xlu0 %1361, %v339
      %v1363 = vpop.permute.xlu0 %1362
      %1364 = vset.pattern.permute.xlu0 3
      %1365 = vperm.xlu0 %1364, %v340
      %v1366 = vpop.permute.xlu0 %1365
      %1367 = vset.pattern.permute.xlu0 3
      %1368 = vperm.xlu0 %1367, %v341
      %v1369 = vpop.permute.xlu0 %1368
      %1370 = vset.pattern.permute.xlu0 3
      %1371 = vperm.xlu0 %1370, %v342
      %v1372 = vpop.permute.xlu0 %1371
      %1373 = vset.pattern.permute.xlu0 3
      %1374 = vperm.xlu0 %1373, %v343
      %v1375 = vpop.permute.xlu0 %1374
      %1376 = vset.pattern.permute.xlu0 3
      %1377 = vperm.xlu0 %1376, %v344
      %v1378 = vpop.permute.xlu0 %1377
      %1379 = vset.pattern.permute.xlu0 3
      %1380 = vperm.xlu0 %1379, %v345
      %v1381 = vpop.permute.xlu0 %1380
      %1382 = vset.pattern.permute.xlu0 3
      %1383 = vperm.xlu0 %1382, %v346
      %v1384 = vpop.permute.xlu0 %1383
      %1385 = vset.pattern.permute.xlu0 3
      %1386 = vperm.xlu0 %1385, %v347
      %v1387 = vpop.permute.xlu0 %1386
      %1388 = vset.pattern.permute.xlu0 3
      %1389 = vperm.xlu0 %1388, %v348
      %v1390 = vpop.permute.xlu0 %1389
      %1391 = vset.pattern.permute.xlu0 3
      %1392 = vperm.xlu0 %1391, %v349
      %v1393 = vpop.permute.xlu0 %1392
      %1394 = vset.pattern.permute.xlu0 3
      %1395 = vperm.xlu0 %1394, %v350
      %v1396 = vpop.permute.xlu0 %1395
      %1397 = vset.pattern.permute.xlu0 3
      %1398 = vperm.xlu0 %1397, %v351
      %v1399 = vpop.permute.xlu0 %1398
      %1400 = vset.pattern.permute.xlu0 3
      %1401 = vperm.xlu0 %1400, %v352
      %v1402 = vpop.permute.xlu0 %1401
      %1403 = vset.pattern.permute.xlu0 3
      %1404 = vperm.xlu0 %1403, %v353
      %v1405 = vpop.permute.xlu0 %1404
      %1406 = vset.pattern.permute.xlu0 3
      %1407 = vperm.xlu0 %1406, %v354
      %v1408 = vpop.permute.xlu0 %1407
      %1409 = vset.pattern.permute.xlu0 3
      %1410 = vperm.xlu0 %1409, %v355
      %v1411 = vpop.permute.xlu0 %1410
      %1412 = vset.pattern.permute.xlu0 3
      %1413 = vperm.xlu0 %1412, %v356
      %v1414 = vpop.permute.xlu0 %1413
      %1415 = vset.pattern.permute.xlu0 3
      %1416 = vperm.xlu0 %1415, %v357
      %v1417 = vpop.permute.xlu0 %1416
      %1418 = vset.pattern.permute.xlu0 3
      %1419 = vperm.xlu0 %1418, %v358
      %v1420 = vpop.permute.xlu0 %1419
      %1421 = vset.pattern.permute.xlu0 3
      %1422 = vperm.xlu0 %1421, %v359
      %v1423 = vpop.permute.xlu0 %1422
      %1424 = vset.pattern.permute.xlu0 3
      %1425 = vperm.xlu0 %1424, %v360
      %v1426 = vpop.permute.xlu0 %1425
      %1427 = vset.pattern.permute.xlu0 3
      %1428 = vperm.xlu0 %1427, %v361
      %v1429 = vpop.permute.xlu0 %1428
      %1430 = vset.pattern.permute.xlu0 3
      %1431 = vperm.xlu0 %1430, %v362
      %v1432 = vpop.permute.xlu0 %1431
      %1433 = vset.pattern.permute.xlu0 3
      %1434 = vperm.xlu0 %1433, %v363
      %v1435 = vpop.permute.xlu0 %1434
      %1436 = vset.pattern.permute.xlu0 3
      %1437 = vperm.xlu0 %1436, %v364
      %v1438 = vpop.permute.xlu0 %1437
      %1439 = vset.pattern.permute.xlu0 3
      %1440 = vperm.xlu0 %1439, %v365
      %v1441 = vpop.permute.xlu0 %1440
      %1442 = vset.pattern.permute.xlu0 3
      %1443 = vperm.xlu0 %1442, %v366
      %v1444 = vpop.permute.xlu0 %1443
      %1445 = vset.pattern.permute.xlu0 3
      %1446 = vperm.xlu0 %1445, %v367
      %v1447 = vpop.permute.xlu0 %1446
      %1448 = vset.pattern.permute.xlu0 3
      %1449 = vperm.xlu0 %1448, %v368
      %v1450 = vpop.permute.xlu0 %1449
      %1451 = vset.pattern.permute.xlu0 3
      %1452 = vperm.xlu0 %1451, %v369
      %v1453 = vpop.permute.xlu0 %1452
      %1454 = vset.pattern.permute.xlu0 3
      %1455 = vperm.xlu0 %1454, %v370
      %v1456 = vpop.permute.xlu0 %1455
      %1457 = vset.pattern.permute.xlu0 3
      %1458 = vperm.xlu0 %1457, %v371
      %v1459 = vpop.permute.xlu0 %1458
      %1460 = vset.pattern.permute.xlu0 3
      %1461 = vperm.xlu0 %1460, %v372
      %v1462 = vpop.permute.xlu0 %1461
      %vm1463 = vcmp.eq.s32.totalorder %v374, %v1273
      %vm1464 = vcmp.eq.s32.totalorder %v374, %v1276
      %vm1465 = vcmp.eq.s32.totalorder %v374, %v1279
      %vm1466 = vcmp.eq.s32.totalorder %v374, %v1282
      %vm1467 = vcmp.eq.s32.totalorder %v374, %v1285
      %vm1468 = vcmp.eq.s32.totalorder %v374, %v1288
      %vm1469 = vcmp.eq.s32.totalorder %v374, %v1291
      %vm1470 = vcmp.eq.s32.totalorder %v374, %v1294
      %vm1471 = vcmp.eq.s32.totalorder %v374, %v1297
      %vm1472 = vcmp.eq.s32.totalorder %v374, %v1300
      %vm1473 = vcmp.eq.s32.totalorder %v374, %v1303
      %vm1474 = vcmp.eq.s32.totalorder %v374, %v1306
      %vm1475 = vcmp.eq.s32.totalorder %v374, %v1309
      %vm1476 = vcmp.eq.s32.totalorder %v374, %v1312
      %vm1477 = vcmp.eq.s32.totalorder %v374, %v1315
      %vm1478 = vcmp.eq.s32.totalorder %v374, %v1318
      %vm1479 = vcmp.eq.s32.totalorder %v374, %v1321
      %vm1480 = vcmp.eq.s32.totalorder %v374, %v1324
      %vm1481 = vcmp.eq.s32.totalorder %v374, %v1327
      %vm1482 = vcmp.eq.s32.totalorder %v374, %v1330
      %vm1483 = vcmp.eq.s32.totalorder %v374, %v1333
      %vm1484 = vcmp.eq.s32.totalorder %v374, %v1336
      %vm1485 = vcmp.eq.s32.totalorder %v374, %v1339
      %vm1486 = vcmp.eq.s32.totalorder %v374, %v1342
      %vm1487 = vcmp.eq.s32.totalorder %v374, %v1345
      %vm1488 = vcmp.eq.s32.totalorder %v374, %v1348
      %vm1489 = vcmp.eq.s32.totalorder %v374, %v1351
      %vm1490 = vcmp.eq.s32.totalorder %v374, %v1354
      %vm1491 = vcmp.eq.s32.totalorder %v374, %v1357
      %vm1492 = vcmp.eq.s32.totalorder %v374, %v1360
      %vm1493 = vcmp.eq.s32.totalorder %v374, %v1363
      %vm1494 = vcmp.eq.s32.totalorder %v374, %v1366
      %vm1495 = vcmp.eq.s32.totalorder %v374, %v1369
      %vm1496 = vcmp.eq.s32.totalorder %v374, %v1372
      %vm1497 = vcmp.eq.s32.totalorder %v374, %v1375
      %vm1498 = vcmp.eq.s32.totalorder %v374, %v1378
      %vm1499 = vcmp.eq.s32.totalorder %v374, %v1381
      %vm1500 = vcmp.eq.s32.totalorder %v374, %v1384
      %vm1501 = vcmp.eq.s32.totalorder %v374, %v1387
      %vm1502 = vcmp.eq.s32.totalorder %v374, %v1390
      %vm1503 = vcmp.eq.s32.totalorder %v374, %v1393
      %vm1504 = vcmp.eq.s32.totalorder %v374, %v1396
      %vm1505 = vcmp.eq.s32.totalorder %v374, %v1399
      %vm1506 = vcmp.eq.s32.totalorder %v374, %v1402
      %vm1507 = vcmp.eq.s32.totalorder %v374, %v1405
      %vm1508 = vcmp.eq.s32.totalorder %v374, %v1408
      %vm1509 = vcmp.eq.s32.totalorder %v374, %v1411
      %vm1510 = vcmp.eq.s32.totalorder %v374, %v1414
      %vm1511 = vcmp.eq.s32.totalorder %v374, %v1417
      %vm1512 = vcmp.eq.s32.totalorder %v374, %v1420
      %vm1513 = vcmp.eq.s32.totalorder %v374, %v1423
      %vm1514 = vcmp.eq.s32.totalorder %v374, %v1426
      %vm1515 = vcmp.eq.s32.totalorder %v374, %v1429
      %vm1516 = vcmp.eq.s32.totalorder %v374, %v1432
      %vm1517 = vcmp.eq.s32.totalorder %v374, %v1435
      %vm1518 = vcmp.eq.s32.totalorder %v374, %v1438
      %vm1519 = vcmp.eq.s32.totalorder %v374, %v1441
      %vm1520 = vcmp.eq.s32.totalorder %v374, %v1444
      %vm1521 = vcmp.eq.s32.totalorder %v374, %v1447
      %vm1522 = vcmp.eq.s32.totalorder %v374, %v1450
      %vm1523 = vcmp.eq.s32.totalorder %v374, %v1453
      %vm1524 = vcmp.eq.s32.totalorder %v374, %v1456
      %vm1525 = vcmp.eq.s32.totalorder %v374, %v1459
      %vm1526 = vcmp.eq.s32.totalorder %v374, %v1462
      %vm1527 = vmor %vm1207, %vm1463
      %vm1528 = vmor %vm1208, %vm1464
      %vm1529 = vmor %vm1209, %vm1465
      %vm1530 = vmor %vm1210, %vm1466
      %vm1531 = vmor %vm1211, %vm1467
      %vm1532 = vmor %vm1212, %vm1468
      %vm1533 = vmor %vm1213, %vm1469
      %vm1534 = vmor %vm1214, %vm1470
      %vm1535 = vmor %vm1215, %vm1471
      %vm1536 = vmor %vm1216, %vm1472
      %vm1537 = vmor %vm1217, %vm1473
      %vm1538 = vmor %vm1218, %vm1474
      %vm1539 = vmor %vm1219, %vm1475
      %vm1540 = vmor %vm1220, %vm1476
      %vm1541 = vmor %vm1221, %vm1477
      %vm1542 = vmor %vm1222, %vm1478
      %vm1543 = vmor %vm1223, %vm1479
      %vm1544 = vmor %vm1224, %vm1480
      %vm1545 = vmor %vm1225, %vm1481
      %vm1546 = vmor %vm1226, %vm1482
      %vm1547 = vmor %vm1227, %vm1483
      %vm1548 = vmor %vm1228, %vm1484
      %vm1549 = vmor %vm1229, %vm1485
      %vm1550 = vmor %vm1230, %vm1486
      %vm1551 = vmor %vm1231, %vm1487
      %vm1552 = vmor %vm1232, %vm1488
      %vm1553 = vmor %vm1233, %vm1489
      %vm1554 = vmor %vm1234, %vm1490
      %vm1555 = vmor %vm1235, %vm1491
      %vm1556 = vmor %vm1236, %vm1492
      %vm1557 = vmor %vm1237, %vm1493
      %vm1558 = vmor %vm1238, %vm1494
      %vm1559 = vmor %vm1239, %vm1495
      %vm1560 = vmor %vm1240, %vm1496
      %vm1561 = vmor %vm1241, %vm1497
      %vm1562 = vmor %vm1242, %vm1498
      %vm1563 = vmor %vm1243, %vm1499
      %vm1564 = vmor %vm1244, %vm1500
      %vm1565 = vmor %vm1245, %vm1501
      %vm1566 = vmor %vm1246, %vm1502
      %vm1567 = vmor %vm1247, %vm1503
      %vm1568 = vmor %vm1248, %vm1504
      %vm1569 = vmor %vm1249, %vm1505
      %vm1570 = vmor %vm1250, %vm1506
      %vm1571 = vmor %vm1251, %vm1507
      %vm1572 = vmor %vm1252, %vm1508
      %vm1573 = vmor %vm1253, %vm1509
      %vm1574 = vmor %vm1254, %vm1510
      %vm1575 = vmor %vm1255, %vm1511
      %vm1576 = vmor %vm1256, %vm1512
      %vm1577 = vmor %vm1257, %vm1513
      %vm1578 = vmor %vm1258, %vm1514
      %vm1579 = vmor %vm1259, %vm1515
      %vm1580 = vmor %vm1260, %vm1516
      %vm1581 = vmor %vm1261, %vm1517
      %vm1582 = vmor %vm1262, %vm1518
      %vm1583 = vmor %vm1263, %vm1519
      %vm1584 = vmor %vm1264, %vm1520
      %vm1585 = vmor %vm1265, %vm1521
      %vm1586 = vmor %vm1266, %vm1522
      %vm1587 = vmor %vm1267, %vm1523
      %vm1588 = vmor %vm1268, %vm1524
      %vm1589 = vmor %vm1269, %vm1525
      %vm1590 = vmor %vm1270, %vm1526
      %v1591 = vsel %vm1527, 1, 0
      %v1592 = vsel %vm1528, 1, 0
      %v1593 = vsel %vm1529, 1, 0
      %v1594 = vsel %vm1530, 1, 0
      %v1595 = vsel %vm1531, 1, 0
      %v1596 = vsel %vm1532, 1, 0
      %v1597 = vsel %vm1533, 1, 0
      %v1598 = vsel %vm1534, 1, 0
      %v1599 = vsel %vm1535, 1, 0
      %v1600 = vsel %vm1536, 1, 0
      %v1601 = vsel %vm1537, 1, 0
      %v1602 = vsel %vm1538, 1, 0
      %v1603 = vsel %vm1539, 1, 0
      %v1604 = vsel %vm1540, 1, 0
      %v1605 = vsel %vm1541, 1, 0
      %v1606 = vsel %vm1542, 1, 0
      %v1607 = vsel %vm1543, 1, 0
      %v1608 = vsel %vm1544, 1, 0
      %v1609 = vsel %vm1545, 1, 0
      %v1610 = vsel %vm1546, 1, 0
      %v1611 = vsel %vm1547, 1, 0
      %v1612 = vsel %vm1548, 1, 0
      %v1613 = vsel %vm1549, 1, 0
      %v1614 = vsel %vm1550, 1, 0
      %v1615 = vsel %vm1551, 1, 0
      %v1616 = vsel %vm1552, 1, 0
      %v1617 = vsel %vm1553, 1, 0
      %v1618 = vsel %vm1554, 1, 0
      %v1619 = vsel %vm1555, 1, 0
      %v1620 = vsel %vm1556, 1, 0
      %v1621 = vsel %vm1557, 1, 0
      %v1622 = vsel %vm1558, 1, 0
      %v1623 = vsel %vm1559, 1, 0
      %v1624 = vsel %vm1560, 1, 0
      %v1625 = vsel %vm1561, 1, 0
      %v1626 = vsel %vm1562, 1, 0
      %v1627 = vsel %vm1563, 1, 0
      %v1628 = vsel %vm1564, 1, 0
      %v1629 = vsel %vm1565, 1, 0
      %v1630 = vsel %vm1566, 1, 0
      %v1631 = vsel %vm1567, 1, 0
      %v1632 = vsel %vm1568, 1, 0
      %v1633 = vsel %vm1569, 1, 0
      %v1634 = vsel %vm1570, 1, 0
      %v1635 = vsel %vm1571, 1, 0
      %v1636 = vsel %vm1572, 1, 0
      %v1637 = vsel %vm1573, 1, 0
      %v1638 = vsel %vm1574, 1, 0
      %v1639 = vsel %vm1575, 1, 0
      %v1640 = vsel %vm1576, 1, 0
      %v1641 = vsel %vm1577, 1, 0
      %v1642 = vsel %vm1578, 1, 0
      %v1643 = vsel %vm1579, 1, 0
      %v1644 = vsel %vm1580, 1, 0
      %v1645 = vsel %vm1581, 1, 0
      %v1646 = vsel %vm1582, 1, 0
      %v1647 = vsel %vm1583, 1, 0
      %v1648 = vsel %vm1584, 1, 0
      %v1649 = vsel %vm1585, 1, 0
      %v1650 = vsel %vm1586, 1, 0
      %v1651 = vsel %vm1587, 1, 0
      %v1652 = vsel %vm1588, 1, 0
      %v1653 = vsel %vm1589, 1, 0
      %v1654 = vsel %vm1590, 1, 0
      %v1655 = vcvt.s32.f32 %v1591
      %v1656 = vcvt.s32.f32 %v1592
      %v1657 = vcvt.s32.f32 %v1593
      %v1658 = vcvt.s32.f32 %v1594
      %v1659 = vcvt.s32.f32 %v1595
      %v1660 = vcvt.s32.f32 %v1596
      %v1661 = vcvt.s32.f32 %v1597
      %v1662 = vcvt.s32.f32 %v1598
      %v1663 = vcvt.s32.f32 %v1599
      %v1664 = vcvt.s32.f32 %v1600
      %v1665 = vcvt.s32.f32 %v1601
      %v1666 = vcvt.s32.f32 %v1602
      %v1667 = vcvt.s32.f32 %v1603
      %v1668 = vcvt.s32.f32 %v1604
      %v1669 = vcvt.s32.f32 %v1605
      %v1670 = vcvt.s32.f32 %v1606
      %v1671 = vcvt.s32.f32 %v1607
      %v1672 = vcvt.s32.f32 %v1608
      %v1673 = vcvt.s32.f32 %v1609
      %v1674 = vcvt.s32.f32 %v1610
      %v1675 = vcvt.s32.f32 %v1611
      %v1676 = vcvt.s32.f32 %v1612
      %v1677 = vcvt.s32.f32 %v1613
      %v1678 = vcvt.s32.f32 %v1614
      %v1679 = vcvt.s32.f32 %v1615
      %v1680 = vcvt.s32.f32 %v1616
      %v1681 = vcvt.s32.f32 %v1617
      %v1682 = vcvt.s32.f32 %v1618
      %v1683 = vcvt.s32.f32 %v1619
      %v1684 = vcvt.s32.f32 %v1620
      %v1685 = vcvt.s32.f32 %v1621
      %v1686 = vcvt.s32.f32 %v1622
      %v1687 = vcvt.s32.f32 %v1623
      %v1688 = vcvt.s32.f32 %v1624
      %v1689 = vcvt.s32.f32 %v1625
      %v1690 = vcvt.s32.f32 %v1626
      %v1691 = vcvt.s32.f32 %v1627
      %v1692 = vcvt.s32.f32 %v1628
      %v1693 = vcvt.s32.f32 %v1629
      %v1694 = vcvt.s32.f32 %v1630
      %v1695 = vcvt.s32.f32 %v1631
      %v1696 = vcvt.s32.f32 %v1632
      %v1697 = vcvt.s32.f32 %v1633
      %v1698 = vcvt.s32.f32 %v1634
      %v1699 = vcvt.s32.f32 %v1635
      %v1700 = vcvt.s32.f32 %v1636
      %v1701 = vcvt.s32.f32 %v1637
      %v1702 = vcvt.s32.f32 %v1638
      %v1703 = vcvt.s32.f32 %v1639
      %v1704 = vcvt.s32.f32 %v1640
      %v1705 = vcvt.s32.f32 %v1641
      %v1706 = vcvt.s32.f32 %v1642
      %v1707 = vcvt.s32.f32 %v1643
      %v1708 = vcvt.s32.f32 %v1644
      %v1709 = vcvt.s32.f32 %v1645
      %v1710 = vcvt.s32.f32 %v1646
      %v1711 = vcvt.s32.f32 %v1647
      %v1712 = vcvt.s32.f32 %v1648
      %v1713 = vcvt.s32.f32 %v1649
      %v1714 = vcvt.s32.f32 %v1650
      %v1715 = vcvt.s32.f32 %v1651
      %v1716 = vcvt.s32.f32 %v1652
      %v1717 = vcvt.s32.f32 %v1653
      %v1718 = vcvt.s32.f32 %v1654
      %v1719 = vpack.c.bf16 %v1656, %v1655
      %v1720 = vpack.c.bf16 %v1658, %v1657
      %v1721 = vpack.c.bf16 %v1660, %v1659
      %v1722 = vpack.c.bf16 %v1662, %v1661
      %v1723 = vpack.c.bf16 %v1664, %v1663
      %v1724 = vpack.c.bf16 %v1666, %v1665
      %v1725 = vpack.c.bf16 %v1668, %v1667
      %v1726 = vpack.c.bf16 %v1670, %v1669
      %v1727 = vpack.c.bf16 %v1672, %v1671
      %v1728 = vpack.c.bf16 %v1674, %v1673
      %v1729 = vpack.c.bf16 %v1676, %v1675
      %v1730 = vpack.c.bf16 %v1678, %v1677
      %v1731 = vpack.c.bf16 %v1680, %v1679
      %v1732 = vpack.c.bf16 %v1682, %v1681
      %v1733 = vpack.c.bf16 %v1684, %v1683
      %v1734 = vpack.c.bf16 %v1686, %v1685
      %v1735 = vpack.c.bf16 %v1688, %v1687
      %v1736 = vpack.c.bf16 %v1690, %v1689
      %v1737 = vpack.c.bf16 %v1692, %v1691
      %v1738 = vpack.c.bf16 %v1694, %v1693
      %v1739 = vpack.c.bf16 %v1696, %v1695
      %v1740 = vpack.c.bf16 %v1698, %v1697
      %v1741 = vpack.c.bf16 %v1700, %v1699
      %v1742 = vpack.c.bf16 %v1702, %v1701
      %v1743 = vpack.c.bf16 %v1704, %v1703
      %v1744 = vpack.c.bf16 %v1706, %v1705
      %v1745 = vpack.c.bf16 %v1708, %v1707
      %v1746 = vpack.c.bf16 %v1710, %v1709
      %v1747 = vpack.c.bf16 %v1712, %v1711
      %v1748 = vpack.c.bf16 %v1714, %v1713
      %v1749 = vpack.c.bf16 %v1716, %v1715
      %v1750 = vpack.c.bf16 %v1718, %v1717
      %v1751 = vadd.s32 %v374, 128
      %1752 = vset.pattern.permute.xlu0 4
      %1753 = vperm.xlu0 %1752, %v309
      %v1754 = vpop.permute.xlu0 %1753
      %1755 = vset.pattern.permute.xlu0 4
      %1756 = vperm.xlu0 %1755, %v310
      %v1757 = vpop.permute.xlu0 %1756
      %1758 = vset.pattern.permute.xlu0 4
      %1759 = vperm.xlu0 %1758, %v311
      %v1760 = vpop.permute.xlu0 %1759
      %1761 = vset.pattern.permute.xlu0 4
      %1762 = vperm.xlu0 %1761, %v312
      %v1763 = vpop.permute.xlu0 %1762
      %1764 = vset.pattern.permute.xlu0 4
      %1765 = vperm.xlu0 %1764, %v313
      %v1766 = vpop.permute.xlu0 %1765
      %1767 = vset.pattern.permute.xlu0 4
      %1768 = vperm.xlu0 %1767, %v314
      %v1769 = vpop.permute.xlu0 %1768
      %1770 = vset.pattern.permute.xlu0 4
      %1771 = vperm.xlu0 %1770, %v315
      %v1772 = vpop.permute.xlu0 %1771
      %1773 = vset.pattern.permute.xlu0 4
      %1774 = vperm.xlu0 %1773, %v316
      %v1775 = vpop.permute.xlu0 %1774
      %1776 = vset.pattern.permute.xlu0 4
      %1777 = vperm.xlu0 %1776, %v317
      %v1778 = vpop.permute.xlu0 %1777
      %1779 = vset.pattern.permute.xlu0 4
      %1780 = vperm.xlu0 %1779, %v318
      %v1781 = vpop.permute.xlu0 %1780
      %1782 = vset.pattern.permute.xlu0 4
      %1783 = vperm.xlu0 %1782, %v319
      %v1784 = vpop.permute.xlu0 %1783
      %1785 = vset.pattern.permute.xlu0 4
      %1786 = vperm.xlu0 %1785, %v320
      %v1787 = vpop.permute.xlu0 %1786
      %1788 = vset.pattern.permute.xlu0 4
      %1789 = vperm.xlu0 %1788, %v321
      %v1790 = vpop.permute.xlu0 %1789
      %1791 = vset.pattern.permute.xlu0 4
      %1792 = vperm.xlu0 %1791, %v322
      %v1793 = vpop.permute.xlu0 %1792
      %1794 = vset.pattern.permute.xlu0 4
      %1795 = vperm.xlu0 %1794, %v323
      %v1796 = vpop.permute.xlu0 %1795
      %1797 = vset.pattern.permute.xlu0 4
      %1798 = vperm.xlu0 %1797, %v324
      %v1799 = vpop.permute.xlu0 %1798
      %1800 = vset.pattern.permute.xlu0 4
      %1801 = vperm.xlu0 %1800, %v325
      %v1802 = vpop.permute.xlu0 %1801
      %1803 = vset.pattern.permute.xlu0 4
      %1804 = vperm.xlu0 %1803, %v326
      %v1805 = vpop.permute.xlu0 %1804
      %1806 = vset.pattern.permute.xlu0 4
      %1807 = vperm.xlu0 %1806, %v327
      %v1808 = vpop.permute.xlu0 %1807
      %1809 = vset.pattern.permute.xlu0 4
      %1810 = vperm.xlu0 %1809, %v328
      %v1811 = vpop.permute.xlu0 %1810
      %1812 = vset.pattern.permute.xlu0 4
      %1813 = vperm.xlu0 %1812, %v329
      %v1814 = vpop.permute.xlu0 %1813
      %1815 = vset.pattern.permute.xlu0 4
      %1816 = vperm.xlu0 %1815, %v330
      %v1817 = vpop.permute.xlu0 %1816
      %1818 = vset.pattern.permute.xlu0 4
      %1819 = vperm.xlu0 %1818, %v331
      %v1820 = vpop.permute.xlu0 %1819
      %1821 = vset.pattern.permute.xlu0 4
      %1822 = vperm.xlu0 %1821, %v332
      %v1823 = vpop.permute.xlu0 %1822
      %1824 = vset.pattern.permute.xlu0 4
      %1825 = vperm.xlu0 %1824, %v333
      %v1826 = vpop.permute.xlu0 %1825
      %1827 = vset.pattern.permute.xlu0 4
      %1828 = vperm.xlu0 %1827, %v334
      %v1829 = vpop.permute.xlu0 %1828
      %1830 = vset.pattern.permute.xlu0 4
      %1831 = vperm.xlu0 %1830, %v335
      %v1832 = vpop.permute.xlu0 %1831
      %1833 = vset.pattern.permute.xlu0 4
      %1834 = vperm.xlu0 %1833, %v336
      %v1835 = vpop.permute.xlu0 %1834
      %1836 = vset.pattern.permute.xlu0 4
      %1837 = vperm.xlu0 %1836, %v337
      %v1838 = vpop.permute.xlu0 %1837
      %1839 = vset.pattern.permute.xlu0 4
      %1840 = vperm.xlu0 %1839, %v338
      %v1841 = vpop.permute.xlu0 %1840
      %1842 = vset.pattern.permute.xlu0 4
      %1843 = vperm.xlu0 %1842, %v339
      %v1844 = vpop.permute.xlu0 %1843
      %1845 = vset.pattern.permute.xlu0 4
      %1846 = vperm.xlu0 %1845, %v340
      %v1847 = vpop.permute.xlu0 %1846
      %1848 = vset.pattern.permute.xlu0 4
      %1849 = vperm.xlu0 %1848, %v341
      %v1850 = vpop.permute.xlu0 %1849
      %1851 = vset.pattern.permute.xlu0 4
      %1852 = vperm.xlu0 %1851, %v342
      %v1853 = vpop.permute.xlu0 %1852
      %1854 = vset.pattern.permute.xlu0 4
      %1855 = vperm.xlu0 %1854, %v343
      %v1856 = vpop.permute.xlu0 %1855
      %1857 = vset.pattern.permute.xlu0 4
      %1858 = vperm.xlu0 %1857, %v344
      %v1859 = vpop.permute.xlu0 %1858
      %1860 = vset.pattern.permute.xlu0 4
      %1861 = vperm.xlu0 %1860, %v345
      %v1862 = vpop.permute.xlu0 %1861
      %1863 = vset.pattern.permute.xlu0 4
      %1864 = vperm.xlu0 %1863, %v346
      %v1865 = vpop.permute.xlu0 %1864
      %1866 = vset.pattern.permute.xlu0 4
      %1867 = vperm.xlu0 %1866, %v347
      %v1868 = vpop.permute.xlu0 %1867
      %1869 = vset.pattern.permute.xlu0 4
      %1870 = vperm.xlu0 %1869, %v348
      %v1871 = vpop.permute.xlu0 %1870
      %1872 = vset.pattern.permute.xlu0 4
      %1873 = vperm.xlu0 %1872, %v349
      %v1874 = vpop.permute.xlu0 %1873
      %1875 = vset.pattern.permute.xlu0 4
      %1876 = vperm.xlu0 %1875, %v350
      %v1877 = vpop.permute.xlu0 %1876
      %1878 = vset.pattern.permute.xlu0 4
      %1879 = vperm.xlu0 %1878, %v351
      %v1880 = vpop.permute.xlu0 %1879
      %1881 = vset.pattern.permute.xlu0 4
      %1882 = vperm.xlu0 %1881, %v352
      %v1883 = vpop.permute.xlu0 %1882
      %1884 = vset.pattern.permute.xlu0 4
      %1885 = vperm.xlu0 %1884, %v353
      %v1886 = vpop.permute.xlu0 %1885
      %1887 = vset.pattern.permute.xlu0 4
      %1888 = vperm.xlu0 %1887, %v354
      %v1889 = vpop.permute.xlu0 %1888
      %1890 = vset.pattern.permute.xlu0 4
      %1891 = vperm.xlu0 %1890, %v355
      %v1892 = vpop.permute.xlu0 %1891
      %1893 = vset.pattern.permute.xlu0 4
      %1894 = vperm.xlu0 %1893, %v356
      %v1895 = vpop.permute.xlu0 %1894
      %1896 = vset.pattern.permute.xlu0 4
      %1897 = vperm.xlu0 %1896, %v357
      %v1898 = vpop.permute.xlu0 %1897
      %1899 = vset.pattern.permute.xlu0 4
      %1900 = vperm.xlu0 %1899, %v358
      %v1901 = vpop.permute.xlu0 %1900
      %1902 = vset.pattern.permute.xlu0 4
      %1903 = vperm.xlu0 %1902, %v359
      %v1904 = vpop.permute.xlu0 %1903
      %1905 = vset.pattern.permute.xlu0 4
      %1906 = vperm.xlu0 %1905, %v360
      %v1907 = vpop.permute.xlu0 %1906
      %1908 = vset.pattern.permute.xlu0 4
      %1909 = vperm.xlu0 %1908, %v361
      %v1910 = vpop.permute.xlu0 %1909
      %1911 = vset.pattern.permute.xlu0 4
      %1912 = vperm.xlu0 %1911, %v362
      %v1913 = vpop.permute.xlu0 %1912
      %1914 = vset.pattern.permute.xlu0 4
      %1915 = vperm.xlu0 %1914, %v363
      %v1916 = vpop.permute.xlu0 %1915
      %1917 = vset.pattern.permute.xlu0 4
      %1918 = vperm.xlu0 %1917, %v364
      %v1919 = vpop.permute.xlu0 %1918
      %1920 = vset.pattern.permute.xlu0 4
      %1921 = vperm.xlu0 %1920, %v365
      %v1922 = vpop.permute.xlu0 %1921
      %1923 = vset.pattern.permute.xlu0 4
      %1924 = vperm.xlu0 %1923, %v366
      %v1925 = vpop.permute.xlu0 %1924
      %1926 = vset.pattern.permute.xlu0 4
      %1927 = vperm.xlu0 %1926, %v367
      %v1928 = vpop.permute.xlu0 %1927
      %1929 = vset.pattern.permute.xlu0 4
      %1930 = vperm.xlu0 %1929, %v368
      %v1931 = vpop.permute.xlu0 %1930
      %1932 = vset.pattern.permute.xlu0 4
      %1933 = vperm.xlu0 %1932, %v369
      %v1934 = vpop.permute.xlu0 %1933
      %1935 = vset.pattern.permute.xlu0 4
      %1936 = vperm.xlu0 %1935, %v370
      %v1937 = vpop.permute.xlu0 %1936
      %1938 = vset.pattern.permute.xlu0 4
      %1939 = vperm.xlu0 %1938, %v371
      %v1940 = vpop.permute.xlu0 %1939
      %1941 = vset.pattern.permute.xlu0 4
      %1942 = vperm.xlu0 %1941, %v372
      %v1943 = vpop.permute.xlu0 %1942
      %vm1944 = vcmp.eq.s32.totalorder %v374, %v1754
      %vm1945 = vcmp.eq.s32.totalorder %v1751, %v1754
      %vm1946 = vcmp.eq.s32.totalorder %v374, %v1757
      %vm1947 = vcmp.eq.s32.totalorder %v1751, %v1757
      %vm1948 = vcmp.eq.s32.totalorder %v374, %v1760
      %vm1949 = vcmp.eq.s32.totalorder %v1751, %v1760
      %vm1950 = vcmp.eq.s32.totalorder %v374, %v1763
      %vm1951 = vcmp.eq.s32.totalorder %v1751, %v1763
      %vm1952 = vcmp.eq.s32.totalorder %v374, %v1766
      %vm1953 = vcmp.eq.s32.totalorder %v1751, %v1766
      %vm1954 = vcmp.eq.s32.totalorder %v374, %v1769
      %vm1955 = vcmp.eq.s32.totalorder %v1751, %v1769
      %vm1956 = vcmp.eq.s32.totalorder %v374, %v1772
      %vm1957 = vcmp.eq.s32.totalorder %v1751, %v1772
      %vm1958 = vcmp.eq.s32.totalorder %v374, %v1775
      %vm1959 = vcmp.eq.s32.totalorder %v1751, %v1775
      %vm1960 = vcmp.eq.s32.totalorder %v374, %v1778
      %vm1961 = vcmp.eq.s32.totalorder %v1751, %v1778
      %vm1962 = vcmp.eq.s32.totalorder %v374, %v1781
      %vm1963 = vcmp.eq.s32.totalorder %v1751, %v1781
      %vm1964 = vcmp.eq.s32.totalorder %v374, %v1784
      %vm1965 = vcmp.eq.s32.totalorder %v1751, %v1784
      %vm1966 = vcmp.eq.s32.totalorder %v374, %v1787
      %vm1967 = vcmp.eq.s32.totalorder %v1751, %v1787
      %vm1968 = vcmp.eq.s32.totalorder %v374, %v1790
      %vm1969 = vcmp.eq.s32.totalorder %v1751, %v1790
      %vm1970 = vcmp.eq.s32.totalorder %v374, %v1793
      %vm1971 = vcmp.eq.s32.totalorder %v1751, %v1793
      %vm1972 = vcmp.eq.s32.totalorder %v374, %v1796
      %vm1973 = vcmp.eq.s32.totalorder %v1751, %v1796
      %vm1974 = vcmp.eq.s32.totalorder %v374, %v1799
      %vm1975 = vcmp.eq.s32.totalorder %v1751, %v1799
      %vm1976 = vcmp.eq.s32.totalorder %v374, %v1802
      %vm1977 = vcmp.eq.s32.totalorder %v1751, %v1802
      %vm1978 = vcmp.eq.s32.totalorder %v374, %v1805
      %vm1979 = vcmp.eq.s32.totalorder %v1751, %v1805
      %vm1980 = vcmp.eq.s32.totalorder %v374, %v1808
      %vm1981 = vcmp.eq.s32.totalorder %v1751, %v1808
      %vm1982 = vcmp.eq.s32.totalorder %v374, %v1811
      %vm1983 = vcmp.eq.s32.totalorder %v1751, %v1811
      %vm1984 = vcmp.eq.s32.totalorder %v374, %v1814
      %vm1985 = vcmp.eq.s32.totalorder %v1751, %v1814
      %vm1986 = vcmp.eq.s32.totalorder %v374, %v1817
      %vm1987 = vcmp.eq.s32.totalorder %v1751, %v1817
      %vm1988 = vcmp.eq.s32.totalorder %v374, %v1820
      %vm1989 = vcmp.eq.s32.totalorder %v1751, %v1820
      %vm1990 = vcmp.eq.s32.totalorder %v374, %v1823
      %vm1991 = vcmp.eq.s32.totalorder %v1751, %v1823
      %vm1992 = vcmp.eq.s32.totalorder %v374, %v1826
      %vm1993 = vcmp.eq.s32.totalorder %v1751, %v1826
      %vm1994 = vcmp.eq.s32.totalorder %v374, %v1829
      %vm1995 = vcmp.eq.s32.totalorder %v1751, %v1829
      %vm1996 = vcmp.eq.s32.totalorder %v374, %v1832
      %vm1997 = vcmp.eq.s32.totalorder %v1751, %v1832
      %vm1998 = vcmp.eq.s32.totalorder %v374, %v1835
      %vm1999 = vcmp.eq.s32.totalorder %v1751, %v1835
      %vm2000 = vcmp.eq.s32.totalorder %v374, %v1838
      %vm2001 = vcmp.eq.s32.totalorder %v1751, %v1838
      %vm2002 = vcmp.eq.s32.totalorder %v374, %v1841
      %vm2003 = vcmp.eq.s32.totalorder %v1751, %v1841
      %vm2004 = vcmp.eq.s32.totalorder %v374, %v1844
      %vm2005 = vcmp.eq.s32.totalorder %v1751, %v1844
      %vm2006 = vcmp.eq.s32.totalorder %v374, %v1847
      %vm2007 = vcmp.eq.s32.totalorder %v1751, %v1847
      %vm2008 = vcmp.eq.s32.totalorder %v374, %v1850
      %vm2009 = vcmp.eq.s32.totalorder %v1751, %v1850
      %vm2010 = vcmp.eq.s32.totalorder %v374, %v1853
      %vm2011 = vcmp.eq.s32.totalorder %v1751, %v1853
      %vm2012 = vcmp.eq.s32.totalorder %v374, %v1856
      %vm2013 = vcmp.eq.s32.totalorder %v1751, %v1856
      %vm2014 = vcmp.eq.s32.totalorder %v374, %v1859
      %vm2015 = vcmp.eq.s32.totalorder %v1751, %v1859
      %vm2016 = vcmp.eq.s32.totalorder %v374, %v1862
      %vm2017 = vcmp.eq.s32.totalorder %v1751, %v1862
      %vm2018 = vcmp.eq.s32.totalorder %v374, %v1865
      %vm2019 = vcmp.eq.s32.totalorder %v1751, %v1865
      %vm2020 = vcmp.eq.s32.totalorder %v374, %v1868
      %vm2021 = vcmp.eq.s32.totalorder %v1751, %v1868
      %vm2022 = vcmp.eq.s32.totalorder %v374, %v1871
      %vm2023 = vcmp.eq.s32.totalorder %v1751, %v1871
      %vm2024 = vcmp.eq.s32.totalorder %v374, %v1874
      %vm2025 = vcmp.eq.s32.totalorder %v1751, %v1874
      %vm2026 = vcmp.eq.s32.totalorder %v374, %v1877
      %vm2027 = vcmp.eq.s32.totalorder %v1751, %v1877
      %vm2028 = vcmp.eq.s32.totalorder %v374, %v1880
      %vm2029 = vcmp.eq.s32.totalorder %v1751, %v1880
      %vm2030 = vcmp.eq.s32.totalorder %v374, %v1883
      %vm2031 = vcmp.eq.s32.totalorder %v1751, %v1883
      %vm2032 = vcmp.eq.s32.totalorder %v374, %v1886
      %vm2033 = vcmp.eq.s32.totalorder %v1751, %v1886
      %vm2034 = vcmp.eq.s32.totalorder %v374, %v1889
      %vm2035 = vcmp.eq.s32.totalorder %v1751, %v1889
      %vm2036 = vcmp.eq.s32.totalorder %v374, %v1892
      %vm2037 = vcmp.eq.s32.totalorder %v1751, %v1892
      %vm2038 = vcmp.eq.s32.totalorder %v374, %v1895
      %vm2039 = vcmp.eq.s32.totalorder %v1751, %v1895
      %vm2040 = vcmp.eq.s32.totalorder %v374, %v1898
      %vm2041 = vcmp.eq.s32.totalorder %v1751, %v1898
      %vm2042 = vcmp.eq.s32.totalorder %v374, %v1901
      %vm2043 = vcmp.eq.s32.totalorder %v1751, %v1901
      %vm2044 = vcmp.eq.s32.totalorder %v374, %v1904
      %vm2045 = vcmp.eq.s32.totalorder %v1751, %v1904
      %vm2046 = vcmp.eq.s32.totalorder %v374, %v1907
      %vm2047 = vcmp.eq.s32.totalorder %v1751, %v1907
      %vm2048 = vcmp.eq.s32.totalorder %v374, %v1910
      %vm2049 = vcmp.eq.s32.totalorder %v1751, %v1910
      %vm2050 = vcmp.eq.s32.totalorder %v374, %v1913
      %vm2051 = vcmp.eq.s32.totalorder %v1751, %v1913
      %vm2052 = vcmp.eq.s32.totalorder %v374, %v1916
      %vm2053 = vcmp.eq.s32.totalorder %v1751, %v1916
      %vm2054 = vcmp.eq.s32.totalorder %v374, %v1919
      %vm2055 = vcmp.eq.s32.totalorder %v1751, %v1919
      %vm2056 = vcmp.eq.s32.totalorder %v374, %v1922
      %vm2057 = vcmp.eq.s32.totalorder %v1751, %v1922
      %vm2058 = vcmp.eq.s32.totalorder %v374, %v1925
      %vm2059 = vcmp.eq.s32.totalorder %v1751, %v1925
      %vm2060 = vcmp.eq.s32.totalorder %v374, %v1928
      %vm2061 = vcmp.eq.s32.totalorder %v1751, %v1928
      %vm2062 = vcmp.eq.s32.totalorder %v374, %v1931
      %vm2063 = vcmp.eq.s32.totalorder %v1751, %v1931
      %vm2064 = vcmp.eq.s32.totalorder %v374, %v1934
      %vm2065 = vcmp.eq.s32.totalorder %v1751, %v1934
      %vm2066 = vcmp.eq.s32.totalorder %v374, %v1937
      %vm2067 = vcmp.eq.s32.totalorder %v1751, %v1937
      %vm2068 = vcmp.eq.s32.totalorder %v374, %v1940
      %vm2069 = vcmp.eq.s32.totalorder %v1751, %v1940
      %vm2070 = vcmp.eq.s32.totalorder %v374, %v1943
      %vm2071 = vcmp.eq.s32.totalorder %v1751, %v1943
      %v2072 = vsel %vm1944, 1, 0
      %v2073 = vsel %vm1945, 1, 0
      %v2074 = vsel %vm1946, 1, 0
      %v2075 = vsel %vm1947, 1, 0
      %v2076 = vsel %vm1948, 1, 0
      %v2077 = vsel %vm1949, 1, 0
      %v2078 = vsel %vm1950, 1, 0
      %v2079 = vsel %vm1951, 1, 0
      %v2080 = vsel %vm1952, 1, 0
      %v2081 = vsel %vm1953, 1, 0
      %v2082 = vsel %vm1954, 1, 0
      %v2083 = vsel %vm1955, 1, 0
      %v2084 = vsel %vm1956, 1, 0
      %v2085 = vsel %vm1957, 1, 0
      %v2086 = vsel %vm1958, 1, 0
      %v2087 = vsel %vm1959, 1, 0
      %v2088 = vsel %vm1960, 1, 0
      %v2089 = vsel %vm1961, 1, 0
      %v2090 = vsel %vm1962, 1, 0
      %v2091 = vsel %vm1963, 1, 0
      %v2092 = vsel %vm1964, 1, 0
      %v2093 = vsel %vm1965, 1, 0
      %v2094 = vsel %vm1966, 1, 0
      %v2095 = vsel %vm1967, 1, 0
      %v2096 = vsel %vm1968, 1, 0
      %v2097 = vsel %vm1969, 1, 0
      %v2098 = vsel %vm1970, 1, 0
      %v2099 = vsel %vm1971, 1, 0
      %v2100 = vsel %vm1972, 1, 0
      %v2101 = vsel %vm1973, 1, 0
      %v2102 = vsel %vm1974, 1, 0
      %v2103 = vsel %vm1975, 1, 0
      %v2104 = vsel %vm1976, 1, 0
      %v2105 = vsel %vm1977, 1, 0
      %v2106 = vsel %vm1978, 1, 0
      %v2107 = vsel %vm1979, 1, 0
      %v2108 = vsel %vm1980, 1, 0
      %v2109 = vsel %vm1981, 1, 0
      %v2110 = vsel %vm1982, 1, 0
      %v2111 = vsel %vm1983, 1, 0
      %v2112 = vsel %vm1984, 1, 0
      %v2113 = vsel %vm1985, 1, 0
      %v2114 = vsel %vm1986, 1, 0
      %v2115 = vsel %vm1987, 1, 0
      %v2116 = vsel %vm1988, 1, 0
      %v2117 = vsel %vm1989, 1, 0
      %v2118 = vsel %vm1990, 1, 0
      %v2119 = vsel %vm1991, 1, 0
      %v2120 = vsel %vm1992, 1, 0
      %v2121 = vsel %vm1993, 1, 0
      %v2122 = vsel %vm1994, 1, 0
      %v2123 = vsel %vm1995, 1, 0
      %v2124 = vsel %vm1996, 1, 0
      %v2125 = vsel %vm1997, 1, 0
      %v2126 = vsel %vm1998, 1, 0
      %v2127 = vsel %vm1999, 1, 0
      %v2128 = vsel %vm2000, 1, 0
      %v2129 = vsel %vm2001, 1, 0
      %v2130 = vsel %vm2002, 1, 0
      %v2131 = vsel %vm2003, 1, 0
      %v2132 = vsel %vm2004, 1, 0
      %v2133 = vsel %vm2005, 1, 0
      %v2134 = vsel %vm2006, 1, 0
      %v2135 = vsel %vm2007, 1, 0
      %v2136 = vsel %vm2008, 1, 0
      %v2137 = vsel %vm2009, 1, 0
      %v2138 = vsel %vm2010, 1, 0
      %v2139 = vsel %vm2011, 1, 0
      %v2140 = vsel %vm2012, 1, 0
      %v2141 = vsel %vm2013, 1, 0
      %v2142 = vsel %vm2014, 1, 0
      %v2143 = vsel %vm2015, 1, 0
      %v2144 = vsel %vm2016, 1, 0
      %v2145 = vsel %vm2017, 1, 0
      %v2146 = vsel %vm2018, 1, 0
      %v2147 = vsel %vm2019, 1, 0
      %v2148 = vsel %vm2020, 1, 0
      %v2149 = vsel %vm2021, 1, 0
      %v2150 = vsel %vm2022, 1, 0
      %v2151 = vsel %vm2023, 1, 0
      %v2152 = vsel %vm2024, 1, 0
      %v2153 = vsel %vm2025, 1, 0
      %v2154 = vsel %vm2026, 1, 0
      %v2155 = vsel %vm2027, 1, 0
      %v2156 = vsel %vm2028, 1, 0
      %v2157 = vsel %vm2029, 1, 0
      %v2158 = vsel %vm2030, 1, 0
      %v2159 = vsel %vm2031, 1, 0
      %v2160 = vsel %vm2032, 1, 0
      %v2161 = vsel %vm2033, 1, 0
      %v2162 = vsel %vm2034, 1, 0
      %v2163 = vsel %vm2035, 1, 0
      %v2164 = vsel %vm2036, 1, 0
      %v2165 = vsel %vm2037, 1, 0
      %v2166 = vsel %vm2038, 1, 0
      %v2167 = vsel %vm2039, 1, 0
      %v2168 = vsel %vm2040, 1, 0
      %v2169 = vsel %vm2041, 1, 0
      %v2170 = vsel %vm2042, 1, 0
      %v2171 = vsel %vm2043, 1, 0
      %v2172 = vsel %vm2044, 1, 0
      %v2173 = vsel %vm2045, 1, 0
      %v2174 = vsel %vm2046, 1, 0
      %v2175 = vsel %vm2047, 1, 0
      %v2176 = vsel %vm2048, 1, 0
      %v2177 = vsel %vm2049, 1, 0
      %v2178 = vsel %vm2050, 1, 0
      %v2179 = vsel %vm2051, 1, 0
      %v2180 = vsel %vm2052, 1, 0
      %v2181 = vsel %vm2053, 1, 0
      %v2182 = vsel %vm2054, 1, 0
      %v2183 = vsel %vm2055, 1, 0
      %v2184 = vsel %vm2056, 1, 0
      %v2185 = vsel %vm2057, 1, 0
      %v2186 = vsel %vm2058, 1, 0
      %v2187 = vsel %vm2059, 1, 0
      %v2188 = vsel %vm2060, 1, 0
      %v2189 = vsel %vm2061, 1, 0
      %v2190 = vsel %vm2062, 1, 0
      %v2191 = vsel %vm2063, 1, 0
      %v2192 = vsel %vm2064, 1, 0
      %v2193 = vsel %vm2065, 1, 0
      %v2194 = vsel %vm2066, 1, 0
      %v2195 = vsel %vm2067, 1, 0
      %v2196 = vsel %vm2068, 1, 0
      %v2197 = vsel %vm2069, 1, 0
      %v2198 = vsel %vm2070, 1, 0
      %v2199 = vsel %vm2071, 1, 0
      %v2200 = vcvt.s32.f32 %v2072
      %v2201 = vcvt.s32.f32 %v2073
      %v2202 = vcvt.s32.f32 %v2074
      %v2203 = vcvt.s32.f32 %v2075
      %v2204 = vcvt.s32.f32 %v2076
      %v2205 = vcvt.s32.f32 %v2077
      %v2206 = vcvt.s32.f32 %v2078
      %v2207 = vcvt.s32.f32 %v2079
      %v2208 = vcvt.s32.f32 %v2080
      %v2209 = vcvt.s32.f32 %v2081
      %v2210 = vcvt.s32.f32 %v2082
      %v2211 = vcvt.s32.f32 %v2083
      %v2212 = vcvt.s32.f32 %v2084
      %v2213 = vcvt.s32.f32 %v2085
      %v2214 = vcvt.s32.f32 %v2086
      %v2215 = vcvt.s32.f32 %v2087
      %v2216 = vcvt.s32.f32 %v2088
      %v2217 = vcvt.s32.f32 %v2089
      %v2218 = vcvt.s32.f32 %v2090
      %v2219 = vcvt.s32.f32 %v2091
      %v2220 = vcvt.s32.f32 %v2092
      %v2221 = vcvt.s32.f32 %v2093
      %v2222 = vcvt.s32.f32 %v2094
      %v2223 = vcvt.s32.f32 %v2095
      %v2224 = vcvt.s32.f32 %v2096
      %v2225 = vcvt.s32.f32 %v2097
      %v2226 = vcvt.s32.f32 %v2098
      %v2227 = vcvt.s32.f32 %v2099
      %v2228 = vcvt.s32.f32 %v2100
      %v2229 = vcvt.s32.f32 %v2101
      %v2230 = vcvt.s32.f32 %v2102
      %v2231 = vcvt.s32.f32 %v2103
      %v2232 = vcvt.s32.f32 %v2104
      %v2233 = vcvt.s32.f32 %v2105
      %v2234 = vcvt.s32.f32 %v2106
      %v2235 = vcvt.s32.f32 %v2107
      %v2236 = vcvt.s32.f32 %v2108
      %v2237 = vcvt.s32.f32 %v2109
      %v2238 = vcvt.s32.f32 %v2110
      %v2239 = vcvt.s32.f32 %v2111
      %v2240 = vcvt.s32.f32 %v2112
      %v2241 = vcvt.s32.f32 %v2113
      %v2242 = vcvt.s32.f32 %v2114
      %v2243 = vcvt.s32.f32 %v2115
      %v2244 = vcvt.s32.f32 %v2116
      %v2245 = vcvt.s32.f32 %v2117
      %v2246 = vcvt.s32.f32 %v2118
      %v2247 = vcvt.s32.f32 %v2119
      %v2248 = vcvt.s32.f32 %v2120
      %v2249 = vcvt.s32.f32 %v2121
      %v2250 = vcvt.s32.f32 %v2122
      %v2251 = vcvt.s32.f32 %v2123
      %v2252 = vcvt.s32.f32 %v2124
      %v2253 = vcvt.s32.f32 %v2125
      %v2254 = vcvt.s32.f32 %v2126
      %v2255 = vcvt.s32.f32 %v2127
      %v2256 = vcvt.s32.f32 %v2128
      %v2257 = vcvt.s32.f32 %v2129
      %v2258 = vcvt.s32.f32 %v2130
      %v2259 = vcvt.s32.f32 %v2131
      %v2260 = vcvt.s32.f32 %v2132
      %v2261 = vcvt.s32.f32 %v2133
      %v2262 = vcvt.s32.f32 %v2134
      %v2263 = vcvt.s32.f32 %v2135
      %v2264 = vcvt.s32.f32 %v2136
      %v2265 = vcvt.s32.f32 %v2137
      %v2266 = vcvt.s32.f32 %v2138
      %v2267 = vcvt.s32.f32 %v2139
      %v2268 = vcvt.s32.f32 %v2140
      %v2269 = vcvt.s32.f32 %v2141
      %v2270 = vcvt.s32.f32 %v2142
      %v2271 = vcvt.s32.f32 %v2143
      %v2272 = vcvt.s32.f32 %v2144
      %v2273 = vcvt.s32.f32 %v2145
      %v2274 = vcvt.s32.f32 %v2146
      %v2275 = vcvt.s32.f32 %v2147
      %v2276 = vcvt.s32.f32 %v2148
      %v2277 = vcvt.s32.f32 %v2149
      %v2278 = vcvt.s32.f32 %v2150
      %v2279 = vcvt.s32.f32 %v2151
      %v2280 = vcvt.s32.f32 %v2152
      %v2281 = vcvt.s32.f32 %v2153
      %v2282 = vcvt.s32.f32 %v2154
      %v2283 = vcvt.s32.f32 %v2155
      %v2284 = vcvt.s32.f32 %v2156
      %v2285 = vcvt.s32.f32 %v2157
      %v2286 = vcvt.s32.f32 %v2158
      %v2287 = vcvt.s32.f32 %v2159
      %v2288 = vcvt.s32.f32 %v2160
      %v2289 = vcvt.s32.f32 %v2161
      %v2290 = vcvt.s32.f32 %v2162
      %v2291 = vcvt.s32.f32 %v2163
      %v2292 = vcvt.s32.f32 %v2164
      %v2293 = vcvt.s32.f32 %v2165
      %v2294 = vcvt.s32.f32 %v2166
      %v2295 = vcvt.s32.f32 %v2167
      %v2296 = vcvt.s32.f32 %v2168
      %v2297 = vcvt.s32.f32 %v2169
      %v2298 = vcvt.s32.f32 %v2170
      %v2299 = vcvt.s32.f32 %v2171
      %v2300 = vcvt.s32.f32 %v2172
      %v2301 = vcvt.s32.f32 %v2173
      %v2302 = vcvt.s32.f32 %v2174
      %v2303 = vcvt.s32.f32 %v2175
      %v2304 = vcvt.s32.f32 %v2176
      %v2305 = vcvt.s32.f32 %v2177
      %v2306 = vcvt.s32.f32 %v2178
      %v2307 = vcvt.s32.f32 %v2179
      %v2308 = vcvt.s32.f32 %v2180
      %v2309 = vcvt.s32.f32 %v2181
      %v2310 = vcvt.s32.f32 %v2182
      %v2311 = vcvt.s32.f32 %v2183
      %v2312 = vcvt.s32.f32 %v2184
      %v2313 = vcvt.s32.f32 %v2185
      %v2314 = vcvt.s32.f32 %v2186
      %v2315 = vcvt.s32.f32 %v2187
      %v2316 = vcvt.s32.f32 %v2188
      %v2317 = vcvt.s32.f32 %v2189
      %v2318 = vcvt.s32.f32 %v2190
      %v2319 = vcvt.s32.f32 %v2191
      %v2320 = vcvt.s32.f32 %v2192
      %v2321 = vcvt.s32.f32 %v2193
      %v2322 = vcvt.s32.f32 %v2194
      %v2323 = vcvt.s32.f32 %v2195
      %v2324 = vcvt.s32.f32 %v2196
      %v2325 = vcvt.s32.f32 %v2197
      %v2326 = vcvt.s32.f32 %v2198
      %v2327 = vcvt.s32.f32 %v2199
      %v2328 = vpack.c.bf16 %v2202, %v2200
      %v2329 = vpack.c.bf16 %v2203, %v2201
      %v2330 = vpack.c.bf16 %v2206, %v2204
      %v2331 = vpack.c.bf16 %v2207, %v2205
      %v2332 = vpack.c.bf16 %v2210, %v2208
      %v2333 = vpack.c.bf16 %v2211, %v2209
      %v2334 = vpack.c.bf16 %v2214, %v2212
      %v2335 = vpack.c.bf16 %v2215, %v2213
      %v2336 = vpack.c.bf16 %v2218, %v2216
      %v2337 = vpack.c.bf16 %v2219, %v2217
      %v2338 = vpack.c.bf16 %v2222, %v2220
      %v2339 = vpack.c.bf16 %v2223, %v2221
      %v2340 = vpack.c.bf16 %v2226, %v2224
      %v2341 = vpack.c.bf16 %v2227, %v2225
      %v2342 = vpack.c.bf16 %v2230, %v2228
      %v2343 = vpack.c.bf16 %v2231, %v2229
      %v2344 = vpack.c.bf16 %v2234, %v2232
      %v2345 = vpack.c.bf16 %v2235, %v2233
      %v2346 = vpack.c.bf16 %v2238, %v2236
      %v2347 = vpack.c.bf16 %v2239, %v2237
      %v2348 = vpack.c.bf16 %v2242, %v2240
      %v2349 = vpack.c.bf16 %v2243, %v2241
      %v2350 = vpack.c.bf16 %v2246, %v2244
      %v2351 = vpack.c.bf16 %v2247, %v2245
      %v2352 = vpack.c.bf16 %v2250, %v2248
      %v2353 = vpack.c.bf16 %v2251, %v2249
      %v2354 = vpack.c.bf16 %v2254, %v2252
      %v2355 = vpack.c.bf16 %v2255, %v2253
      %v2356 = vpack.c.bf16 %v2258, %v2256
      %v2357 = vpack.c.bf16 %v2259, %v2257
      %v2358 = vpack.c.bf16 %v2262, %v2260
      %v2359 = vpack.c.bf16 %v2263, %v2261
      %v2360 = vpack.c.bf16 %v2266, %v2264
      %v2361 = vpack.c.bf16 %v2267, %v2265
      %v2362 = vpack.c.bf16 %v2270, %v2268
      %v2363 = vpack.c.bf16 %v2271, %v2269
      %v2364 = vpack.c.bf16 %v2274, %v2272
      %v2365 = vpack.c.bf16 %v2275, %v2273
      %v2366 = vpack.c.bf16 %v2278, %v2276
      %v2367 = vpack.c.bf16 %v2279, %v2277
      %v2368 = vpack.c.bf16 %v2282, %v2280
      %v2369 = vpack.c.bf16 %v2283, %v2281
      %v2370 = vpack.c.bf16 %v2286, %v2284
      %v2371 = vpack.c.bf16 %v2287, %v2285
      %v2372 = vpack.c.bf16 %v2290, %v2288
      %v2373 = vpack.c.bf16 %v2291, %v2289
      %v2374 = vpack.c.bf16 %v2294, %v2292
      %v2375 = vpack.c.bf16 %v2295, %v2293
      %v2376 = vpack.c.bf16 %v2298, %v2296
      %v2377 = vpack.c.bf16 %v2299, %v2297
      %v2378 = vpack.c.bf16 %v2302, %v2300
      %v2379 = vpack.c.bf16 %v2303, %v2301
      %v2380 = vpack.c.bf16 %v2306, %v2304
      %v2381 = vpack.c.bf16 %v2307, %v2305
      %v2382 = vpack.c.bf16 %v2310, %v2308
      %v2383 = vpack.c.bf16 %v2311, %v2309
      %v2384 = vpack.c.bf16 %v2314, %v2312
      %v2385 = vpack.c.bf16 %v2315, %v2313
      %v2386 = vpack.c.bf16 %v2318, %v2316
      %v2387 = vpack.c.bf16 %v2319, %v2317
      %v2388 = vpack.c.bf16 %v2322, %v2320
      %v2389 = vpack.c.bf16 %v2323, %v2321
      %v2390 = vpack.c.bf16 %v2326, %v2324
      %v2391 = vpack.c.bf16 %v2327, %v2325
      %v2392 = vld [vmem:[%s1] sm:$0xf]
      %v2393 = vld [vmem:[%s1 + $0x4] sm:$0xf]
      %v2394 = vld [vmem:[%s1 + $0x8] sm:$0xf]
      %v2395 = vld [vmem:[%s1 + $0xc] sm:$0xf]
      %v2396 = vld [vmem:[%s1 + $0x10] sm:$0xf]
      %v2397 = vld [vmem:[%s1 + $0x14] sm:$0xf]
      %v2398 = vld [vmem:[%s1 + $0x18] sm:$0xf]
      %v2399 = vld [vmem:[%s1 + $0x1c] sm:$0xf]
      %v2400 = vld [vmem:[%s1 + $0x20] sm:$0xf]
      %v2401 = vld [vmem:[%s1 + $0x24] sm:$0xf]
      %v2402 = vld [vmem:[%s1 + $0x28] sm:$0xf]
      %v2403 = vld [vmem:[%s1 + $0x2c] sm:$0xf]
      %v2404 = vld [vmem:[%s1 + $0x30] sm:$0xf]
      %v2405 = vld [vmem:[%s1 + $0x34] sm:$0xf]
      %v2406 = vld [vmem:[%s1 + $0x38] sm:$0xf]
      %v2407 = vld [vmem:[%s1 + $0x3c] sm:$0xf]
      %s2408 = scalar_lea.vmem %s1, 64
      %v2409 = vld [vmem:[%s2408] sm:$0xf]
      %v2410 = vld [vmem:[%s2408 + $0x4] sm:$0xf]
      %v2411 = vld [vmem:[%s2408 + $0x8] sm:$0xf]
      %v2412 = vld [vmem:[%s2408 + $0xc] sm:$0xf]
      %v2413 = vld [vmem:[%s2408 + $0x10] sm:$0xf]
      %v2414 = vld [vmem:[%s2408 + $0x14] sm:$0xf]
      %v2415 = vld [vmem:[%s2408 + $0x18] sm:$0xf]
      %v2416 = vld [vmem:[%s2408 + $0x1c] sm:$0xf]
      %v2417 = vld [vmem:[%s2408 + $0x20] sm:$0xf]
      %v2418 = vld [vmem:[%s2408 + $0x24] sm:$0xf]
      %v2419 = vld [vmem:[%s2408 + $0x28] sm:$0xf]
      %v2420 = vld [vmem:[%s2408 + $0x2c] sm:$0xf]
      %v2421 = vld [vmem:[%s2408 + $0x30] sm:$0xf]
      %v2422 = vld [vmem:[%s2408 + $0x34] sm:$0xf]
      %v2423 = vld [vmem:[%s2408 + $0x38] sm:$0xf]
      %v2424 = vld [vmem:[%s2408 + $0x3c] sm:$0xf]
      %v2441 = vunpack.c.l.b16 %v2409
      %v2442 = vunpack.c.l.b16 %v2410
      %v2443 = vunpack.c.l.b16 %v2411
      %v2444 = vunpack.c.l.b16 %v2412
      %v2445 = vunpack.c.l.b16 %v2413
      %v2446 = vunpack.c.l.b16 %v2414
      %v2447 = vunpack.c.l.b16 %v2415
      %v2448 = vunpack.c.l.b16 %v2416
      %v2449 = vunpack.c.l.b16 %v2417
      %v2450 = vunpack.c.l.b16 %v2418
      %v2451 = vunpack.c.l.b16 %v2419
      %v2452 = vunpack.c.l.b16 %v2420
      %v2453 = vunpack.c.l.b16 %v2421
      %v2454 = vunpack.c.l.b16 %v2422
      %v2455 = vunpack.c.l.b16 %v2423
      %v2456 = vunpack.c.l.b16 %v2424
      %v2457 = vpack.c.b16 %v2442, %v2441
      %v2458 = vpack.c.b16 %v2444, %v2443
      %v2459 = vpack.c.b16 %v2446, %v2445
      %v2460 = vpack.c.b16 %v2448, %v2447
      %v2461 = vpack.c.b16 %v2450, %v2449
      %v2462 = vpack.c.b16 %v2452, %v2451
      %v2463 = vpack.c.b16 %v2454, %v2453
      %v2464 = vpack.c.b16 %v2456, %v2455
      %2473 = vmatpush.bf16.msra.mxu0 %v2464
      %2474 = vmatpush.bf16.msra.mxu0 %v2463
      %2475 = vmatpush.bf16.msra.mxu0 %v2462
      %2476 = vmatpush.bf16.msra.mxu0 %v2461
      %2477 = vmatpush.bf16.msra.mxu0 %v2460
      %2478 = vmatpush.bf16.msra.mxu0 %v2459
      %2479 = vmatpush.bf16.msra.mxu0 %v2458
      %2480 = vmatpush.bf16.msra.mxu0 %v2457
      %2481 = vmatmul.bf16.gmra.mxu0 %v1719
      %v2482 = vpop.f32.mrf.mxu0
      %v2483 = vadd.f32 0.0, %v2482
      %v2484 = vpop.f32.mrf.mxu0
      %v2485 = vadd.f32 0.0, %v2484
      %2486 = vmatmul.bf16.gmra.mxu0 %v1720
      %v2487 = vpop.f32.mrf.mxu0
      %v2488 = vadd.f32 0.0, %v2487
      %v2489 = vpop.f32.mrf.mxu0
      %v2490 = vadd.f32 0.0, %v2489
      %2491 = vmatmul.bf16.gmra.mxu0 %v1721
      %v2492 = vpop.f32.mrf.mxu0
      %v2493 = vadd.f32 0.0, %v2492
      %v2494 = vpop.f32.mrf.mxu0
      %v2495 = vadd.f32 0.0, %v2494
      %2496 = vmatmul.bf16.gmra.mxu0 %v1722
      %v2497 = vpop.f32.mrf.mxu0
      %v2498 = vadd.f32 0.0, %v2497
      %v2499 = vpop.f32.mrf.mxu0
      %v2500 = vadd.f32 0.0, %v2499
      %2501 = vmatmul.bf16.gmra.mxu0 %v1723
      %v2502 = vpop.f32.mrf.mxu0
      %v2503 = vadd.f32 0.0, %v2502
      %v2504 = vpop.f32.mrf.mxu0
      %v2505 = vadd.f32 0.0, %v2504
      %2506 = vmatmul.bf16.gmra.mxu0 %v1724
      %v2507 = vpop.f32.mrf.mxu0
      %v2508 = vadd.f32 0.0, %v2507
      %v2509 = vpop.f32.mrf.mxu0
      %v2510 = vadd.f32 0.0, %v2509
      %2511 = vmatmul.bf16.gmra.mxu0 %v1725
      %v2512 = vpop.f32.mrf.mxu0
      %v2513 = vadd.f32 0.0, %v2512
      %v2514 = vpop.f32.mrf.mxu0
      %v2515 = vadd.f32 0.0, %v2514
      %2516 = vmatmul.bf16.gmra.mxu0 %v1726
      %v2517 = vpop.f32.mrf.mxu0
      %v2518 = vadd.f32 0.0, %v2517
      %v2519 = vpop.f32.mrf.mxu0
      %v2520 = vadd.f32 0.0, %v2519
      %2521 = vmatmul.bf16.gmra.mxu0 %v1727
      %v2522 = vpop.f32.mrf.mxu0
      %v2523 = vadd.f32 0.0, %v2522
      %v2524 = vpop.f32.mrf.mxu0
      %v2525 = vadd.f32 0.0, %v2524
      %2526 = vmatmul.bf16.gmra.mxu0 %v1728
      %v2527 = vpop.f32.mrf.mxu0
      %v2528 = vadd.f32 0.0, %v2527
      %v2529 = vpop.f32.mrf.mxu0
      %v2530 = vadd.f32 0.0, %v2529
      %2531 = vmatmul.bf16.gmra.mxu0 %v1729
      %v2532 = vpop.f32.mrf.mxu0
      %v2533 = vadd.f32 0.0, %v2532
      %v2534 = vpop.f32.mrf.mxu0
      %v2535 = vadd.f32 0.0, %v2534
      %2536 = vmatmul.bf16.gmra.mxu0 %v1730
      %v2537 = vpop.f32.mrf.mxu0
      %v2538 = vadd.f32 0.0, %v2537
      %v2539 = vpop.f32.mrf.mxu0
      %v2540 = vadd.f32 0.0, %v2539
      %2541 = vmatmul.bf16.gmra.mxu0 %v1731
      %v2542 = vpop.f32.mrf.mxu0
      %v2543 = vadd.f32 0.0, %v2542
      %v2544 = vpop.f32.mrf.mxu0
      %v2545 = vadd.f32 0.0, %v2544
      %2546 = vmatmul.bf16.gmra.mxu0 %v1732
      %v2547 = vpop.f32.mrf.mxu0
      %v2548 = vadd.f32 0.0, %v2547
      %v2549 = vpop.f32.mrf.mxu0
      %v2550 = vadd.f32 0.0, %v2549
      %2551 = vmatmul.bf16.gmra.mxu0 %v1733
      %v2552 = vpop.f32.mrf.mxu0
      %v2553 = vadd.f32 0.0, %v2552
      %v2554 = vpop.f32.mrf.mxu0
      %v2555 = vadd.f32 0.0, %v2554
      %2556 = vmatmul.bf16.gmra.mxu0 %v1734
      %v2557 = vpop.f32.mrf.mxu0
      %v2558 = vadd.f32 0.0, %v2557
      %v2559 = vpop.f32.mrf.mxu0
      %v2560 = vadd.f32 0.0, %v2559
      %2561 = vmatmul.bf16.gmra.mxu0 %v1735
      %v2562 = vpop.f32.mrf.mxu0
      %v2563 = vadd.f32 0.0, %v2562
      %v2564 = vpop.f32.mrf.mxu0
      %v2565 = vadd.f32 0.0, %v2564
      %2566 = vmatmul.bf16.gmra.mxu0 %v1736
      %v2567 = vpop.f32.mrf.mxu0
      %v2568 = vadd.f32 0.0, %v2567
      %v2569 = vpop.f32.mrf.mxu0
      %v2570 = vadd.f32 0.0, %v2569
      %2571 = vmatmul.bf16.gmra.mxu0 %v1737
      %v2572 = vpop.f32.mrf.mxu0
      %v2573 = vadd.f32 0.0, %v2572
      %v2574 = vpop.f32.mrf.mxu0
      %v2575 = vadd.f32 0.0, %v2574
      %2576 = vmatmul.bf16.gmra.mxu0 %v1738
      %v2577 = vpop.f32.mrf.mxu0
      %v2578 = vadd.f32 0.0, %v2577
      %v2579 = vpop.f32.mrf.mxu0
      %v2580 = vadd.f32 0.0, %v2579
      %2581 = vmatmul.bf16.gmra.mxu0 %v1739
      %v2582 = vpop.f32.mrf.mxu0
      %v2583 = vadd.f32 0.0, %v2582
      %v2584 = vpop.f32.mrf.mxu0
      %v2585 = vadd.f32 0.0, %v2584
      %2586 = vmatmul.bf16.gmra.mxu0 %v1740
      %v2587 = vpop.f32.mrf.mxu0
      %v2588 = vadd.f32 0.0, %v2587
      %v2589 = vpop.f32.mrf.mxu0
      %v2590 = vadd.f32 0.0, %v2589
      %2591 = vmatmul.bf16.gmra.mxu0 %v1741
      %v2592 = vpop.f32.mrf.mxu0
      %v2593 = vadd.f32 0.0, %v2592
      %v2594 = vpop.f32.mrf.mxu0
      %v2595 = vadd.f32 0.0, %v2594
      %2596 = vmatmul.bf16.gmra.mxu0 %v1742
      %v2597 = vpop.f32.mrf.mxu0
      %v2598 = vadd.f32 0.0, %v2597
      %v2599 = vpop.f32.mrf.mxu0
      %v2600 = vadd.f32 0.0, %v2599
      %2601 = vmatmul.bf16.gmra.mxu0 %v1743
      %v2602 = vpop.f32.mrf.mxu0
      %v2603 = vadd.f32 0.0, %v2602
      %v2604 = vpop.f32.mrf.mxu0
      %v2605 = vadd.f32 0.0, %v2604
      %2606 = vmatmul.bf16.gmra.mxu0 %v1744
      %v2607 = vpop.f32.mrf.mxu0
      %v2608 = vadd.f32 0.0, %v2607
      %v2609 = vpop.f32.mrf.mxu0
      %v2610 = vadd.f32 0.0, %v2609
      %2611 = vmatmul.bf16.gmra.mxu0 %v1745
      %v2612 = vpop.f32.mrf.mxu0
      %v2613 = vadd.f32 0.0, %v2612
      %v2614 = vpop.f32.mrf.mxu0
      %v2615 = vadd.f32 0.0, %v2614
      %2616 = vmatmul.bf16.gmra.mxu0 %v1746
      %v2617 = vpop.f32.mrf.mxu0
      %v2618 = vadd.f32 0.0, %v2617
      %v2619 = vpop.f32.mrf.mxu0
      %v2620 = vadd.f32 0.0, %v2619
      %2621 = vmatmul.bf16.gmra.mxu0 %v1747
      %v2622 = vpop.f32.mrf.mxu0
      %v2623 = vadd.f32 0.0, %v2622
      %v2624 = vpop.f32.mrf.mxu0
      %v2625 = vadd.f32 0.0, %v2624
      %2626 = vmatmul.bf16.gmra.mxu0 %v1748
      %v2627 = vpop.f32.mrf.mxu0
      %v2628 = vadd.f32 0.0, %v2627
      %v2629 = vpop.f32.mrf.mxu0
      %v2630 = vadd.f32 0.0, %v2629
      %2631 = vmatmul.bf16.gmra.mxu0 %v1749
      %v2632 = vpop.f32.mrf.mxu0
      %v2633 = vadd.f32 0.0, %v2632
      %v2634 = vpop.f32.mrf.mxu0
      %v2635 = vadd.f32 0.0, %v2634
      %2636 = vmatmul.bf16.gmra.mxu0 %v1750
      %v2637 = vpop.f32.mrf.mxu0
      %v2638 = vadd.f32 0.0, %v2637
      %v2639 = vpop.f32.mrf.mxu0
      %v2640 = vadd.f32 0.0, %v2639
      %2641 = vdwg.mxu0
      %v2658 = vunpack.c.l.b16 %v2392
      %v2659 = vunpack.c.l.b16 %v2393
      %v2660 = vunpack.c.l.b16 %v2394
      %v2661 = vunpack.c.l.b16 %v2395
      %v2662 = vunpack.c.l.b16 %v2396
      %v2663 = vunpack.c.l.b16 %v2397
      %v2664 = vunpack.c.l.b16 %v2398
      %v2665 = vunpack.c.l.b16 %v2399
      %v2666 = vunpack.c.l.b16 %v2400
      %v2667 = vunpack.c.l.b16 %v2401
      %v2668 = vunpack.c.l.b16 %v2402
      %v2669 = vunpack.c.l.b16 %v2403
      %v2670 = vunpack.c.l.b16 %v2404
      %v2671 = vunpack.c.l.b16 %v2405
      %v2672 = vunpack.c.l.b16 %v2406
      %v2673 = vunpack.c.l.b16 %v2407
      %v2674 = vpack.c.b16 %v2659, %v2658
      %v2675 = vpack.c.b16 %v2661, %v2660
      %v2676 = vpack.c.b16 %v2663, %v2662
      %v2677 = vpack.c.b16 %v2665, %v2664
      %v2678 = vpack.c.b16 %v2667, %v2666
      %v2679 = vpack.c.b16 %v2669, %v2668
      %v2680 = vpack.c.b16 %v2671, %v2670
      %v2681 = vpack.c.b16 %v2673, %v2672
      %2690 = vmatpush.bf16.msra.mxu0 %v2681
      %2691 = vmatpush.bf16.msra.mxu0 %v2680
      %2692 = vmatpush.bf16.msra.mxu0 %v2679
      %2693 = vmatpush.bf16.msra.mxu0 %v2678
      %2694 = vmatpush.bf16.msra.mxu0 %v2677
      %2695 = vmatpush.bf16.msra.mxu0 %v2676
      %2696 = vmatpush.bf16.msra.mxu0 %v2675
      %2697 = vmatpush.bf16.msra.mxu0 %v2674
      %2698 = vmatmul.bf16.gmra.mxu0 %v1719
      %v2699 = vpop.f32.mrf.mxu0
      %v2700 = vadd.f32 %v2483, %v2699
      %v2701 = vpop.f32.mrf.mxu0
      %v2702 = vadd.f32 %v2485, %v2701
      %2703 = vmatmul.bf16.gmra.mxu0 %v1720
      %v2704 = vpop.f32.mrf.mxu0
      %v2705 = vadd.f32 %v2488, %v2704
      %v2706 = vpop.f32.mrf.mxu0
      %v2707 = vadd.f32 %v2490, %v2706
      %2708 = vmatmul.bf16.gmra.mxu0 %v1721
      %v2709 = vpop.f32.mrf.mxu0
      %v2710 = vadd.f32 %v2493, %v2709
      %v2711 = vpop.f32.mrf.mxu0
      %v2712 = vadd.f32 %v2495, %v2711
      %2713 = vmatmul.bf16.gmra.mxu0 %v1722
      %v2714 = vpop.f32.mrf.mxu0
      %v2715 = vadd.f32 %v2498, %v2714
      %v2716 = vpop.f32.mrf.mxu0
      %v2717 = vadd.f32 %v2500, %v2716
      %2718 = vmatmul.bf16.gmra.mxu0 %v1723
      %v2719 = vpop.f32.mrf.mxu0
      %v2720 = vadd.f32 %v2503, %v2719
      %v2721 = vpop.f32.mrf.mxu0
      %v2722 = vadd.f32 %v2505, %v2721
      %2723 = vmatmul.bf16.gmra.mxu0 %v1724
      %v2724 = vpop.f32.mrf.mxu0
      %v2725 = vadd.f32 %v2508, %v2724
      %v2726 = vpop.f32.mrf.mxu0
      %v2727 = vadd.f32 %v2510, %v2726
      %2728 = vmatmul.bf16.gmra.mxu0 %v1725
      %v2729 = vpop.f32.mrf.mxu0
      %v2730 = vadd.f32 %v2513, %v2729
      %v2731 = vpop.f32.mrf.mxu0
      %v2732 = vadd.f32 %v2515, %v2731
      %2733 = vmatmul.bf16.gmra.mxu0 %v1726
      %v2734 = vpop.f32.mrf.mxu0
      %v2735 = vadd.f32 %v2518, %v2734
      %v2736 = vpop.f32.mrf.mxu0
      %v2737 = vadd.f32 %v2520, %v2736
      %2738 = vmatmul.bf16.gmra.mxu0 %v1727
      %v2739 = vpop.f32.mrf.mxu0
      %v2740 = vadd.f32 %v2523, %v2739
      %v2741 = vpop.f32.mrf.mxu0
      %v2742 = vadd.f32 %v2525, %v2741
      %2743 = vmatmul.bf16.gmra.mxu0 %v1728
      %v2744 = vpop.f32.mrf.mxu0
      %v2745 = vadd.f32 %v2528, %v2744
      %v2746 = vpop.f32.mrf.mxu0
      %v2747 = vadd.f32 %v2530, %v2746
      %2748 = vmatmul.bf16.gmra.mxu0 %v1729
      %v2749 = vpop.f32.mrf.mxu0
      %v2750 = vadd.f32 %v2533, %v2749
      %v2751 = vpop.f32.mrf.mxu0
      %v2752 = vadd.f32 %v2535, %v2751
      %2753 = vmatmul.bf16.gmra.mxu0 %v1730
      %v2754 = vpop.f32.mrf.mxu0
      %v2755 = vadd.f32 %v2538, %v2754
      %v2756 = vpop.f32.mrf.mxu0
      %v2757 = vadd.f32 %v2540, %v2756
      %2758 = vmatmul.bf16.gmra.mxu0 %v1731
      %v2759 = vpop.f32.mrf.mxu0
      %v2760 = vadd.f32 %v2543, %v2759
      %v2761 = vpop.f32.mrf.mxu0
      %v2762 = vadd.f32 %v2545, %v2761
      %2763 = vmatmul.bf16.gmra.mxu0 %v1732
      %v2764 = vpop.f32.mrf.mxu0
      %v2765 = vadd.f32 %v2548, %v2764
      %v2766 = vpop.f32.mrf.mxu0
      %v2767 = vadd.f32 %v2550, %v2766
      %2768 = vmatmul.bf16.gmra.mxu0 %v1733
      %v2769 = vpop.f32.mrf.mxu0
      %v2770 = vadd.f32 %v2553, %v2769
      %v2771 = vpop.f32.mrf.mxu0
      %v2772 = vadd.f32 %v2555, %v2771
      %2773 = vmatmul.bf16.gmra.mxu0 %v1734
      %v2774 = vpop.f32.mrf.mxu0
      %v2775 = vadd.f32 %v2558, %v2774
      %v2776 = vpop.f32.mrf.mxu0
      %v2777 = vadd.f32 %v2560, %v2776
      %2778 = vmatmul.bf16.gmra.mxu0 %v1735
      %v2779 = vpop.f32.mrf.mxu0
      %v2780 = vadd.f32 %v2563, %v2779
      %v2781 = vpop.f32.mrf.mxu0
      %v2782 = vadd.f32 %v2565, %v2781
      %2783 = vmatmul.bf16.gmra.mxu0 %v1736
      %v2784 = vpop.f32.mrf.mxu0
      %v2785 = vadd.f32 %v2568, %v2784
      %v2786 = vpop.f32.mrf.mxu0
      %v2787 = vadd.f32 %v2570, %v2786
      %2788 = vmatmul.bf16.gmra.mxu0 %v1737
      %v2789 = vpop.f32.mrf.mxu0
      %v2790 = vadd.f32 %v2573, %v2789
      %v2791 = vpop.f32.mrf.mxu0
      %v2792 = vadd.f32 %v2575, %v2791
      %2793 = vmatmul.bf16.gmra.mxu0 %v1738
      %v2794 = vpop.f32.mrf.mxu0
      %v2795 = vadd.f32 %v2578, %v2794
      %v2796 = vpop.f32.mrf.mxu0
      %v2797 = vadd.f32 %v2580, %v2796
      %2798 = vmatmul.bf16.gmra.mxu0 %v1739
      %v2799 = vpop.f32.mrf.mxu0
      %v2800 = vadd.f32 %v2583, %v2799
      %v2801 = vpop.f32.mrf.mxu0
      %v2802 = vadd.f32 %v2585, %v2801
      %2803 = vmatmul.bf16.gmra.mxu0 %v1740
      %v2804 = vpop.f32.mrf.mxu0
      %v2805 = vadd.f32 %v2588, %v2804
      %v2806 = vpop.f32.mrf.mxu0
      %v2807 = vadd.f32 %v2590, %v2806
      %2808 = vmatmul.bf16.gmra.mxu0 %v1741
      %v2809 = vpop.f32.mrf.mxu0
      %v2810 = vadd.f32 %v2593, %v2809
      %v2811 = vpop.f32.mrf.mxu0
      %v2812 = vadd.f32 %v2595, %v2811
      %2813 = vmatmul.bf16.gmra.mxu0 %v1742
      %v2814 = vpop.f32.mrf.mxu0
      %v2815 = vadd.f32 %v2598, %v2814
      %v2816 = vpop.f32.mrf.mxu0
      %v2817 = vadd.f32 %v2600, %v2816
      %2818 = vmatmul.bf16.gmra.mxu0 %v1743
      %v2819 = vpop.f32.mrf.mxu0
      %v2820 = vadd.f32 %v2603, %v2819
      %v2821 = vpop.f32.mrf.mxu0
      %v2822 = vadd.f32 %v2605, %v2821
      %2823 = vmatmul.bf16.gmra.mxu0 %v1744
      %v2824 = vpop.f32.mrf.mxu0
      %v2825 = vadd.f32 %v2608, %v2824
      %v2826 = vpop.f32.mrf.mxu0
      %v2827 = vadd.f32 %v2610, %v2826
      %2828 = vmatmul.bf16.gmra.mxu0 %v1745
      %v2829 = vpop.f32.mrf.mxu0
      %v2830 = vadd.f32 %v2613, %v2829
      %v2831 = vpop.f32.mrf.mxu0
      %v2832 = vadd.f32 %v2615, %v2831
      %2833 = vmatmul.bf16.gmra.mxu0 %v1746
      %v2834 = vpop.f32.mrf.mxu0
      %v2835 = vadd.f32 %v2618, %v2834
      %v2836 = vpop.f32.mrf.mxu0
      %v2837 = vadd.f32 %v2620, %v2836
      %2838 = vmatmul.bf16.gmra.mxu0 %v1747
      %v2839 = vpop.f32.mrf.mxu0
      %v2840 = vadd.f32 %v2623, %v2839
      %v2841 = vpop.f32.mrf.mxu0
      %v2842 = vadd.f32 %v2625, %v2841
      %2843 = vmatmul.bf16.gmra.mxu0 %v1748
      %v2844 = vpop.f32.mrf.mxu0
      %v2845 = vadd.f32 %v2628, %v2844
      %v2846 = vpop.f32.mrf.mxu0
      %v2847 = vadd.f32 %v2630, %v2846
      %2848 = vmatmul.bf16.gmra.mxu0 %v1749
      %v2849 = vpop.f32.mrf.mxu0
      %v2850 = vadd.f32 %v2633, %v2849
      %v2851 = vpop.f32.mrf.mxu0
      %v2852 = vadd.f32 %v2635, %v2851
      %2853 = vmatmul.bf16.gmra.mxu0 %v1750
      %v2854 = vpop.f32.mrf.mxu0
      %v2855 = vadd.f32 %v2638, %v2854
      %v2856 = vpop.f32.mrf.mxu0
      %v2857 = vadd.f32 %v2640, %v2856
      %2858 = vdwg.mxu0
      %v2859 = vld [vmem:[%s2] sm:$0xf]
      %v2860 = vld [vmem:[%s2 + $0x4] sm:$0xf]
      %v2861 = vld [vmem:[%s2 + $0x8] sm:$0xf]
      %v2862 = vld [vmem:[%s2 + $0xc] sm:$0xf]
      %v2863 = vld [vmem:[%s2 + $0x10] sm:$0xf]
      %v2864 = vld [vmem:[%s2 + $0x14] sm:$0xf]
      %v2865 = vld [vmem:[%s2 + $0x18] sm:$0xf]
      %v2866 = vld [vmem:[%s2 + $0x1c] sm:$0xf]
      %v2867 = vld [vmem:[%s2 + $0x20] sm:$0xf]
      %v2868 = vld [vmem:[%s2 + $0x24] sm:$0xf]
      %v2869 = vld [vmem:[%s2 + $0x28] sm:$0xf]
      %v2870 = vld [vmem:[%s2 + $0x2c] sm:$0xf]
      %v2871 = vld [vmem:[%s2 + $0x30] sm:$0xf]
      %v2872 = vld [vmem:[%s2 + $0x34] sm:$0xf]
      %v2873 = vld [vmem:[%s2 + $0x38] sm:$0xf]
      %v2874 = vld [vmem:[%s2 + $0x3c] sm:$0xf]
      %v2875 = vld [vmem:[%s2 + $0x40] sm:$0xf]
      %v2876 = vld [vmem:[%s2 + $0x44] sm:$0xf]
      %v2877 = vld [vmem:[%s2 + $0x48] sm:$0xf]
      %v2878 = vld [vmem:[%s2 + $0x4c] sm:$0xf]
      %v2879 = vld [vmem:[%s2 + $0x50] sm:$0xf]
      %v2880 = vld [vmem:[%s2 + $0x54] sm:$0xf]
      %v2881 = vld [vmem:[%s2 + $0x58] sm:$0xf]
      %v2882 = vld [vmem:[%s2 + $0x5c] sm:$0xf]
      %v2883 = vld [vmem:[%s2 + $0x60] sm:$0xf]
      %v2884 = vld [vmem:[%s2 + $0x64] sm:$0xf]
      %v2885 = vld [vmem:[%s2 + $0x68] sm:$0xf]
      %v2886 = vld [vmem:[%s2 + $0x6c] sm:$0xf]
      %v2887 = vld [vmem:[%s2 + $0x70] sm:$0xf]
      %v2888 = vld [vmem:[%s2 + $0x74] sm:$0xf]
      %v2889 = vld [vmem:[%s2 + $0x78] sm:$0xf]
      %v2890 = vld [vmem:[%s2 + $0x7c] sm:$0xf]
      %v2923 = vunpack.c.l.b16 %v2859
      %v2924 = vunpack.c.l.b16 %v2860
      %v2925 = vunpack.c.l.b16 %v2861
      %v2926 = vunpack.c.l.b16 %v2862
      %v2927 = vunpack.c.l.b16 %v2863
      %v2928 = vunpack.c.l.b16 %v2864
      %v2929 = vunpack.c.l.b16 %v2865
      %v2930 = vunpack.c.l.b16 %v2866
      %v2931 = vunpack.c.l.b16 %v2867
      %v2932 = vunpack.c.l.b16 %v2868
      %v2933 = vunpack.c.l.b16 %v2869
      %v2934 = vunpack.c.l.b16 %v2870
      %v2935 = vunpack.c.l.b16 %v2871
      %v2936 = vunpack.c.l.b16 %v2872
      %v2937 = vunpack.c.l.b16 %v2873
      %v2938 = vunpack.c.l.b16 %v2874
      %v2939 = vunpack.c.l.b16 %v2875
      %v2940 = vunpack.c.l.b16 %v2876
      %v2941 = vunpack.c.l.b16 %v2877
      %v2942 = vunpack.c.l.b16 %v2878
      %v2943 = vunpack.c.l.b16 %v2879
      %v2944 = vunpack.c.l.b16 %v2880
      %v2945 = vunpack.c.l.b16 %v2881
      %v2946 = vunpack.c.l.b16 %v2882
      %v2947 = vunpack.c.l.b16 %v2883
      %v2948 = vunpack.c.l.b16 %v2884
      %v2949 = vunpack.c.l.b16 %v2885
      %v2950 = vunpack.c.l.b16 %v2886
      %v2951 = vunpack.c.l.b16 %v2887
      %v2952 = vunpack.c.l.b16 %v2888
      %v2953 = vunpack.c.l.b16 %v2889
      %v2954 = vunpack.c.l.b16 %v2890
      %v2955 = vpack.c.b16 %v2924, %v2923
      %v2956 = vpack.c.b16 %v2926, %v2925
      %v2957 = vpack.c.b16 %v2928, %v2927
      %v2958 = vpack.c.b16 %v2930, %v2929
      %v2959 = vpack.c.b16 %v2932, %v2931
      %v2960 = vpack.c.b16 %v2934, %v2933
      %v2961 = vpack.c.b16 %v2936, %v2935
      %v2962 = vpack.c.b16 %v2938, %v2937
      %v2963 = vpack.c.b16 %v2940, %v2939
      %v2964 = vpack.c.b16 %v2942, %v2941
      %v2965 = vpack.c.b16 %v2944, %v2943
      %v2966 = vpack.c.b16 %v2946, %v2945
      %v2967 = vpack.c.b16 %v2948, %v2947
      %v2968 = vpack.c.b16 %v2950, %v2949
      %v2969 = vpack.c.b16 %v2952, %v2951
      %v2970 = vpack.c.b16 %v2954, %v2953
      %2987 = vmatpush.bf16.msra.mxu0 %v2962
      %2988 = vmatpush.bf16.msra.mxu0 %v2961
      %2989 = vmatpush.bf16.msra.mxu0 %v2960
      %2990 = vmatpush.bf16.msra.mxu0 %v2959
      %2991 = vmatpush.bf16.msra.mxu0 %v2958
      %2992 = vmatpush.bf16.msra.mxu0 %v2957
      %2993 = vmatpush.bf16.msra.mxu0 %v2956
      %2994 = vmatpush.bf16.msra.mxu0 %v2955
      %2995 = vmatmul.bf16.gmra.mxu0 %v2328
      %v2996 = vpop.f32.mrf.mxu0
      %v2997 = vadd.f32 0.0, %v2996
      %v2998 = vpop.f32.mrf.mxu0
      %v2999 = vadd.f32 0.0, %v2998
      %3000 = vmatmul.bf16.gmra.mxu0 %v2330
      %v3001 = vpop.f32.mrf.mxu0
      %v3002 = vadd.f32 0.0, %v3001
      %v3003 = vpop.f32.mrf.mxu0
      %v3004 = vadd.f32 0.0, %v3003
      %3005 = vmatmul.bf16.gmra.mxu0 %v2332
      %v3006 = vpop.f32.mrf.mxu0
      %v3007 = vadd.f32 0.0, %v3006
      %v3008 = vpop.f32.mrf.mxu0
      %v3009 = vadd.f32 0.0, %v3008
      %3010 = vmatmul.bf16.gmra.mxu0 %v2334
      %v3011 = vpop.f32.mrf.mxu0
      %v3012 = vadd.f32 0.0, %v3011
      %v3013 = vpop.f32.mrf.mxu0
      %v3014 = vadd.f32 0.0, %v3013
      %3015 = vmatmul.bf16.gmra.mxu0 %v2336
      %v3016 = vpop.f32.mrf.mxu0
      %v3017 = vadd.f32 0.0, %v3016
      %v3018 = vpop.f32.mrf.mxu0
      %v3019 = vadd.f32 0.0, %v3018
      %3020 = vmatmul.bf16.gmra.mxu0 %v2338
      %v3021 = vpop.f32.mrf.mxu0
      %v3022 = vadd.f32 0.0, %v3021
      %v3023 = vpop.f32.mrf.mxu0
      %v3024 = vadd.f32 0.0, %v3023
      %3025 = vmatmul.bf16.gmra.mxu0 %v2340
      %v3026 = vpop.f32.mrf.mxu0
      %v3027 = vadd.f32 0.0, %v3026
      %v3028 = vpop.f32.mrf.mxu0
      %v3029 = vadd.f32 0.0, %v3028
      %3030 = vmatmul.bf16.gmra.mxu0 %v2342
      %v3031 = vpop.f32.mrf.mxu0
      %v3032 = vadd.f32 0.0, %v3031
      %v3033 = vpop.f32.mrf.mxu0
      %v3034 = vadd.f32 0.0, %v3033
      %3035 = vmatmul.bf16.gmra.mxu0 %v2344
      %v3036 = vpop.f32.mrf.mxu0
      %v3037 = vadd.f32 0.0, %v3036
      %v3038 = vpop.f32.mrf.mxu0
      %v3039 = vadd.f32 0.0, %v3038
      %3040 = vmatmul.bf16.gmra.mxu0 %v2346
      %v3041 = vpop.f32.mrf.mxu0
      %v3042 = vadd.f32 0.0, %v3041
      %v3043 = vpop.f32.mrf.mxu0
      %v3044 = vadd.f32 0.0, %v3043
      %3045 = vmatmul.bf16.gmra.mxu0 %v2348
      %v3046 = vpop.f32.mrf.mxu0
      %v3047 = vadd.f32 0.0, %v3046
      %v3048 = vpop.f32.mrf.mxu0
      %v3049 = vadd.f32 0.0, %v3048
      %3050 = vmatmul.bf16.gmra.mxu0 %v2350
      %v3051 = vpop.f32.mrf.mxu0
      %v3052 = vadd.f32 0.0, %v3051
      %v3053 = vpop.f32.mrf.mxu0
      %v3054 = vadd.f32 0.0, %v3053
      %3055 = vmatmul.bf16.gmra.mxu0 %v2352
      %v3056 = vpop.f32.mrf.mxu0
      %v3057 = vadd.f32 0.0, %v3056
      %v3058 = vpop.f32.mrf.mxu0
      %v3059 = vadd.f32 0.0, %v3058
      %3060 = vmatmul.bf16.gmra.mxu0 %v2354
      %v3061 = vpop.f32.mrf.mxu0
      %v3062 = vadd.f32 0.0, %v3061
      %v3063 = vpop.f32.mrf.mxu0
      %v3064 = vadd.f32 0.0, %v3063
      %3065 = vmatmul.bf16.gmra.mxu0 %v2356
      %v3066 = vpop.f32.mrf.mxu0
      %v3067 = vadd.f32 0.0, %v3066
      %v3068 = vpop.f32.mrf.mxu0
      %v3069 = vadd.f32 0.0, %v3068
      %3070 = vmatmul.bf16.gmra.mxu0 %v2358
      %v3071 = vpop.f32.mrf.mxu0
      %v3072 = vadd.f32 0.0, %v3071
      %v3073 = vpop.f32.mrf.mxu0
      %v3074 = vadd.f32 0.0, %v3073
      %3075 = vmatmul.bf16.gmra.mxu0 %v2360
      %v3076 = vpop.f32.mrf.mxu0
      %v3077 = vadd.f32 0.0, %v3076
      %v3078 = vpop.f32.mrf.mxu0
      %v3079 = vadd.f32 0.0, %v3078
      %3080 = vmatmul.bf16.gmra.mxu0 %v2362
      %v3081 = vpop.f32.mrf.mxu0
      %v3082 = vadd.f32 0.0, %v3081
      %v3083 = vpop.f32.mrf.mxu0
      %v3084 = vadd.f32 0.0, %v3083
      %3085 = vmatmul.bf16.gmra.mxu0 %v2364
      %v3086 = vpop.f32.mrf.mxu0
      %v3087 = vadd.f32 0.0, %v3086
      %v3088 = vpop.f32.mrf.mxu0
      %v3089 = vadd.f32 0.0, %v3088
      %3090 = vmatmul.bf16.gmra.mxu0 %v2366
      %v3091 = vpop.f32.mrf.mxu0
      %v3092 = vadd.f32 0.0, %v3091
      %v3093 = vpop.f32.mrf.mxu0
      %v3094 = vadd.f32 0.0, %v3093
      %3095 = vmatmul.bf16.gmra.mxu0 %v2368
      %v3096 = vpop.f32.mrf.mxu0
      %v3097 = vadd.f32 0.0, %v3096
      %v3098 = vpop.f32.mrf.mxu0
      %v3099 = vadd.f32 0.0, %v3098
      %3100 = vmatmul.bf16.gmra.mxu0 %v2370
      %v3101 = vpop.f32.mrf.mxu0
      %v3102 = vadd.f32 0.0, %v3101
      %v3103 = vpop.f32.mrf.mxu0
      %v3104 = vadd.f32 0.0, %v3103
      %3105 = vmatmul.bf16.gmra.mxu0 %v2372
      %v3106 = vpop.f32.mrf.mxu0
      %v3107 = vadd.f32 0.0, %v3106
      %v3108 = vpop.f32.mrf.mxu0
      %v3109 = vadd.f32 0.0, %v3108
      %3110 = vmatmul.bf16.gmra.mxu0 %v2374
      %v3111 = vpop.f32.mrf.mxu0
      %v3112 = vadd.f32 0.0, %v3111
      %v3113 = vpop.f32.mrf.mxu0
      %v3114 = vadd.f32 0.0, %v3113
      %3115 = vmatmul.bf16.gmra.mxu0 %v2376
      %v3116 = vpop.f32.mrf.mxu0
      %v3117 = vadd.f32 0.0, %v3116
      %v3118 = vpop.f32.mrf.mxu0
      %v3119 = vadd.f32 0.0, %v3118
      %3120 = vmatmul.bf16.gmra.mxu0 %v2378
      %v3121 = vpop.f32.mrf.mxu0
      %v3122 = vadd.f32 0.0, %v3121
      %v3123 = vpop.f32.mrf.mxu0
      %v3124 = vadd.f32 0.0, %v3123
      %3125 = vmatmul.bf16.gmra.mxu0 %v2380
      %v3126 = vpop.f32.mrf.mxu0
      %v3127 = vadd.f32 0.0, %v3126
      %v3128 = vpop.f32.mrf.mxu0
      %v3129 = vadd.f32 0.0, %v3128
      %3130 = vmatmul.bf16.gmra.mxu0 %v2382
      %v3131 = vpop.f32.mrf.mxu0
      %v3132 = vadd.f32 0.0, %v3131
      %v3133 = vpop.f32.mrf.mxu0
      %v3134 = vadd.f32 0.0, %v3133
      %3135 = vmatmul.bf16.gmra.mxu0 %v2384
      %v3136 = vpop.f32.mrf.mxu0
      %v3137 = vadd.f32 0.0, %v3136
      %v3138 = vpop.f32.mrf.mxu0
      %v3139 = vadd.f32 0.0, %v3138
      %3140 = vmatmul.bf16.gmra.mxu0 %v2386
      %v3141 = vpop.f32.mrf.mxu0
      %v3142 = vadd.f32 0.0, %v3141
      %v3143 = vpop.f32.mrf.mxu0
      %v3144 = vadd.f32 0.0, %v3143
      %3145 = vmatmul.bf16.gmra.mxu0 %v2388
      %v3146 = vpop.f32.mrf.mxu0
      %v3147 = vadd.f32 0.0, %v3146
      %v3148 = vpop.f32.mrf.mxu0
      %v3149 = vadd.f32 0.0, %v3148
      %3150 = vmatmul.bf16.gmra.mxu0 %v2390
      %v3151 = vpop.f32.mrf.mxu0
      %v3152 = vadd.f32 0.0, %v3151
      %v3153 = vpop.f32.mrf.mxu0
      %v3154 = vadd.f32 0.0, %v3153
      %3155 = vdwg.mxu0
      %3156 = vmatpush.bf16.msra.mxu0 %v2970
      %3157 = vmatpush.bf16.msra.mxu0 %v2969
      %3158 = vmatpush.bf16.msra.mxu0 %v2968
      %3159 = vmatpush.bf16.msra.mxu0 %v2967
      %3160 = vmatpush.bf16.msra.mxu0 %v2966
      %3161 = vmatpush.bf16.msra.mxu0 %v2965
      %3162 = vmatpush.bf16.msra.mxu0 %v2964
      %3163 = vmatpush.bf16.msra.mxu0 %v2963
      %3164 = vmatmul.bf16.gmra.mxu0 %v2329
      %v3165 = vpop.f32.mrf.mxu0
      %v3166 = vadd.f32 %v2997, %v3165
      %v3167 = vpop.f32.mrf.mxu0
      %v3168 = vadd.f32 %v2999, %v3167
      %3169 = vmatmul.bf16.gmra.mxu0 %v2331
      %v3170 = vpop.f32.mrf.mxu0
      %v3171 = vadd.f32 %v3002, %v3170
      %v3172 = vpop.f32.mrf.mxu0
      %v3173 = vadd.f32 %v3004, %v3172
      %3174 = vmatmul.bf16.gmra.mxu0 %v2333
      %v3175 = vpop.f32.mrf.mxu0
      %v3176 = vadd.f32 %v3007, %v3175
      %v3177 = vpop.f32.mrf.mxu0
      %v3178 = vadd.f32 %v3009, %v3177
      %3179 = vmatmul.bf16.gmra.mxu0 %v2335
      %v3180 = vpop.f32.mrf.mxu0
      %v3181 = vadd.f32 %v3012, %v3180
      %v3182 = vpop.f32.mrf.mxu0
      %v3183 = vadd.f32 %v3014, %v3182
      %3184 = vmatmul.bf16.gmra.mxu0 %v2337
      %v3185 = vpop.f32.mrf.mxu0
      %v3186 = vadd.f32 %v3017, %v3185
      %v3187 = vpop.f32.mrf.mxu0
      %v3188 = vadd.f32 %v3019, %v3187
      %3189 = vmatmul.bf16.gmra.mxu0 %v2339
      %v3190 = vpop.f32.mrf.mxu0
      %v3191 = vadd.f32 %v3022, %v3190
      %v3192 = vpop.f32.mrf.mxu0
      %v3193 = vadd.f32 %v3024, %v3192
      %3194 = vmatmul.bf16.gmra.mxu0 %v2341
      %v3195 = vpop.f32.mrf.mxu0
      %v3196 = vadd.f32 %v3027, %v3195
      %v3197 = vpop.f32.mrf.mxu0
      %v3198 = vadd.f32 %v3029, %v3197
      %3199 = vmatmul.bf16.gmra.mxu0 %v2343
      %v3200 = vpop.f32.mrf.mxu0
      %v3201 = vadd.f32 %v3032, %v3200
      %v3202 = vpop.f32.mrf.mxu0
      %v3203 = vadd.f32 %v3034, %v3202
      %3204 = vmatmul.bf16.gmra.mxu0 %v2345
      %v3205 = vpop.f32.mrf.mxu0
      %v3206 = vadd.f32 %v3037, %v3205
      %v3207 = vpop.f32.mrf.mxu0
      %v3208 = vadd.f32 %v3039, %v3207
      %3209 = vmatmul.bf16.gmra.mxu0 %v2347
      %v3210 = vpop.f32.mrf.mxu0
      %v3211 = vadd.f32 %v3042, %v3210
      %v3212 = vpop.f32.mrf.mxu0
      %v3213 = vadd.f32 %v3044, %v3212
      %3214 = vmatmul.bf16.gmra.mxu0 %v2349
      %v3215 = vpop.f32.mrf.mxu0
      %v3216 = vadd.f32 %v3047, %v3215
      %v3217 = vpop.f32.mrf.mxu0
      %v3218 = vadd.f32 %v3049, %v3217
      %3219 = vmatmul.bf16.gmra.mxu0 %v2351
      %v3220 = vpop.f32.mrf.mxu0
      %v3221 = vadd.f32 %v3052, %v3220
      %v3222 = vpop.f32.mrf.mxu0
      %v3223 = vadd.f32 %v3054, %v3222
      %3224 = vmatmul.bf16.gmra.mxu0 %v2353
      %v3225 = vpop.f32.mrf.mxu0
      %v3226 = vadd.f32 %v3057, %v3225
      %v3227 = vpop.f32.mrf.mxu0
      %v3228 = vadd.f32 %v3059, %v3227
      %3229 = vmatmul.bf16.gmra.mxu0 %v2355
      %v3230 = vpop.f32.mrf.mxu0
      %v3231 = vadd.f32 %v3062, %v3230
      %v3232 = vpop.f32.mrf.mxu0
      %v3233 = vadd.f32 %v3064, %v3232
      %3234 = vmatmul.bf16.gmra.mxu0 %v2357
      %v3235 = vpop.f32.mrf.mxu0
      %v3236 = vadd.f32 %v3067, %v3235
      %v3237 = vpop.f32.mrf.mxu0
      %v3238 = vadd.f32 %v3069, %v3237
      %3239 = vmatmul.bf16.gmra.mxu0 %v2359
      %v3240 = vpop.f32.mrf.mxu0
      %v3241 = vadd.f32 %v3072, %v3240
      %v3242 = vpop.f32.mrf.mxu0
      %v3243 = vadd.f32 %v3074, %v3242
      %3244 = vmatmul.bf16.gmra.mxu0 %v2361
      %v3245 = vpop.f32.mrf.mxu0
      %v3246 = vadd.f32 %v3077, %v3245
      %v3247 = vpop.f32.mrf.mxu0
      %v3248 = vadd.f32 %v3079, %v3247
      %3249 = vmatmul.bf16.gmra.mxu0 %v2363
      %v3250 = vpop.f32.mrf.mxu0
      %v3251 = vadd.f32 %v3082, %v3250
      %v3252 = vpop.f32.mrf.mxu0
      %v3253 = vadd.f32 %v3084, %v3252
      %3254 = vmatmul.bf16.gmra.mxu0 %v2365
      %v3255 = vpop.f32.mrf.mxu0
      %v3256 = vadd.f32 %v3087, %v3255
      %v3257 = vpop.f32.mrf.mxu0
      %v3258 = vadd.f32 %v3089, %v3257
      %3259 = vmatmul.bf16.gmra.mxu0 %v2367
      %v3260 = vpop.f32.mrf.mxu0
      %v3261 = vadd.f32 %v3092, %v3260
      %v3262 = vpop.f32.mrf.mxu0
      %v3263 = vadd.f32 %v3094, %v3262
      %3264 = vmatmul.bf16.gmra.mxu0 %v2369
      %v3265 = vpop.f32.mrf.mxu0
      %v3266 = vadd.f32 %v3097, %v3265
      %v3267 = vpop.f32.mrf.mxu0
      %v3268 = vadd.f32 %v3099, %v3267
      %3269 = vmatmul.bf16.gmra.mxu0 %v2371
      %v3270 = vpop.f32.mrf.mxu0
      %v3271 = vadd.f32 %v3102, %v3270
      %v3272 = vpop.f32.mrf.mxu0
      %v3273 = vadd.f32 %v3104, %v3272
      %3274 = vmatmul.bf16.gmra.mxu0 %v2373
      %v3275 = vpop.f32.mrf.mxu0
      %v3276 = vadd.f32 %v3107, %v3275
      %v3277 = vpop.f32.mrf.mxu0
      %v3278 = vadd.f32 %v3109, %v3277
      %3279 = vmatmul.bf16.gmra.mxu0 %v2375
      %v3280 = vpop.f32.mrf.mxu0
      %v3281 = vadd.f32 %v3112, %v3280
      %v3282 = vpop.f32.mrf.mxu0
      %v3283 = vadd.f32 %v3114, %v3282
      %3284 = vmatmul.bf16.gmra.mxu0 %v2377
      %v3285 = vpop.f32.mrf.mxu0
      %v3286 = vadd.f32 %v3117, %v3285
      %v3287 = vpop.f32.mrf.mxu0
      %v3288 = vadd.f32 %v3119, %v3287
      %3289 = vmatmul.bf16.gmra.mxu0 %v2379
      %v3290 = vpop.f32.mrf.mxu0
      %v3291 = vadd.f32 %v3122, %v3290
      %v3292 = vpop.f32.mrf.mxu0
      %v3293 = vadd.f32 %v3124, %v3292
      %3294 = vmatmul.bf16.gmra.mxu0 %v2381
      %v3295 = vpop.f32.mrf.mxu0
      %v3296 = vadd.f32 %v3127, %v3295
      %v3297 = vpop.f32.mrf.mxu0
      %v3298 = vadd.f32 %v3129, %v3297
      %3299 = vmatmul.bf16.gmra.mxu0 %v2383
      %v3300 = vpop.f32.mrf.mxu0
      %v3301 = vadd.f32 %v3132, %v3300
      %v3302 = vpop.f32.mrf.mxu0
      %v3303 = vadd.f32 %v3134, %v3302
      %3304 = vmatmul.bf16.gmra.mxu0 %v2385
      %v3305 = vpop.f32.mrf.mxu0
      %v3306 = vadd.f32 %v3137, %v3305
      %v3307 = vpop.f32.mrf.mxu0
      %v3308 = vadd.f32 %v3139, %v3307
      %3309 = vmatmul.bf16.gmra.mxu0 %v2387
      %v3310 = vpop.f32.mrf.mxu0
      %v3311 = vadd.f32 %v3142, %v3310
      %v3312 = vpop.f32.mrf.mxu0
      %v3313 = vadd.f32 %v3144, %v3312
      %3314 = vmatmul.bf16.gmra.mxu0 %v2389
      %v3315 = vpop.f32.mrf.mxu0
      %v3316 = vadd.f32 %v3147, %v3315
      %v3317 = vpop.f32.mrf.mxu0
      %v3318 = vadd.f32 %v3149, %v3317
      %3319 = vmatmul.bf16.gmra.mxu0 %v2391
      %v3320 = vpop.f32.mrf.mxu0
      %v3321 = vadd.f32 %v3152, %v3320
      %v3322 = vpop.f32.mrf.mxu0
      %v3323 = vadd.f32 %v3154, %v3322
      %3324 = vdwg.mxu0
      %v3325 = vadd.f32 %v2700, %v3166
      %v3326 = vadd.f32 %v2702, %v3168
      %v3327 = vadd.f32 %v2705, %v3171
      %v3328 = vadd.f32 %v2707, %v3173
      %v3329 = vadd.f32 %v2710, %v3176
      %v3330 = vadd.f32 %v2712, %v3178
      %v3331 = vadd.f32 %v2715, %v3181
      %v3332 = vadd.f32 %v2717, %v3183
      %v3333 = vadd.f32 %v2720, %v3186
      %v3334 = vadd.f32 %v2722, %v3188
      %v3335 = vadd.f32 %v2725, %v3191
      %v3336 = vadd.f32 %v2727, %v3193
      %v3337 = vadd.f32 %v2730, %v3196
      %v3338 = vadd.f32 %v2732, %v3198
      %v3339 = vadd.f32 %v2735, %v3201
      %v3340 = vadd.f32 %v2737, %v3203
      %v3341 = vadd.f32 %v2740, %v3206
      %v3342 = vadd.f32 %v2742, %v3208
      %v3343 = vadd.f32 %v2745, %v3211
      %v3344 = vadd.f32 %v2747, %v3213
      %v3345 = vadd.f32 %v2750, %v3216
      %v3346 = vadd.f32 %v2752, %v3218
      %v3347 = vadd.f32 %v2755, %v3221
      %v3348 = vadd.f32 %v2757, %v3223
      %v3349 = vadd.f32 %v2760, %v3226
      %v3350 = vadd.f32 %v2762, %v3228
      %v3351 = vadd.f32 %v2765, %v3231
      %v3352 = vadd.f32 %v2767, %v3233
      %v3353 = vadd.f32 %v2770, %v3236
      %v3354 = vadd.f32 %v2772, %v3238
      %v3355 = vadd.f32 %v2775, %v3241
      %v3356 = vadd.f32 %v2777, %v3243
      %v3357 = vadd.f32 %v2780, %v3246
      %v3358 = vadd.f32 %v2782, %v3248
      %v3359 = vadd.f32 %v2785, %v3251
      %v3360 = vadd.f32 %v2787, %v3253
      %v3361 = vadd.f32 %v2790, %v3256
      %v3362 = vadd.f32 %v2792, %v3258
      %v3363 = vadd.f32 %v2795, %v3261
      %v3364 = vadd.f32 %v2797, %v3263
      %v3365 = vadd.f32 %v2800, %v3266
      %v3366 = vadd.f32 %v2802, %v3268
      %v3367 = vadd.f32 %v2805, %v3271
      %v3368 = vadd.f32 %v2807, %v3273
      %v3369 = vadd.f32 %v2810, %v3276
      %v3370 = vadd.f32 %v2812, %v3278
      %v3371 = vadd.f32 %v2815, %v3281
      %v3372 = vadd.f32 %v2817, %v3283
      %v3373 = vadd.f32 %v2820, %v3286
      %v3374 = vadd.f32 %v2822, %v3288
      %v3375 = vadd.f32 %v2825, %v3291
      %v3376 = vadd.f32 %v2827, %v3293
      %v3377 = vadd.f32 %v2830, %v3296
      %v3378 = vadd.f32 %v2832, %v3298
      %v3379 = vadd.f32 %v2835, %v3301
      %v3380 = vadd.f32 %v2837, %v3303
      %v3381 = vadd.f32 %v2840, %v3306
      %v3382 = vadd.f32 %v2842, %v3308
      %v3383 = vadd.f32 %v2845, %v3311
      %v3384 = vadd.f32 %v2847, %v3313
      %v3385 = vadd.f32 %v2850, %v3316
      %v3386 = vadd.f32 %v2852, %v3318
      %v3387 = vadd.f32 %v2855, %v3321
      %v3388 = vadd.f32 %v2857, %v3323
      %s3389 = scalar_lea.vmem %s2, 128
      %v3390 = vld [vmem:[%s3389] sm:$0xf]
      %v3391 = vld [vmem:[%s3389 + $0x4] sm:$0xf]
      %v3392 = vld [vmem:[%s3389 + $0x8] sm:$0xf]
      %v3393 = vld [vmem:[%s3389 + $0xc] sm:$0xf]
      %v3394 = vld [vmem:[%s3389 + $0x10] sm:$0xf]
      %v3395 = vld [vmem:[%s3389 + $0x14] sm:$0xf]
      %v3396 = vld [vmem:[%s3389 + $0x18] sm:$0xf]
      %v3397 = vld [vmem:[%s3389 + $0x1c] sm:$0xf]
      %v3398 = vld [vmem:[%s3389 + $0x20] sm:$0xf]
      %v3399 = vld [vmem:[%s3389 + $0x24] sm:$0xf]
      %v3400 = vld [vmem:[%s3389 + $0x28] sm:$0xf]
      %v3401 = vld [vmem:[%s3389 + $0x2c] sm:$0xf]
      %v3402 = vld [vmem:[%s3389 + $0x30] sm:$0xf]
      %v3403 = vld [vmem:[%s3389 + $0x34] sm:$0xf]
      %v3404 = vld [vmem:[%s3389 + $0x38] sm:$0xf]
      %v3405 = vld [vmem:[%s3389 + $0x3c] sm:$0xf]
      %v3406 = vld [vmem:[%s3389 + $0x40] sm:$0xf]
      %v3407 = vld [vmem:[%s3389 + $0x44] sm:$0xf]
      %v3408 = vld [vmem:[%s3389 + $0x48] sm:$0xf]
      %v3409 = vld [vmem:[%s3389 + $0x4c] sm:$0xf]
      %v3410 = vld [vmem:[%s3389 + $0x50] sm:$0xf]
      %v3411 = vld [vmem:[%s3389 + $0x54] sm:$0xf]
      %v3412 = vld [vmem:[%s3389 + $0x58] sm:$0xf]
      %v3413 = vld [vmem:[%s3389 + $0x5c] sm:$0xf]
      %v3414 = vld [vmem:[%s3389 + $0x60] sm:$0xf]
      %v3415 = vld [vmem:[%s3389 + $0x64] sm:$0xf]
      %v3416 = vld [vmem:[%s3389 + $0x68] sm:$0xf]
      %v3417 = vld [vmem:[%s3389 + $0x6c] sm:$0xf]
      %v3418 = vld [vmem:[%s3389 + $0x70] sm:$0xf]
      %v3419 = vld [vmem:[%s3389 + $0x74] sm:$0xf]
      %v3420 = vld [vmem:[%s3389 + $0x78] sm:$0xf]
      %v3421 = vld [vmem:[%s3389 + $0x7c] sm:$0xf]
      %v3454 = vunpack.c.l.b16 %v3390
      %v3455 = vunpack.c.l.b16 %v3391
      %v3456 = vunpack.c.l.b16 %v3392
      %v3457 = vunpack.c.l.b16 %v3393
      %v3458 = vunpack.c.l.b16 %v3394
      %v3459 = vunpack.c.l.b16 %v3395
      %v3460 = vunpack.c.l.b16 %v3396
      %v3461 = vunpack.c.l.b16 %v3397
      %v3462 = vunpack.c.l.b16 %v3398
      %v3463 = vunpack.c.l.b16 %v3399
      %v3464 = vunpack.c.l.b16 %v3400
      %v3465 = vunpack.c.l.b16 %v3401
      %v3466 = vunpack.c.l.b16 %v3402
      %v3467 = vunpack.c.l.b16 %v3403
      %v3468 = vunpack.c.l.b16 %v3404
      %v3469 = vunpack.c.l.b16 %v3405
      %v3470 = vunpack.c.l.b16 %v3406
      %v3471 = vunpack.c.l.b16 %v3407
      %v3472 = vunpack.c.l.b16 %v3408
      %v3473 = vunpack.c.l.b16 %v3409
      %v3474 = vunpack.c.l.b16 %v3410
      %v3475 = vunpack.c.l.b16 %v3411
      %v3476 = vunpack.c.l.b16 %v3412
      %v3477 = vunpack.c.l.b16 %v3413
      %v3478 = vunpack.c.l.b16 %v3414
      %v3479 = vunpack.c.l.b16 %v3415
      %v3480 = vunpack.c.l.b16 %v3416
      %v3481 = vunpack.c.l.b16 %v3417
      %v3482 = vunpack.c.l.b16 %v3418
      %v3483 = vunpack.c.l.b16 %v3419
      %v3484 = vunpack.c.l.b16 %v3420
      %v3485 = vunpack.c.l.b16 %v3421
      %v3486 = vpack.c.b16 %v3455, %v3454
      %v3487 = vpack.c.b16 %v3457, %v3456
      %v3488 = vpack.c.b16 %v3459, %v3458
      %v3489 = vpack.c.b16 %v3461, %v3460
      %v3490 = vpack.c.b16 %v3463, %v3462
      %v3491 = vpack.c.b16 %v3465, %v3464
      %v3492 = vpack.c.b16 %v3467, %v3466
      %v3493 = vpack.c.b16 %v3469, %v3468
      %v3494 = vpack.c.b16 %v3471, %v3470
      %v3495 = vpack.c.b16 %v3473, %v3472
      %v3496 = vpack.c.b16 %v3475, %v3474
      %v3497 = vpack.c.b16 %v3477, %v3476
      %v3498 = vpack.c.b16 %v3479, %v3478
      %v3499 = vpack.c.b16 %v3481, %v3480
      %v3500 = vpack.c.b16 %v3483, %v3482
      %v3501 = vpack.c.b16 %v3485, %v3484
      %3518 = vmatpush.bf16.msra.mxu0 %v3493
      %3519 = vmatpush.bf16.msra.mxu0 %v3492
      %3520 = vmatpush.bf16.msra.mxu0 %v3491
      %3521 = vmatpush.bf16.msra.mxu0 %v3490
      %3522 = vmatpush.bf16.msra.mxu0 %v3489
      %3523 = vmatpush.bf16.msra.mxu0 %v3488
      %3524 = vmatpush.bf16.msra.mxu0 %v3487
      %3525 = vmatpush.bf16.msra.mxu0 %v3486
      %3526 = vmatmul.bf16.gmra.mxu0 %v2328
      %v3527 = vpop.f32.mrf.mxu0
      %v3528 = vadd.f32 0.0, %v3527
      %v3529 = vpop.f32.mrf.mxu0
      %v3530 = vadd.f32 0.0, %v3529
      %3531 = vmatmul.bf16.gmra.mxu0 %v2330
      %v3532 = vpop.f32.mrf.mxu0
      %v3533 = vadd.f32 0.0, %v3532
      %v3534 = vpop.f32.mrf.mxu0
      %v3535 = vadd.f32 0.0, %v3534
      %3536 = vmatmul.bf16.gmra.mxu0 %v2332
      %v3537 = vpop.f32.mrf.mxu0
      %v3538 = vadd.f32 0.0, %v3537
      %v3539 = vpop.f32.mrf.mxu0
      %v3540 = vadd.f32 0.0, %v3539
      %3541 = vmatmul.bf16.gmra.mxu0 %v2334
      %v3542 = vpop.f32.mrf.mxu0
      %v3543 = vadd.f32 0.0, %v3542
      %v3544 = vpop.f32.mrf.mxu0
      %v3545 = vadd.f32 0.0, %v3544
      %3546 = vmatmul.bf16.gmra.mxu0 %v2336
      %v3547 = vpop.f32.mrf.mxu0
      %v3548 = vadd.f32 0.0, %v3547
      %v3549 = vpop.f32.mrf.mxu0
      %v3550 = vadd.f32 0.0, %v3549
      %3551 = vmatmul.bf16.gmra.mxu0 %v2338
      %v3552 = vpop.f32.mrf.mxu0
      %v3553 = vadd.f32 0.0, %v3552
      %v3554 = vpop.f32.mrf.mxu0
      %v3555 = vadd.f32 0.0, %v3554
      %3556 = vmatmul.bf16.gmra.mxu0 %v2340
      %v3557 = vpop.f32.mrf.mxu0
      %v3558 = vadd.f32 0.0, %v3557
      %v3559 = vpop.f32.mrf.mxu0
      %v3560 = vadd.f32 0.0, %v3559
      %3561 = vmatmul.bf16.gmra.mxu0 %v2342
      %v3562 = vpop.f32.mrf.mxu0
      %v3563 = vadd.f32 0.0, %v3562
      %v3564 = vpop.f32.mrf.mxu0
      %v3565 = vadd.f32 0.0, %v3564
      %3566 = vmatmul.bf16.gmra.mxu0 %v2344
      %v3567 = vpop.f32.mrf.mxu0
      %v3568 = vadd.f32 0.0, %v3567
      %v3569 = vpop.f32.mrf.mxu0
      %v3570 = vadd.f32 0.0, %v3569
      %3571 = vmatmul.bf16.gmra.mxu0 %v2346
      %v3572 = vpop.f32.mrf.mxu0
      %v3573 = vadd.f32 0.0, %v3572
      %v3574 = vpop.f32.mrf.mxu0
      %v3575 = vadd.f32 0.0, %v3574
      %3576 = vmatmul.bf16.gmra.mxu0 %v2348
      %v3577 = vpop.f32.mrf.mxu0
      %v3578 = vadd.f32 0.0, %v3577
      %v3579 = vpop.f32.mrf.mxu0
      %v3580 = vadd.f32 0.0, %v3579
      %3581 = vmatmul.bf16.gmra.mxu0 %v2350
      %v3582 = vpop.f32.mrf.mxu0
      %v3583 = vadd.f32 0.0, %v3582
      %v3584 = vpop.f32.mrf.mxu0
      %v3585 = vadd.f32 0.0, %v3584
      %3586 = vmatmul.bf16.gmra.mxu0 %v2352
      %v3587 = vpop.f32.mrf.mxu0
      %v3588 = vadd.f32 0.0, %v3587
      %v3589 = vpop.f32.mrf.mxu0
      %v3590 = vadd.f32 0.0, %v3589
      %3591 = vmatmul.bf16.gmra.mxu0 %v2354
      %v3592 = vpop.f32.mrf.mxu0
      %v3593 = vadd.f32 0.0, %v3592
      %v3594 = vpop.f32.mrf.mxu0
      %v3595 = vadd.f32 0.0, %v3594
      %3596 = vmatmul.bf16.gmra.mxu0 %v2356
      %v3597 = vpop.f32.mrf.mxu0
      %v3598 = vadd.f32 0.0, %v3597
      %v3599 = vpop.f32.mrf.mxu0
      %v3600 = vadd.f32 0.0, %v3599
      %3601 = vmatmul.bf16.gmra.mxu0 %v2358
      %v3602 = vpop.f32.mrf.mxu0
      %v3603 = vadd.f32 0.0, %v3602
      %v3604 = vpop.f32.mrf.mxu0
      %v3605 = vadd.f32 0.0, %v3604
      %3606 = vmatmul.bf16.gmra.mxu0 %v2360
      %v3607 = vpop.f32.mrf.mxu0
      %v3608 = vadd.f32 0.0, %v3607
      %v3609 = vpop.f32.mrf.mxu0
      %v3610 = vadd.f32 0.0, %v3609
      %3611 = vmatmul.bf16.gmra.mxu0 %v2362
      %v3612 = vpop.f32.mrf.mxu0
      %v3613 = vadd.f32 0.0, %v3612
      %v3614 = vpop.f32.mrf.mxu0
      %v3615 = vadd.f32 0.0, %v3614
      %3616 = vmatmul.bf16.gmra.mxu0 %v2364
      %v3617 = vpop.f32.mrf.mxu0
      %v3618 = vadd.f32 0.0, %v3617
      %v3619 = vpop.f32.mrf.mxu0
      %v3620 = vadd.f32 0.0, %v3619
      %3621 = vmatmul.bf16.gmra.mxu0 %v2366
      %v3622 = vpop.f32.mrf.mxu0
      %v3623 = vadd.f32 0.0, %v3622
      %v3624 = vpop.f32.mrf.mxu0
      %v3625 = vadd.f32 0.0, %v3624
      %3626 = vmatmul.bf16.gmra.mxu0 %v2368
      %v3627 = vpop.f32.mrf.mxu0
      %v3628 = vadd.f32 0.0, %v3627
      %v3629 = vpop.f32.mrf.mxu0
      %v3630 = vadd.f32 0.0, %v3629
      %3631 = vmatmul.bf16.gmra.mxu0 %v2370
      %v3632 = vpop.f32.mrf.mxu0
      %v3633 = vadd.f32 0.0, %v3632
      %v3634 = vpop.f32.mrf.mxu0
      %v3635 = vadd.f32 0.0, %v3634
      %3636 = vmatmul.bf16.gmra.mxu0 %v2372
      %v3637 = vpop.f32.mrf.mxu0
      %v3638 = vadd.f32 0.0, %v3637
      %v3639 = vpop.f32.mrf.mxu0
      %v3640 = vadd.f32 0.0, %v3639
      %3641 = vmatmul.bf16.gmra.mxu0 %v2374
      %v3642 = vpop.f32.mrf.mxu0
      %v3643 = vadd.f32 0.0, %v3642
      %v3644 = vpop.f32.mrf.mxu0
      %v3645 = vadd.f32 0.0, %v3644
      %3646 = vmatmul.bf16.gmra.mxu0 %v2376
      %v3647 = vpop.f32.mrf.mxu0
      %v3648 = vadd.f32 0.0, %v3647
      %v3649 = vpop.f32.mrf.mxu0
      %v3650 = vadd.f32 0.0, %v3649
      %3651 = vmatmul.bf16.gmra.mxu0 %v2378
      %v3652 = vpop.f32.mrf.mxu0
      %v3653 = vadd.f32 0.0, %v3652
      %v3654 = vpop.f32.mrf.mxu0
      %v3655 = vadd.f32 0.0, %v3654
      %3656 = vmatmul.bf16.gmra.mxu0 %v2380
      %v3657 = vpop.f32.mrf.mxu0
      %v3658 = vadd.f32 0.0, %v3657
      %v3659 = vpop.f32.mrf.mxu0
      %v3660 = vadd.f32 0.0, %v3659
      %3661 = vmatmul.bf16.gmra.mxu0 %v2382
      %v3662 = vpop.f32.mrf.mxu0
      %v3663 = vadd.f32 0.0, %v3662
      %v3664 = vpop.f32.mrf.mxu0
      %v3665 = vadd.f32 0.0, %v3664
      %3666 = vmatmul.bf16.gmra.mxu0 %v2384
      %v3667 = vpop.f32.mrf.mxu0
      %v3668 = vadd.f32 0.0, %v3667
      %v3669 = vpop.f32.mrf.mxu0
      %v3670 = vadd.f32 0.0, %v3669
      %3671 = vmatmul.bf16.gmra.mxu0 %v2386
      %v3672 = vpop.f32.mrf.mxu0
      %v3673 = vadd.f32 0.0, %v3672
      %v3674 = vpop.f32.mrf.mxu0
      %v3675 = vadd.f32 0.0, %v3674
      %3676 = vmatmul.bf16.gmra.mxu0 %v2388
      %v3677 = vpop.f32.mrf.mxu0
      %v3678 = vadd.f32 0.0, %v3677
      %v3679 = vpop.f32.mrf.mxu0
      %v3680 = vadd.f32 0.0, %v3679
      %3681 = vmatmul.bf16.gmra.mxu0 %v2390
      %v3682 = vpop.f32.mrf.mxu0
      %v3683 = vadd.f32 0.0, %v3682
      %v3684 = vpop.f32.mrf.mxu0
      %v3685 = vadd.f32 0.0, %v3684
      %3686 = vdwg.mxu0
      %3687 = vmatpush.bf16.msra.mxu0 %v3501
      %3688 = vmatpush.bf16.msra.mxu0 %v3500
      %3689 = vmatpush.bf16.msra.mxu0 %v3499
      %3690 = vmatpush.bf16.msra.mxu0 %v3498
      %3691 = vmatpush.bf16.msra.mxu0 %v3497
      %3692 = vmatpush.bf16.msra.mxu0 %v3496
      %3693 = vmatpush.bf16.msra.mxu0 %v3495
      %3694 = vmatpush.bf16.msra.mxu0 %v3494
      %3695 = vmatmul.bf16.gmra.mxu0 %v2329
      %v3696 = vpop.f32.mrf.mxu0
      %v3697 = vadd.f32 %v3528, %v3696
      %v3698 = vpop.f32.mrf.mxu0
      %v3699 = vadd.f32 %v3530, %v3698
      %3700 = vmatmul.bf16.gmra.mxu0 %v2331
      %v3701 = vpop.f32.mrf.mxu0
      %v3702 = vadd.f32 %v3533, %v3701
      %v3703 = vpop.f32.mrf.mxu0
      %v3704 = vadd.f32 %v3535, %v3703
      %3705 = vmatmul.bf16.gmra.mxu0 %v2333
      %v3706 = vpop.f32.mrf.mxu0
      %v3707 = vadd.f32 %v3538, %v3706
      %v3708 = vpop.f32.mrf.mxu0
      %v3709 = vadd.f32 %v3540, %v3708
      %3710 = vmatmul.bf16.gmra.mxu0 %v2335
      %v3711 = vpop.f32.mrf.mxu0
      %v3712 = vadd.f32 %v3543, %v3711
      %v3713 = vpop.f32.mrf.mxu0
      %v3714 = vadd.f32 %v3545, %v3713
      %3715 = vmatmul.bf16.gmra.mxu0 %v2337
      %v3716 = vpop.f32.mrf.mxu0
      %v3717 = vadd.f32 %v3548, %v3716
      %v3718 = vpop.f32.mrf.mxu0
      %v3719 = vadd.f32 %v3550, %v3718
      %3720 = vmatmul.bf16.gmra.mxu0 %v2339
      %v3721 = vpop.f32.mrf.mxu0
      %v3722 = vadd.f32 %v3553, %v3721
      %v3723 = vpop.f32.mrf.mxu0
      %v3724 = vadd.f32 %v3555, %v3723
      %3725 = vmatmul.bf16.gmra.mxu0 %v2341
      %v3726 = vpop.f32.mrf.mxu0
      %v3727 = vadd.f32 %v3558, %v3726
      %v3728 = vpop.f32.mrf.mxu0
      %v3729 = vadd.f32 %v3560, %v3728
      %3730 = vmatmul.bf16.gmra.mxu0 %v2343
      %v3731 = vpop.f32.mrf.mxu0
      %v3732 = vadd.f32 %v3563, %v3731
      %v3733 = vpop.f32.mrf.mxu0
      %v3734 = vadd.f32 %v3565, %v3733
      %3735 = vmatmul.bf16.gmra.mxu0 %v2345
      %v3736 = vpop.f32.mrf.mxu0
      %v3737 = vadd.f32 %v3568, %v3736
      %v3738 = vpop.f32.mrf.mxu0
      %v3739 = vadd.f32 %v3570, %v3738
      %3740 = vmatmul.bf16.gmra.mxu0 %v2347
      %v3741 = vpop.f32.mrf.mxu0
      %v3742 = vadd.f32 %v3573, %v3741
      %v3743 = vpop.f32.mrf.mxu0
      %v3744 = vadd.f32 %v3575, %v3743
      %3745 = vmatmul.bf16.gmra.mxu0 %v2349
      %v3746 = vpop.f32.mrf.mxu0
      %v3747 = vadd.f32 %v3578, %v3746
      %v3748 = vpop.f32.mrf.mxu0
      %v3749 = vadd.f32 %v3580, %v3748
      %3750 = vmatmul.bf16.gmra.mxu0 %v2351
      %v3751 = vpop.f32.mrf.mxu0
      %v3752 = vadd.f32 %v3583, %v3751
      %v3753 = vpop.f32.mrf.mxu0
      %v3754 = vadd.f32 %v3585, %v3753
      %3755 = vmatmul.bf16.gmra.mxu0 %v2353
      %v3756 = vpop.f32.mrf.mxu0
      %v3757 = vadd.f32 %v3588, %v3756
      %v3758 = vpop.f32.mrf.mxu0
      %v3759 = vadd.f32 %v3590, %v3758
      %3760 = vmatmul.bf16.gmra.mxu0 %v2355
      %v3761 = vpop.f32.mrf.mxu0
      %v3762 = vadd.f32 %v3593, %v3761
      %v3763 = vpop.f32.mrf.mxu0
      %v3764 = vadd.f32 %v3595, %v3763
      %3765 = vmatmul.bf16.gmra.mxu0 %v2357
      %v3766 = vpop.f32.mrf.mxu0
      %v3767 = vadd.f32 %v3598, %v3766
      %v3768 = vpop.f32.mrf.mxu0
      %v3769 = vadd.f32 %v3600, %v3768
      %3770 = vmatmul.bf16.gmra.mxu0 %v2359
      %v3771 = vpop.f32.mrf.mxu0
      %v3772 = vadd.f32 %v3603, %v3771
      %v3773 = vpop.f32.mrf.mxu0
      %v3774 = vadd.f32 %v3605, %v3773
      %3775 = vmatmul.bf16.gmra.mxu0 %v2361
      %v3776 = vpop.f32.mrf.mxu0
      %v3777 = vadd.f32 %v3608, %v3776
      %v3778 = vpop.f32.mrf.mxu0
      %v3779 = vadd.f32 %v3610, %v3778
      %3780 = vmatmul.bf16.gmra.mxu0 %v2363
      %v3781 = vpop.f32.mrf.mxu0
      %v3782 = vadd.f32 %v3613, %v3781
      %v3783 = vpop.f32.mrf.mxu0
      %v3784 = vadd.f32 %v3615, %v3783
      %3785 = vmatmul.bf16.gmra.mxu0 %v2365
      %v3786 = vpop.f32.mrf.mxu0
      %v3787 = vadd.f32 %v3618, %v3786
      %v3788 = vpop.f32.mrf.mxu0
      %v3789 = vadd.f32 %v3620, %v3788
      %3790 = vmatmul.bf16.gmra.mxu0 %v2367
      %v3791 = vpop.f32.mrf.mxu0
      %v3792 = vadd.f32 %v3623, %v3791
      %v3793 = vpop.f32.mrf.mxu0
      %v3794 = vadd.f32 %v3625, %v3793
      %3795 = vmatmul.bf16.gmra.mxu0 %v2369
      %v3796 = vpop.f32.mrf.mxu0
      %v3797 = vadd.f32 %v3628, %v3796
      %v3798 = vpop.f32.mrf.mxu0
      %v3799 = vadd.f32 %v3630, %v3798
      %3800 = vmatmul.bf16.gmra.mxu0 %v2371
      %v3801 = vpop.f32.mrf.mxu0
      %v3802 = vadd.f32 %v3633, %v3801
      %v3803 = vpop.f32.mrf.mxu0
      %v3804 = vadd.f32 %v3635, %v3803
      %3805 = vmatmul.bf16.gmra.mxu0 %v2373
      %v3806 = vpop.f32.mrf.mxu0
      %v3807 = vadd.f32 %v3638, %v3806
      %v3808 = vpop.f32.mrf.mxu0
      %v3809 = vadd.f32 %v3640, %v3808
      %3810 = vmatmul.bf16.gmra.mxu0 %v2375
      %v3811 = vpop.f32.mrf.mxu0
      %v3812 = vadd.f32 %v3643, %v3811
      %v3813 = vpop.f32.mrf.mxu0
      %v3814 = vadd.f32 %v3645, %v3813
      %3815 = vmatmul.bf16.gmra.mxu0 %v2377
      %v3816 = vpop.f32.mrf.mxu0
      %v3817 = vadd.f32 %v3648, %v3816
      %v3818 = vpop.f32.mrf.mxu0
      %v3819 = vadd.f32 %v3650, %v3818
      %3820 = vmatmul.bf16.gmra.mxu0 %v2379
      %v3821 = vpop.f32.mrf.mxu0
      %v3822 = vadd.f32 %v3653, %v3821
      %v3823 = vpop.f32.mrf.mxu0
      %v3824 = vadd.f32 %v3655, %v3823
      %3825 = vmatmul.bf16.gmra.mxu0 %v2381
      %v3826 = vpop.f32.mrf.mxu0
      %v3827 = vadd.f32 %v3658, %v3826
      %v3828 = vpop.f32.mrf.mxu0
      %v3829 = vadd.f32 %v3660, %v3828
      %3830 = vmatmul.bf16.gmra.mxu0 %v2383
      %v3831 = vpop.f32.mrf.mxu0
      %v3832 = vadd.f32 %v3663, %v3831
      %v3833 = vpop.f32.mrf.mxu0
      %v3834 = vadd.f32 %v3665, %v3833
      %3835 = vmatmul.bf16.gmra.mxu0 %v2385
      %v3836 = vpop.f32.mrf.mxu0
      %v3837 = vadd.f32 %v3668, %v3836
      %v3838 = vpop.f32.mrf.mxu0
      %v3839 = vadd.f32 %v3670, %v3838
      %3840 = vmatmul.bf16.gmra.mxu0 %v2387
      %v3841 = vpop.f32.mrf.mxu0
      %v3842 = vadd.f32 %v3673, %v3841
      %v3843 = vpop.f32.mrf.mxu0
      %v3844 = vadd.f32 %v3675, %v3843
      %3845 = vmatmul.bf16.gmra.mxu0 %v2389
      %v3846 = vpop.f32.mrf.mxu0
      %v3847 = vadd.f32 %v3678, %v3846
      %v3848 = vpop.f32.mrf.mxu0
      %v3849 = vadd.f32 %v3680, %v3848
      %3850 = vmatmul.bf16.gmra.mxu0 %v2391
      %v3851 = vpop.f32.mrf.mxu0
      %v3852 = vadd.f32 %v3683, %v3851
      %v3853 = vpop.f32.mrf.mxu0
      %v3854 = vadd.f32 %v3685, %v3853
      %3855 = vdwg.mxu0
      %v3856 = vadd.f32 %v3325, %v3697
      %v3857 = vadd.f32 %v3326, %v3699
      %v3858 = vadd.f32 %v3327, %v3702
      %v3859 = vadd.f32 %v3328, %v3704
      %v3860 = vadd.f32 %v3329, %v3707
      %v3861 = vadd.f32 %v3330, %v3709
      %v3862 = vadd.f32 %v3331, %v3712
      %v3863 = vadd.f32 %v3332, %v3714
      %v3864 = vadd.f32 %v3333, %v3717
      %v3865 = vadd.f32 %v3334, %v3719
      %v3866 = vadd.f32 %v3335, %v3722
      %v3867 = vadd.f32 %v3336, %v3724
      %v3868 = vadd.f32 %v3337, %v3727
      %v3869 = vadd.f32 %v3338, %v3729
      %v3870 = vadd.f32 %v3339, %v3732
      %v3871 = vadd.f32 %v3340, %v3734
      %v3872 = vadd.f32 %v3341, %v3737
      %v3873 = vadd.f32 %v3342, %v3739
      %v3874 = vadd.f32 %v3343, %v3742
      %v3875 = vadd.f32 %v3344, %v3744
      %v3876 = vadd.f32 %v3345, %v3747
      %v3877 = vadd.f32 %v3346, %v3749
      %v3878 = vadd.f32 %v3347, %v3752
      %v3879 = vadd.f32 %v3348, %v3754
      %v3880 = vadd.f32 %v3349, %v3757
      %v3881 = vadd.f32 %v3350, %v3759
      %v3882 = vadd.f32 %v3351, %v3762
      %v3883 = vadd.f32 %v3352, %v3764
      %v3884 = vadd.f32 %v3353, %v3767
      %v3885 = vadd.f32 %v3354, %v3769
      %v3886 = vadd.f32 %v3355, %v3772
      %v3887 = vadd.f32 %v3356, %v3774
      %v3888 = vadd.f32 %v3357, %v3777
      %v3889 = vadd.f32 %v3358, %v3779
      %v3890 = vadd.f32 %v3359, %v3782
      %v3891 = vadd.f32 %v3360, %v3784
      %v3892 = vadd.f32 %v3361, %v3787
      %v3893 = vadd.f32 %v3362, %v3789
      %v3894 = vadd.f32 %v3363, %v3792
      %v3895 = vadd.f32 %v3364, %v3794
      %v3896 = vadd.f32 %v3365, %v3797
      %v3897 = vadd.f32 %v3366, %v3799
      %v3898 = vadd.f32 %v3367, %v3802
      %v3899 = vadd.f32 %v3368, %v3804
      %v3900 = vadd.f32 %v3369, %v3807
      %v3901 = vadd.f32 %v3370, %v3809
      %v3902 = vadd.f32 %v3371, %v3812
      %v3903 = vadd.f32 %v3372, %v3814
      %v3904 = vadd.f32 %v3373, %v3817
      %v3905 = vadd.f32 %v3374, %v3819
      %v3906 = vadd.f32 %v3375, %v3822
      %v3907 = vadd.f32 %v3376, %v3824
      %v3908 = vadd.f32 %v3377, %v3827
      %v3909 = vadd.f32 %v3378, %v3829
      %v3910 = vadd.f32 %v3379, %v3832
      %v3911 = vadd.f32 %v3380, %v3834
      %v3912 = vadd.f32 %v3381, %v3837
      %v3913 = vadd.f32 %v3382, %v3839
      %v3914 = vadd.f32 %v3383, %v3842
      %v3915 = vadd.f32 %v3384, %v3844
      %v3916 = vadd.f32 %v3385, %v3847
      %v3917 = vadd.f32 %v3386, %v3849
      %v3918 = vadd.f32 %v3387, %v3852
      %v3919 = vadd.f32 %v3388, %v3854
      %v3920 = vmul.f32 %v3856, %v3856
      %v3921 = vmul.f32 %v3857, %v3857
      %v3922 = vmul.f32 %v3858, %v3858
      %v3923 = vmul.f32 %v3859, %v3859
      %v3924 = vmul.f32 %v3860, %v3860
      %v3925 = vmul.f32 %v3861, %v3861
      %v3926 = vmul.f32 %v3862, %v3862
      %v3927 = vmul.f32 %v3863, %v3863
      %v3928 = vmul.f32 %v3864, %v3864
      %v3929 = vmul.f32 %v3865, %v3865
      %v3930 = vmul.f32 %v3866, %v3866
      %v3931 = vmul.f32 %v3867, %v3867
      %v3932 = vmul.f32 %v3868, %v3868
      %v3933 = vmul.f32 %v3869, %v3869
      %v3934 = vmul.f32 %v3870, %v3870
      %v3935 = vmul.f32 %v3871, %v3871
      %v3936 = vmul.f32 %v3872, %v3872
      %v3937 = vmul.f32 %v3873, %v3873
      %v3938 = vmul.f32 %v3874, %v3874
      %v3939 = vmul.f32 %v3875, %v3875
      %v3940 = vmul.f32 %v3876, %v3876
      %v3941 = vmul.f32 %v3877, %v3877
      %v3942 = vmul.f32 %v3878, %v3878
      %v3943 = vmul.f32 %v3879, %v3879
      %v3944 = vmul.f32 %v3880, %v3880
      %v3945 = vmul.f32 %v3881, %v3881
      %v3946 = vmul.f32 %v3882, %v3882
      %v3947 = vmul.f32 %v3883, %v3883
      %v3948 = vmul.f32 %v3884, %v3884
      %v3949 = vmul.f32 %v3885, %v3885
      %v3950 = vmul.f32 %v3886, %v3886
      %v3951 = vmul.f32 %v3887, %v3887
      %v3952 = vmul.f32 %v3888, %v3888
      %v3953 = vmul.f32 %v3889, %v3889
      %v3954 = vmul.f32 %v3890, %v3890
      %v3955 = vmul.f32 %v3891, %v3891
      %v3956 = vmul.f32 %v3892, %v3892
      %v3957 = vmul.f32 %v3893, %v3893
      %v3958 = vmul.f32 %v3894, %v3894
      %v3959 = vmul.f32 %v3895, %v3895
      %v3960 = vmul.f32 %v3896, %v3896
      %v3961 = vmul.f32 %v3897, %v3897
      %v3962 = vmul.f32 %v3898, %v3898
      %v3963 = vmul.f32 %v3899, %v3899
      %v3964 = vmul.f32 %v3900, %v3900
      %v3965 = vmul.f32 %v3901, %v3901
      %v3966 = vmul.f32 %v3902, %v3902
      %v3967 = vmul.f32 %v3903, %v3903
      %v3968 = vmul.f32 %v3904, %v3904
      %v3969 = vmul.f32 %v3905, %v3905
      %v3970 = vmul.f32 %v3906, %v3906
      %v3971 = vmul.f32 %v3907, %v3907
      %v3972 = vmul.f32 %v3908, %v3908
      %v3973 = vmul.f32 %v3909, %v3909
      %v3974 = vmul.f32 %v3910, %v3910
      %v3975 = vmul.f32 %v3911, %v3911
      %v3976 = vmul.f32 %v3912, %v3912
      %v3977 = vmul.f32 %v3913, %v3913
      %v3978 = vmul.f32 %v3914, %v3914
      %v3979 = vmul.f32 %v3915, %v3915
      %v3980 = vmul.f32 %v3916, %v3916
      %v3981 = vmul.f32 %v3917, %v3917
      %v3982 = vmul.f32 %v3918, %v3918
      %v3983 = vmul.f32 %v3919, %v3919
      %4048 = vrot.lane.b32.xlu0 %v3856, 112
      %v4049 = vpop.permute.xlu0 %4048
      %4050 = vrot.lane.b32.xlu0 %v3857, 112
      %v4051 = vpop.permute.xlu0 %4050
      %4052 = vrot.lane.b32.xlu0 %v3858, 112
      %v4053 = vpop.permute.xlu0 %4052
      %4054 = vrot.lane.b32.xlu0 %v3859, 112
      %v4055 = vpop.permute.xlu0 %4054
      %4056 = vrot.lane.b32.xlu0 %v3860, 112
      %v4057 = vpop.permute.xlu0 %4056
      %4058 = vrot.lane.b32.xlu0 %v3861, 112
      %v4059 = vpop.permute.xlu0 %4058
      %4060 = vrot.lane.b32.xlu0 %v3862, 112
      %v4061 = vpop.permute.xlu0 %4060
      %4062 = vrot.lane.b32.xlu0 %v3863, 112
      %v4063 = vpop.permute.xlu0 %4062
      %4064 = vrot.lane.b32.xlu0 %v3864, 112
      %v4065 = vpop.permute.xlu0 %4064
      %4066 = vrot.lane.b32.xlu0 %v3865, 112
      %v4067 = vpop.permute.xlu0 %4066
      %4068 = vrot.lane.b32.xlu0 %v3866, 112
      %v4069 = vpop.permute.xlu0 %4068
      %4070 = vrot.lane.b32.xlu0 %v3867, 112
      %v4071 = vpop.permute.xlu0 %4070
      %4072 = vrot.lane.b32.xlu0 %v3868, 112
      %v4073 = vpop.permute.xlu0 %4072
      %4074 = vrot.lane.b32.xlu0 %v3869, 112
      %v4075 = vpop.permute.xlu0 %4074
      %4076 = vrot.lane.b32.xlu0 %v3870, 112
      %v4077 = vpop.permute.xlu0 %4076
      %4078 = vrot.lane.b32.xlu0 %v3871, 112
      %v4079 = vpop.permute.xlu0 %4078
      %4080 = vrot.lane.b32.xlu0 %v3872, 112
      %v4081 = vpop.permute.xlu0 %4080
      %4082 = vrot.lane.b32.xlu0 %v3873, 112
      %v4083 = vpop.permute.xlu0 %4082
      %4084 = vrot.lane.b32.xlu0 %v3874, 112
      %v4085 = vpop.permute.xlu0 %4084
      %4086 = vrot.lane.b32.xlu0 %v3875, 112
      %v4087 = vpop.permute.xlu0 %4086
      %4088 = vrot.lane.b32.xlu0 %v3876, 112
      %v4089 = vpop.permute.xlu0 %4088
      %4090 = vrot.lane.b32.xlu0 %v3877, 112
      %v4091 = vpop.permute.xlu0 %4090
      %4092 = vrot.lane.b32.xlu0 %v3878, 112
      %v4093 = vpop.permute.xlu0 %4092
      %4094 = vrot.lane.b32.xlu0 %v3879, 112
      %v4095 = vpop.permute.xlu0 %4094
      %4096 = vrot.lane.b32.xlu0 %v3880, 112
      %v4097 = vpop.permute.xlu0 %4096
      %4098 = vrot.lane.b32.xlu0 %v3881, 112
      %v4099 = vpop.permute.xlu0 %4098
      %4100 = vrot.lane.b32.xlu0 %v3882, 112
      %v4101 = vpop.permute.xlu0 %4100
      %4102 = vrot.lane.b32.xlu0 %v3883, 112
      %v4103 = vpop.permute.xlu0 %4102
      %4104 = vrot.lane.b32.xlu0 %v3884, 112
      %v4105 = vpop.permute.xlu0 %4104
      %4106 = vrot.lane.b32.xlu0 %v3885, 112
      %v4107 = vpop.permute.xlu0 %4106
      %4108 = vrot.lane.b32.xlu0 %v3886, 112
      %v4109 = vpop.permute.xlu0 %4108
      %4110 = vrot.lane.b32.xlu0 %v3887, 112
      %v4111 = vpop.permute.xlu0 %4110
      %4112 = vrot.lane.b32.xlu0 %v3888, 112
      %v4113 = vpop.permute.xlu0 %4112
      %4114 = vrot.lane.b32.xlu0 %v3889, 112
      %v4115 = vpop.permute.xlu0 %4114
      %4116 = vrot.lane.b32.xlu0 %v3890, 112
      %v4117 = vpop.permute.xlu0 %4116
      %4118 = vrot.lane.b32.xlu0 %v3891, 112
      %v4119 = vpop.permute.xlu0 %4118
      %4120 = vrot.lane.b32.xlu0 %v3892, 112
      %v4121 = vpop.permute.xlu0 %4120
      %4122 = vrot.lane.b32.xlu0 %v3893, 112
      %v4123 = vpop.permute.xlu0 %4122
      %4124 = vrot.lane.b32.xlu0 %v3894, 112
      %v4125 = vpop.permute.xlu0 %4124
      %4126 = vrot.lane.b32.xlu0 %v3895, 112
      %v4127 = vpop.permute.xlu0 %4126
      %4128 = vrot.lane.b32.xlu0 %v3896, 112
      %v4129 = vpop.permute.xlu0 %4128
      %4130 = vrot.lane.b32.xlu0 %v3897, 112
      %v4131 = vpop.permute.xlu0 %4130
      %4132 = vrot.lane.b32.xlu0 %v3898, 112
      %v4133 = vpop.permute.xlu0 %4132
      %4134 = vrot.lane.b32.xlu0 %v3899, 112
      %v4135 = vpop.permute.xlu0 %4134
      %4136 = vrot.lane.b32.xlu0 %v3900, 112
      %v4137 = vpop.permute.xlu0 %4136
      %4138 = vrot.lane.b32.xlu0 %v3901, 112
      %v4139 = vpop.permute.xlu0 %4138
      %4140 = vrot.lane.b32.xlu0 %v3902, 112
      %v4141 = vpop.permute.xlu0 %4140
      %4142 = vrot.lane.b32.xlu0 %v3903, 112
      %v4143 = vpop.permute.xlu0 %4142
      %4144 = vrot.lane.b32.xlu0 %v3904, 112
      %v4145 = vpop.permute.xlu0 %4144
      %4146 = vrot.lane.b32.xlu0 %v3905, 112
      %v4147 = vpop.permute.xlu0 %4146
      %4148 = vrot.lane.b32.xlu0 %v3906, 112
      %v4149 = vpop.permute.xlu0 %4148
      %4150 = vrot.lane.b32.xlu0 %v3907, 112
      %v4151 = vpop.permute.xlu0 %4150
      %4152 = vrot.lane.b32.xlu0 %v3908, 112
      %v4153 = vpop.permute.xlu0 %4152
      %4154 = vrot.lane.b32.xlu0 %v3909, 112
      %v4155 = vpop.permute.xlu0 %4154
      %4156 = vrot.lane.b32.xlu0 %v3910, 112
      %v4157 = vpop.permute.xlu0 %4156
      %4158 = vrot.lane.b32.xlu0 %v3911, 112
      %v4159 = vpop.permute.xlu0 %4158
      %4160 = vrot.lane.b32.xlu0 %v3912, 112
      %v4161 = vpop.permute.xlu0 %4160
      %4162 = vrot.lane.b32.xlu0 %v3913, 112
      %v4163 = vpop.permute.xlu0 %4162
      %4164 = vrot.lane.b32.xlu0 %v3914, 112
      %v4165 = vpop.permute.xlu0 %4164
      %4166 = vrot.lane.b32.xlu0 %v3915, 112
      %v4167 = vpop.permute.xlu0 %4166
      %4168 = vrot.lane.b32.xlu0 %v3916, 112
      %v4169 = vpop.permute.xlu0 %4168
      %4170 = vrot.lane.b32.xlu0 %v3917, 112
      %v4171 = vpop.permute.xlu0 %4170
      %4172 = vrot.lane.b32.xlu0 %v3918, 112
      %v4173 = vpop.permute.xlu0 %4172
      %4174 = vrot.lane.b32.xlu0 %v3919, 112
      %v4175 = vpop.permute.xlu0 %4174
      %v4240 = vsub.f32 %v3920, %v4049
      %v4241 = vsub.f32 %v3921, %v4051
      %v4242 = vsub.f32 %v3922, %v4053
      %v4243 = vsub.f32 %v3923, %v4055
      %v4244 = vsub.f32 %v3924, %v4057
      %v4245 = vsub.f32 %v3925, %v4059
      %v4246 = vsub.f32 %v3926, %v4061
      %v4247 = vsub.f32 %v3927, %v4063
      %v4248 = vsub.f32 %v3928, %v4065
      %v4249 = vsub.f32 %v3929, %v4067
      %v4250 = vsub.f32 %v3930, %v4069
      %v4251 = vsub.f32 %v3931, %v4071
      %v4252 = vsub.f32 %v3932, %v4073
      %v4253 = vsub.f32 %v3933, %v4075
      %v4254 = vsub.f32 %v3934, %v4077
      %v4255 = vsub.f32 %v3935, %v4079
      %v4256 = vsub.f32 %v3936, %v4081
      %v4257 = vsub.f32 %v3937, %v4083
      %v4258 = vsub.f32 %v3938, %v4085
      %v4259 = vsub.f32 %v3939, %v4087
      %v4260 = vsub.f32 %v3940, %v4089
      %v4261 = vsub.f32 %v3941, %v4091
      %v4262 = vsub.f32 %v3942, %v4093
      %v4263 = vsub.f32 %v3943, %v4095
      %v4264 = vsub.f32 %v3944, %v4097
      %v4265 = vsub.f32 %v3945, %v4099
      %v4266 = vsub.f32 %v3946, %v4101
      %v4267 = vsub.f32 %v3947, %v4103
      %v4268 = vsub.f32 %v3948, %v4105
      %v4269 = vsub.f32 %v3949, %v4107
      %v4270 = vsub.f32 %v3950, %v4109
      %v4271 = vsub.f32 %v3951, %v4111
      %v4272 = vsub.f32 %v3952, %v4113
      %v4273 = vsub.f32 %v3953, %v4115
      %v4274 = vsub.f32 %v3954, %v4117
      %v4275 = vsub.f32 %v3955, %v4119
      %v4276 = vsub.f32 %v3956, %v4121
      %v4277 = vsub.f32 %v3957, %v4123
      %v4278 = vsub.f32 %v3958, %v4125
      %v4279 = vsub.f32 %v3959, %v4127
      %v4280 = vsub.f32 %v3960, %v4129
      %v4281 = vsub.f32 %v3961, %v4131
      %v4282 = vsub.f32 %v3962, %v4133
      %v4283 = vsub.f32 %v3963, %v4135
      %v4284 = vsub.f32 %v3964, %v4137
      %v4285 = vsub.f32 %v3965, %v4139
      %v4286 = vsub.f32 %v3966, %v4141
      %v4287 = vsub.f32 %v3967, %v4143
      %v4288 = vsub.f32 %v3968, %v4145
      %v4289 = vsub.f32 %v3969, %v4147
      %v4290 = vsub.f32 %v3970, %v4149
      %v4291 = vsub.f32 %v3971, %v4151
      %v4292 = vsub.f32 %v3972, %v4153
      %v4293 = vsub.f32 %v3973, %v4155
      %v4294 = vsub.f32 %v3974, %v4157
      %v4295 = vsub.f32 %v3975, %v4159
      %v4296 = vsub.f32 %v3976, %v4161
      %v4297 = vsub.f32 %v3977, %v4163
      %v4298 = vsub.f32 %v3978, %v4165
      %v4299 = vsub.f32 %v3979, %v4167
      %v4300 = vsub.f32 %v3980, %v4169
      %v4301 = vsub.f32 %v3981, %v4171
      %v4302 = vsub.f32 %v3982, %v4173
      %v4303 = vsub.f32 %v3983, %v4175
      %v4304 = vmul.f32 %v4240, 0.5
      %v4305 = vmul.f32 %v4241, 0.5
      %v4306 = vmul.f32 %v4242, 0.5
      %v4307 = vmul.f32 %v4243, 0.5
      %v4308 = vmul.f32 %v4244, 0.5
      %v4309 = vmul.f32 %v4245, 0.5
      %v4310 = vmul.f32 %v4246, 0.5
      %v4311 = vmul.f32 %v4247, 0.5
      %v4312 = vmul.f32 %v4248, 0.5
      %v4313 = vmul.f32 %v4249, 0.5
      %v4314 = vmul.f32 %v4250, 0.5
      %v4315 = vmul.f32 %v4251, 0.5
      %v4316 = vmul.f32 %v4252, 0.5
      %v4317 = vmul.f32 %v4253, 0.5
      %v4318 = vmul.f32 %v4254, 0.5
      %v4319 = vmul.f32 %v4255, 0.5
      %v4320 = vmul.f32 %v4256, 0.5
      %v4321 = vmul.f32 %v4257, 0.5
      %v4322 = vmul.f32 %v4258, 0.5
      %v4323 = vmul.f32 %v4259, 0.5
      %v4324 = vmul.f32 %v4260, 0.5
      %v4325 = vmul.f32 %v4261, 0.5
      %v4326 = vmul.f32 %v4262, 0.5
      %v4327 = vmul.f32 %v4263, 0.5
      %v4328 = vmul.f32 %v4264, 0.5
      %v4329 = vmul.f32 %v4265, 0.5
      %v4330 = vmul.f32 %v4266, 0.5
      %v4331 = vmul.f32 %v4267, 0.5
      %v4332 = vmul.f32 %v4268, 0.5
      %v4333 = vmul.f32 %v4269, 0.5
      %v4334 = vmul.f32 %v4270, 0.5
      %v4335 = vmul.f32 %v4271, 0.5
      %v4336 = vmul.f32 %v4272, 0.5
      %v4337 = vmul.f32 %v4273, 0.5
      %v4338 = vmul.f32 %v4274, 0.5
      %v4339 = vmul.f32 %v4275, 0.5
      %v4340 = vmul.f32 %v4276, 0.5
      %v4341 = vmul.f32 %v4277, 0.5
      %v4342 = vmul.f32 %v4278, 0.5
      %v4343 = vmul.f32 %v4279, 0.5
      %v4344 = vmul.f32 %v4280, 0.5
      %v4345 = vmul.f32 %v4281, 0.5
      %v4346 = vmul.f32 %v4282, 0.5
      %v4347 = vmul.f32 %v4283, 0.5
      %v4348 = vmul.f32 %v4284, 0.5
      %v4349 = vmul.f32 %v4285, 0.5
      %v4350 = vmul.f32 %v4286, 0.5
      %v4351 = vmul.f32 %v4287, 0.5
      %v4352 = vmul.f32 %v4288, 0.5
      %v4353 = vmul.f32 %v4289, 0.5
      %v4354 = vmul.f32 %v4290, 0.5
      %v4355 = vmul.f32 %v4291, 0.5
      %v4356 = vmul.f32 %v4292, 0.5
      %v4357 = vmul.f32 %v4293, 0.5
      %v4358 = vmul.f32 %v4294, 0.5
      %v4359 = vmul.f32 %v4295, 0.5
      %v4360 = vmul.f32 %v4296, 0.5
      %v4361 = vmul.f32 %v4297, 0.5
      %v4362 = vmul.f32 %v4298, 0.5
      %v4363 = vmul.f32 %v4299, 0.5
      %v4364 = vmul.f32 %v4300, 0.5
      %v4365 = vmul.f32 %v4301, 0.5
      %v4366 = vmul.f32 %v4302, 0.5
      %v4367 = vmul.f32 %v4303, 0.5
      %v4368 = vld [vmem:[%s3] sm:$0x1]
      %v4370 = vperm.slane %v4368, 0
      %v4372 = vadd.f32 %v3856, %v4370
      %v4373 = vadd.f32 %v3857, %v4370
      %v4374 = vadd.f32 %v3858, %v4370
      %v4375 = vadd.f32 %v3859, %v4370
      %v4376 = vadd.f32 %v3860, %v4370
      %v4377 = vadd.f32 %v3861, %v4370
      %v4378 = vadd.f32 %v3862, %v4370
      %v4379 = vadd.f32 %v3863, %v4370
      %v4380 = vadd.f32 %v3864, %v4370
      %v4381 = vadd.f32 %v3865, %v4370
      %v4382 = vadd.f32 %v3866, %v4370
      %v4383 = vadd.f32 %v3867, %v4370
      %v4384 = vadd.f32 %v3868, %v4370
      %v4385 = vadd.f32 %v3869, %v4370
      %v4386 = vadd.f32 %v3870, %v4370
      %v4387 = vadd.f32 %v3871, %v4370
      %v4388 = vadd.f32 %v3872, %v4370
      %v4389 = vadd.f32 %v3873, %v4370
      %v4390 = vadd.f32 %v3874, %v4370
      %v4391 = vadd.f32 %v3875, %v4370
      %v4392 = vadd.f32 %v3876, %v4370
      %v4393 = vadd.f32 %v3877, %v4370
      %v4394 = vadd.f32 %v3878, %v4370
      %v4395 = vadd.f32 %v3879, %v4370
      %v4396 = vadd.f32 %v3880, %v4370
      %v4397 = vadd.f32 %v3881, %v4370
      %v4398 = vadd.f32 %v3882, %v4370
      %v4399 = vadd.f32 %v3883, %v4370
      %v4400 = vadd.f32 %v3884, %v4370
      %v4401 = vadd.f32 %v3885, %v4370
      %v4402 = vadd.f32 %v3886, %v4370
      %v4403 = vadd.f32 %v3887, %v4370
      %v4404 = vadd.f32 %v3888, %v4370
      %v4405 = vadd.f32 %v3889, %v4370
      %v4406 = vadd.f32 %v3890, %v4370
      %v4407 = vadd.f32 %v3891, %v4370
      %v4408 = vadd.f32 %v3892, %v4370
      %v4409 = vadd.f32 %v3893, %v4370
      %v4410 = vadd.f32 %v3894, %v4370
      %v4411 = vadd.f32 %v3895, %v4370
      %v4412 = vadd.f32 %v3896, %v4370
      %v4413 = vadd.f32 %v3897, %v4370
      %v4414 = vadd.f32 %v3898, %v4370
      %v4415 = vadd.f32 %v3899, %v4370
      %v4416 = vadd.f32 %v3900, %v4370
      %v4417 = vadd.f32 %v3901, %v4370
      %v4418 = vadd.f32 %v3902, %v4370
      %v4419 = vadd.f32 %v3903, %v4370
      %v4420 = vadd.f32 %v3904, %v4370
      %v4421 = vadd.f32 %v3905, %v4370
      %v4422 = vadd.f32 %v3906, %v4370
      %v4423 = vadd.f32 %v3907, %v4370
      %v4424 = vadd.f32 %v3908, %v4370
      %v4425 = vadd.f32 %v3909, %v4370
      %v4426 = vadd.f32 %v3910, %v4370
      %v4427 = vadd.f32 %v3911, %v4370
      %v4428 = vadd.f32 %v3912, %v4370
      %v4429 = vadd.f32 %v3913, %v4370
      %v4430 = vadd.f32 %v3914, %v4370
      %v4431 = vadd.f32 %v3915, %v4370
      %v4432 = vadd.f32 %v3916, %v4370
      %v4433 = vadd.f32 %v3917, %v4370
      %v4434 = vadd.f32 %v3918, %v4370
      %v4435 = vadd.f32 %v3919, %v4370
      %v4436 = vmax.f32 %v4372, 0.0
      %v4437 = vmax.f32 %v4373, 0.0
      %v4438 = vmax.f32 %v4374, 0.0
      %v4439 = vmax.f32 %v4375, 0.0
      %v4440 = vmax.f32 %v4376, 0.0
      %v4441 = vmax.f32 %v4377, 0.0
      %v4442 = vmax.f32 %v4378, 0.0
      %v4443 = vmax.f32 %v4379, 0.0
      %v4444 = vmax.f32 %v4380, 0.0
      %v4445 = vmax.f32 %v4381, 0.0
      %v4446 = vmax.f32 %v4382, 0.0
      %v4447 = vmax.f32 %v4383, 0.0
      %v4448 = vmax.f32 %v4384, 0.0
      %v4449 = vmax.f32 %v4385, 0.0
      %v4450 = vmax.f32 %v4386, 0.0
      %v4451 = vmax.f32 %v4387, 0.0
      %v4452 = vmax.f32 %v4388, 0.0
      %v4453 = vmax.f32 %v4389, 0.0
      %v4454 = vmax.f32 %v4390, 0.0
      %v4455 = vmax.f32 %v4391, 0.0
      %v4456 = vmax.f32 %v4392, 0.0
      %v4457 = vmax.f32 %v4393, 0.0
      %v4458 = vmax.f32 %v4394, 0.0
      %v4459 = vmax.f32 %v4395, 0.0
      %v4460 = vmax.f32 %v4396, 0.0
      %v4461 = vmax.f32 %v4397, 0.0
      %v4462 = vmax.f32 %v4398, 0.0
      %v4463 = vmax.f32 %v4399, 0.0
      %v4464 = vmax.f32 %v4400, 0.0
      %v4465 = vmax.f32 %v4401, 0.0
      %v4466 = vmax.f32 %v4402, 0.0
      %v4467 = vmax.f32 %v4403, 0.0
      %v4468 = vmax.f32 %v4404, 0.0
      %v4469 = vmax.f32 %v4405, 0.0
      %v4470 = vmax.f32 %v4406, 0.0
      %v4471 = vmax.f32 %v4407, 0.0
      %v4472 = vmax.f32 %v4408, 0.0
      %v4473 = vmax.f32 %v4409, 0.0
      %v4474 = vmax.f32 %v4410, 0.0
      %v4475 = vmax.f32 %v4411, 0.0
      %v4476 = vmax.f32 %v4412, 0.0
      %v4477 = vmax.f32 %v4413, 0.0
      %v4478 = vmax.f32 %v4414, 0.0
      %v4479 = vmax.f32 %v4415, 0.0
      %v4480 = vmax.f32 %v4416, 0.0
      %v4481 = vmax.f32 %v4417, 0.0
      %v4482 = vmax.f32 %v4418, 0.0
      %v4483 = vmax.f32 %v4419, 0.0
      %v4484 = vmax.f32 %v4420, 0.0
      %v4485 = vmax.f32 %v4421, 0.0
      %v4486 = vmax.f32 %v4422, 0.0
      %v4487 = vmax.f32 %v4423, 0.0
      %v4488 = vmax.f32 %v4424, 0.0
      %v4489 = vmax.f32 %v4425, 0.0
      %v4490 = vmax.f32 %v4426, 0.0
      %v4491 = vmax.f32 %v4427, 0.0
      %v4492 = vmax.f32 %v4428, 0.0
      %v4493 = vmax.f32 %v4429, 0.0
      %v4494 = vmax.f32 %v4430, 0.0
      %v4495 = vmax.f32 %v4431, 0.0
      %v4496 = vmax.f32 %v4432, 0.0
      %v4497 = vmax.f32 %v4433, 0.0
      %v4498 = vmax.f32 %v4434, 0.0
      %v4499 = vmax.f32 %v4435, 0.0
      %v4500 = vld [vmem:[%s4] sm:$0xff]
      %v4501 = vld [vmem:[%s4 + $0x8] sm:$0xff]
      %v4502 = vld [vmem:[%s4 + $0x10] sm:$0xff]
      %v4503 = vld [vmem:[%s4 + $0x18] sm:$0xff]
      %v4504 = vld [vmem:[%s5] sm:$0x1]
      %v4506 = vperm.slane %v4504, 0
      %vm4508 = vcmask 261120
      %v4510 = vsel %vm4508, %v4436, 0
      %v4513 = vsel %vm4508, %v4437, 0
      %v4516 = vsel %vm4508, %v4438, 0
      %v4519 = vsel %vm4508, %v4439, 0
      %v4522 = vsel %vm4508, %v4440, 0
      %v4525 = vsel %vm4508, %v4441, 0
      %v4528 = vsel %vm4508, %v4442, 0
      %v4531 = vsel %vm4508, %v4443, 0
      %v4534 = vsel %vm4508, %v4444, 0
      %v4537 = vsel %vm4508, %v4445, 0
      %v4540 = vsel %vm4508, %v4446, 0
      %v4543 = vsel %vm4508, %v4447, 0
      %v4546 = vsel %vm4508, %v4448, 0
      %v4549 = vsel %vm4508, %v4449, 0
      %v4552 = vsel %vm4508, %v4450, 0
      %v4555 = vsel %vm4508, %v4451, 0
      %v4558 = vsel %vm4508, %v4452, 0
      %v4561 = vsel %vm4508, %v4453, 0
      %v4564 = vsel %vm4508, %v4454, 0
      %v4567 = vsel %vm4508, %v4455, 0
      %v4570 = vsel %vm4508, %v4456, 0
      %v4573 = vsel %vm4508, %v4457, 0
      %v4576 = vsel %vm4508, %v4458, 0
      %v4579 = vsel %vm4508, %v4459, 0
      %v4582 = vsel %vm4508, %v4460, 0
      %v4585 = vsel %vm4508, %v4461, 0
      %v4588 = vsel %vm4508, %v4462, 0
      %v4591 = vsel %vm4508, %v4463, 0
      %v4594 = vsel %vm4508, %v4464, 0
      %v4597 = vsel %vm4508, %v4465, 0
      %v4600 = vsel %vm4508, %v4466, 0
      %v4603 = vsel %vm4508, %v4467, 0
      %v4606 = vsel %vm4508, %v4468, 0
      %v4609 = vsel %vm4508, %v4469, 0
      %v4612 = vsel %vm4508, %v4470, 0
      %v4615 = vsel %vm4508, %v4471, 0
      %v4618 = vsel %vm4508, %v4472, 0
      %v4621 = vsel %vm4508, %v4473, 0
      %v4624 = vsel %vm4508, %v4474, 0
      %v4627 = vsel %vm4508, %v4475, 0
      %v4630 = vsel %vm4508, %v4476, 0
      %v4633 = vsel %vm4508, %v4477, 0
      %v4636 = vsel %vm4508, %v4478, 0
      %v4639 = vsel %vm4508, %v4479, 0
      %v4642 = vsel %vm4508, %v4480, 0
      %v4645 = vsel %vm4508, %v4481, 0
      %v4648 = vsel %vm4508, %v4482, 0
      %v4651 = vsel %vm4508, %v4483, 0
      %v4654 = vsel %vm4508, %v4484, 0
      %v4657 = vsel %vm4508, %v4485, 0
      %v4660 = vsel %vm4508, %v4486, 0
      %v4663 = vsel %vm4508, %v4487, 0
      %v4666 = vsel %vm4508, %v4488, 0
      %v4669 = vsel %vm4508, %v4489, 0
      %v4672 = vsel %vm4508, %v4490, 0
      %v4675 = vsel %vm4508, %v4491, 0
      %v4678 = vsel %vm4508, %v4492, 0
      %v4681 = vsel %vm4508, %v4493, 0
      %v4684 = vsel %vm4508, %v4494, 0
      %v4687 = vsel %vm4508, %v4495, 0
      %v4690 = vsel %vm4508, %v4496, 0
      %v4693 = vsel %vm4508, %v4497, 0
      %v4696 = vsel %vm4508, %v4498, 0
      %v4699 = vsel %vm4508, %v4499, 0
      %4701 = vmatpush.msra.mxu0 0.0
      %4702 = vmatpush.msra.mxu0 0.0
      %4703 = vmatpush.msra.mxu0 0.0
      %4704 = vmatpush.msra.mxu0 0.0
      %4705 = vmatpush.msra.mxu0 0.0
      %4706 = vmatpush.msra.mxu0 0.0
      %4707 = vmatpush.msra.mxu0 0.0
      %4708 = vmatpush.msra.mxu0 0.0
      %4709 = vmatpush.msra.mxu0 0.0
      %4710 = vmatpush.msra.mxu0 0.0
      %4711 = vmatpush.msra.mxu0 0.0
      %4712 = vmatpush.msra.mxu0 0.0
      %4713 = vmatpush.msra.mxu0 %v4503
      %4714 = vmatpush.msra.mxu0 %v4502
      %4715 = vmatpush.msra.mxu0 %v4501
      %4716 = vmatpush.msra.mxu0 %v4500
      %4717 = vmatmul.f32.gmra.mxu0 %v4510
      %v4718 = vpop.f32.mrf.mxu0
      %v4719 = vadd.f32 %v4506, %v4718
      %4720 = vmatmul.f32.gmra.mxu0 %v4513
      %v4721 = vpop.f32.mrf.mxu0
      %v4722 = vadd.f32 %v4506, %v4721
      %4723 = vmatmul.f32.gmra.mxu0 %v4516
      %v4724 = vpop.f32.mrf.mxu0
      %v4725 = vadd.f32 %v4506, %v4724
      %4726 = vmatmul.f32.gmra.mxu0 %v4519
      %v4727 = vpop.f32.mrf.mxu0
      %v4728 = vadd.f32 %v4506, %v4727
      %4729 = vmatmul.f32.gmra.mxu0 %v4522
      %v4730 = vpop.f32.mrf.mxu0
      %v4731 = vadd.f32 %v4506, %v4730
      %4732 = vmatmul.f32.gmra.mxu0 %v4525
      %v4733 = vpop.f32.mrf.mxu0
      %v4734 = vadd.f32 %v4506, %v4733
      %4735 = vmatmul.f32.gmra.mxu0 %v4528
      %v4736 = vpop.f32.mrf.mxu0
      %v4737 = vadd.f32 %v4506, %v4736
      %4738 = vmatmul.f32.gmra.mxu0 %v4531
      %v4739 = vpop.f32.mrf.mxu0
      %v4740 = vadd.f32 %v4506, %v4739
      %4741 = vmatmul.f32.gmra.mxu0 %v4534
      %v4742 = vpop.f32.mrf.mxu0
      %v4743 = vadd.f32 %v4506, %v4742
      %4744 = vmatmul.f32.gmra.mxu0 %v4537
      %v4745 = vpop.f32.mrf.mxu0
      %v4746 = vadd.f32 %v4506, %v4745
      %4747 = vmatmul.f32.gmra.mxu0 %v4540
      %v4748 = vpop.f32.mrf.mxu0
      %v4749 = vadd.f32 %v4506, %v4748
      %4750 = vmatmul.f32.gmra.mxu0 %v4543
      %v4751 = vpop.f32.mrf.mxu0
      %v4752 = vadd.f32 %v4506, %v4751
      %4753 = vmatmul.f32.gmra.mxu0 %v4546
      %v4754 = vpop.f32.mrf.mxu0
      %v4755 = vadd.f32 %v4506, %v4754
      %4756 = vmatmul.f32.gmra.mxu0 %v4549
      %v4757 = vpop.f32.mrf.mxu0
      %v4758 = vadd.f32 %v4506, %v4757
      %4759 = vmatmul.f32.gmra.mxu0 %v4552
      %v4760 = vpop.f32.mrf.mxu0
      %v4761 = vadd.f32 %v4506, %v4760
      %4762 = vmatmul.f32.gmra.mxu0 %v4555
      %v4763 = vpop.f32.mrf.mxu0
      %v4764 = vadd.f32 %v4506, %v4763
      %4765 = vmatmul.f32.gmra.mxu0 %v4558
      %v4766 = vpop.f32.mrf.mxu0
      %v4767 = vadd.f32 %v4506, %v4766
      %4768 = vmatmul.f32.gmra.mxu0 %v4561
      %v4769 = vpop.f32.mrf.mxu0
      %v4770 = vadd.f32 %v4506, %v4769
      %4771 = vmatmul.f32.gmra.mxu0 %v4564
      %v4772 = vpop.f32.mrf.mxu0
      %v4773 = vadd.f32 %v4506, %v4772
      %4774 = vmatmul.f32.gmra.mxu0 %v4567
      %v4775 = vpop.f32.mrf.mxu0
      %v4776 = vadd.f32 %v4506, %v4775
      %4777 = vmatmul.f32.gmra.mxu0 %v4570
      %v4778 = vpop.f32.mrf.mxu0
      %v4779 = vadd.f32 %v4506, %v4778
      %4780 = vmatmul.f32.gmra.mxu0 %v4573
      %v4781 = vpop.f32.mrf.mxu0
      %v4782 = vadd.f32 %v4506, %v4781
      %4783 = vmatmul.f32.gmra.mxu0 %v4576
      %v4784 = vpop.f32.mrf.mxu0
      %v4785 = vadd.f32 %v4506, %v4784
      %4786 = vmatmul.f32.gmra.mxu0 %v4579
      %v4787 = vpop.f32.mrf.mxu0
      %v4788 = vadd.f32 %v4506, %v4787
      %4789 = vmatmul.f32.gmra.mxu0 %v4582
      %v4790 = vpop.f32.mrf.mxu0
      %v4791 = vadd.f32 %v4506, %v4790
      %4792 = vmatmul.f32.gmra.mxu0 %v4585
      %v4793 = vpop.f32.mrf.mxu0
      %v4794 = vadd.f32 %v4506, %v4793
      %4795 = vmatmul.f32.gmra.mxu0 %v4588
      %v4796 = vpop.f32.mrf.mxu0
      %v4797 = vadd.f32 %v4506, %v4796
      %4798 = vmatmul.f32.gmra.mxu0 %v4591
      %v4799 = vpop.f32.mrf.mxu0
      %v4800 = vadd.f32 %v4506, %v4799
      %4801 = vmatmul.f32.gmra.mxu0 %v4594
      %v4802 = vpop.f32.mrf.mxu0
      %v4803 = vadd.f32 %v4506, %v4802
      %4804 = vmatmul.f32.gmra.mxu0 %v4597
      %v4805 = vpop.f32.mrf.mxu0
      %v4806 = vadd.f32 %v4506, %v4805
      %4807 = vmatmul.f32.gmra.mxu0 %v4600
      %v4808 = vpop.f32.mrf.mxu0
      %v4809 = vadd.f32 %v4506, %v4808
      %4810 = vmatmul.f32.gmra.mxu0 %v4603
      %v4811 = vpop.f32.mrf.mxu0
      %v4812 = vadd.f32 %v4506, %v4811
      %4813 = vmatmul.f32.gmra.mxu0 %v4606
      %v4814 = vpop.f32.mrf.mxu0
      %v4815 = vadd.f32 %v4506, %v4814
      %4816 = vmatmul.f32.gmra.mxu0 %v4609
      %v4817 = vpop.f32.mrf.mxu0
      %v4818 = vadd.f32 %v4506, %v4817
      %4819 = vmatmul.f32.gmra.mxu0 %v4612
      %v4820 = vpop.f32.mrf.mxu0
      %v4821 = vadd.f32 %v4506, %v4820
      %4822 = vmatmul.f32.gmra.mxu0 %v4615
      %v4823 = vpop.f32.mrf.mxu0
      %v4824 = vadd.f32 %v4506, %v4823
      %4825 = vmatmul.f32.gmra.mxu0 %v4618
      %v4826 = vpop.f32.mrf.mxu0
      %v4827 = vadd.f32 %v4506, %v4826
      %4828 = vmatmul.f32.gmra.mxu0 %v4621
      %v4829 = vpop.f32.mrf.mxu0
      %v4830 = vadd.f32 %v4506, %v4829
      %4831 = vmatmul.f32.gmra.mxu0 %v4624
      %v4832 = vpop.f32.mrf.mxu0
      %v4833 = vadd.f32 %v4506, %v4832
      %4834 = vmatmul.f32.gmra.mxu0 %v4627
      %v4835 = vpop.f32.mrf.mxu0
      %v4836 = vadd.f32 %v4506, %v4835
      %4837 = vmatmul.f32.gmra.mxu0 %v4630
      %v4838 = vpop.f32.mrf.mxu0
      %v4839 = vadd.f32 %v4506, %v4838
      %4840 = vmatmul.f32.gmra.mxu0 %v4633
      %v4841 = vpop.f32.mrf.mxu0
      %v4842 = vadd.f32 %v4506, %v4841
      %4843 = vmatmul.f32.gmra.mxu0 %v4636
      %v4844 = vpop.f32.mrf.mxu0
      %v4845 = vadd.f32 %v4506, %v4844
      %4846 = vmatmul.f32.gmra.mxu0 %v4639
      %v4847 = vpop.f32.mrf.mxu0
      %v4848 = vadd.f32 %v4506, %v4847
      %4849 = vmatmul.f32.gmra.mxu0 %v4642
      %v4850 = vpop.f32.mrf.mxu0
      %v4851 = vadd.f32 %v4506, %v4850
      %4852 = vmatmul.f32.gmra.mxu0 %v4645
      %v4853 = vpop.f32.mrf.mxu0
      %v4854 = vadd.f32 %v4506, %v4853
      %4855 = vmatmul.f32.gmra.mxu0 %v4648
      %v4856 = vpop.f32.mrf.mxu0
      %v4857 = vadd.f32 %v4506, %v4856
      %4858 = vmatmul.f32.gmra.mxu0 %v4651
      %v4859 = vpop.f32.mrf.mxu0
      %v4860 = vadd.f32 %v4506, %v4859
      %4861 = vmatmul.f32.gmra.mxu0 %v4654
      %v4862 = vpop.f32.mrf.mxu0
      %v4863 = vadd.f32 %v4506, %v4862
      %4864 = vmatmul.f32.gmra.mxu0 %v4657
      %v4865 = vpop.f32.mrf.mxu0
      %v4866 = vadd.f32 %v4506, %v4865
      %4867 = vmatmul.f32.gmra.mxu0 %v4660
      %v4868 = vpop.f32.mrf.mxu0
      %v4869 = vadd.f32 %v4506, %v4868
      %4870 = vmatmul.f32.gmra.mxu0 %v4663
      %v4871 = vpop.f32.mrf.mxu0
      %v4872 = vadd.f32 %v4506, %v4871
      %4873 = vmatmul.f32.gmra.mxu0 %v4666
      %v4874 = vpop.f32.mrf.mxu0
      %v4875 = vadd.f32 %v4506, %v4874
      %4876 = vmatmul.f32.gmra.mxu0 %v4669
      %v4877 = vpop.f32.mrf.mxu0
      %v4878 = vadd.f32 %v4506, %v4877
      %4879 = vmatmul.f32.gmra.mxu0 %v4672
      %v4880 = vpop.f32.mrf.mxu0
      %v4881 = vadd.f32 %v4506, %v4880
      %4882 = vmatmul.f32.gmra.mxu0 %v4675
      %v4883 = vpop.f32.mrf.mxu0
      %v4884 = vadd.f32 %v4506, %v4883
      %4885 = vmatmul.f32.gmra.mxu0 %v4678
      %v4886 = vpop.f32.mrf.mxu0
      %v4887 = vadd.f32 %v4506, %v4886
      %4888 = vmatmul.f32.gmra.mxu0 %v4681
      %v4889 = vpop.f32.mrf.mxu0
      %v4890 = vadd.f32 %v4506, %v4889
      %4891 = vmatmul.f32.gmra.mxu0 %v4684
      %v4892 = vpop.f32.mrf.mxu0
      %v4893 = vadd.f32 %v4506, %v4892
      %4894 = vmatmul.f32.gmra.mxu0 %v4687
      %v4895 = vpop.f32.mrf.mxu0
      %v4896 = vadd.f32 %v4506, %v4895
      %4897 = vmatmul.f32.gmra.mxu0 %v4690
      %v4898 = vpop.f32.mrf.mxu0
      %v4899 = vadd.f32 %v4506, %v4898
      %4900 = vmatmul.f32.gmra.mxu0 %v4693
      %v4901 = vpop.f32.mrf.mxu0
      %v4902 = vadd.f32 %v4506, %v4901
      %4903 = vmatmul.f32.gmra.mxu0 %v4696
      %v4904 = vpop.f32.mrf.mxu0
      %v4905 = vadd.f32 %v4506, %v4904
      %4906 = vmatmul.f32.gmra.mxu0 %v4699
      %v4907 = vpop.f32.mrf.mxu0
      %v4908 = vadd.f32 %v4506, %v4907
      %4909 = vdwg.mxu0
      %v4910 = vmax.f32 %v4719, 0.0
      %v4911 = vmax.f32 %v4722, 0.0
      %v4912 = vmax.f32 %v4725, 0.0
      %v4913 = vmax.f32 %v4728, 0.0
      %v4914 = vmax.f32 %v4731, 0.0
      %v4915 = vmax.f32 %v4734, 0.0
      %v4916 = vmax.f32 %v4737, 0.0
      %v4917 = vmax.f32 %v4740, 0.0
      %v4918 = vmax.f32 %v4743, 0.0
      %v4919 = vmax.f32 %v4746, 0.0
      %v4920 = vmax.f32 %v4749, 0.0
      %v4921 = vmax.f32 %v4752, 0.0
      %v4922 = vmax.f32 %v4755, 0.0
      %v4923 = vmax.f32 %v4758, 0.0
      %v4924 = vmax.f32 %v4761, 0.0
      %v4925 = vmax.f32 %v4764, 0.0
      %v4926 = vmax.f32 %v4767, 0.0
      %v4927 = vmax.f32 %v4770, 0.0
      %v4928 = vmax.f32 %v4773, 0.0
      %v4929 = vmax.f32 %v4776, 0.0
      %v4930 = vmax.f32 %v4779, 0.0
      %v4931 = vmax.f32 %v4782, 0.0
      %v4932 = vmax.f32 %v4785, 0.0
      %v4933 = vmax.f32 %v4788, 0.0
      %v4934 = vmax.f32 %v4791, 0.0
      %v4935 = vmax.f32 %v4794, 0.0
      %v4936 = vmax.f32 %v4797, 0.0
      %v4937 = vmax.f32 %v4800, 0.0
      %v4938 = vmax.f32 %v4803, 0.0
      %v4939 = vmax.f32 %v4806, 0.0
      %v4940 = vmax.f32 %v4809, 0.0
      %v4941 = vmax.f32 %v4812, 0.0
      %v4942 = vmax.f32 %v4815, 0.0
      %v4943 = vmax.f32 %v4818, 0.0
      %v4944 = vmax.f32 %v4821, 0.0
      %v4945 = vmax.f32 %v4824, 0.0
      %v4946 = vmax.f32 %v4827, 0.0
      %v4947 = vmax.f32 %v4830, 0.0
      %v4948 = vmax.f32 %v4833, 0.0
      %v4949 = vmax.f32 %v4836, 0.0
      %v4950 = vmax.f32 %v4839, 0.0
      %v4951 = vmax.f32 %v4842, 0.0
      %v4952 = vmax.f32 %v4845, 0.0
      %v4953 = vmax.f32 %v4848, 0.0
      %v4954 = vmax.f32 %v4851, 0.0
      %v4955 = vmax.f32 %v4854, 0.0
      %v4956 = vmax.f32 %v4857, 0.0
      %v4957 = vmax.f32 %v4860, 0.0
      %v4958 = vmax.f32 %v4863, 0.0
      %v4959 = vmax.f32 %v4866, 0.0
      %v4960 = vmax.f32 %v4869, 0.0
      %v4961 = vmax.f32 %v4872, 0.0
      %v4962 = vmax.f32 %v4875, 0.0
      %v4963 = vmax.f32 %v4878, 0.0
      %v4964 = vmax.f32 %v4881, 0.0
      %v4965 = vmax.f32 %v4884, 0.0
      %v4966 = vmax.f32 %v4887, 0.0
      %v4967 = vmax.f32 %v4890, 0.0
      %v4968 = vmax.f32 %v4893, 0.0
      %v4969 = vmax.f32 %v4896, 0.0
      %v4970 = vmax.f32 %v4899, 0.0
      %v4971 = vmax.f32 %v4902, 0.0
      %v4972 = vmax.f32 %v4905, 0.0
      %v4973 = vmax.f32 %v4908, 0.0
      %5038 = vrot.lane.b32.xlu0 %v4304, 96
      %v5039 = vpop.permute.xlu0 %5038
      %5040 = vrot.lane.b32.xlu0 %v4305, 96
      %v5041 = vpop.permute.xlu0 %5040
      %5042 = vrot.lane.b32.xlu0 %v4306, 96
      %v5043 = vpop.permute.xlu0 %5042
      %5044 = vrot.lane.b32.xlu0 %v4307, 96
      %v5045 = vpop.permute.xlu0 %5044
      %5046 = vrot.lane.b32.xlu0 %v4308, 96
      %v5047 = vpop.permute.xlu0 %5046
      %5048 = vrot.lane.b32.xlu0 %v4309, 96
      %v5049 = vpop.permute.xlu0 %5048
      %5050 = vrot.lane.b32.xlu0 %v4310, 96
      %v5051 = vpop.permute.xlu0 %5050
      %5052 = vrot.lane.b32.xlu0 %v4311, 96
      %v5053 = vpop.permute.xlu0 %5052
      %5054 = vrot.lane.b32.xlu0 %v4312, 96
      %v5055 = vpop.permute.xlu0 %5054
      %5056 = vrot.lane.b32.xlu0 %v4313, 96
      %v5057 = vpop.permute.xlu0 %5056
      %5058 = vrot.lane.b32.xlu0 %v4314, 96
      %v5059 = vpop.permute.xlu0 %5058
      %5060 = vrot.lane.b32.xlu0 %v4315, 96
      %v5061 = vpop.permute.xlu0 %5060
      %5062 = vrot.lane.b32.xlu0 %v4316, 96
      %v5063 = vpop.permute.xlu0 %5062
      %5064 = vrot.lane.b32.xlu0 %v4317, 96
      %v5065 = vpop.permute.xlu0 %5064
      %5066 = vrot.lane.b32.xlu0 %v4318, 96
      %v5067 = vpop.permute.xlu0 %5066
      %5068 = vrot.lane.b32.xlu0 %v4319, 96
      %v5069 = vpop.permute.xlu0 %5068
      %5070 = vrot.lane.b32.xlu0 %v4320, 96
      %v5071 = vpop.permute.xlu0 %5070
      %5072 = vrot.lane.b32.xlu0 %v4321, 96
      %v5073 = vpop.permute.xlu0 %5072
      %5074 = vrot.lane.b32.xlu0 %v4322, 96
      %v5075 = vpop.permute.xlu0 %5074
      %5076 = vrot.lane.b32.xlu0 %v4323, 96
      %v5077 = vpop.permute.xlu0 %5076
      %5078 = vrot.lane.b32.xlu0 %v4324, 96
      %v5079 = vpop.permute.xlu0 %5078
      %5080 = vrot.lane.b32.xlu0 %v4325, 96
      %v5081 = vpop.permute.xlu0 %5080
      %5082 = vrot.lane.b32.xlu0 %v4326, 96
      %v5083 = vpop.permute.xlu0 %5082
      %5084 = vrot.lane.b32.xlu0 %v4327, 96
      %v5085 = vpop.permute.xlu0 %5084
      %5086 = vrot.lane.b32.xlu0 %v4328, 96
      %v5087 = vpop.permute.xlu0 %5086
      %5088 = vrot.lane.b32.xlu0 %v4329, 96
      %v5089 = vpop.permute.xlu0 %5088
      %5090 = vrot.lane.b32.xlu0 %v4330, 96
      %v5091 = vpop.permute.xlu0 %5090
      %5092 = vrot.lane.b32.xlu0 %v4331, 96
      %v5093 = vpop.permute.xlu0 %5092
      %5094 = vrot.lane.b32.xlu0 %v4332, 96
      %v5095 = vpop.permute.xlu0 %5094
      %5096 = vrot.lane.b32.xlu0 %v4333, 96
      %v5097 = vpop.permute.xlu0 %5096
      %5098 = vrot.lane.b32.xlu0 %v4334, 96
      %v5099 = vpop.permute.xlu0 %5098
      %5100 = vrot.lane.b32.xlu0 %v4335, 96
      %v5101 = vpop.permute.xlu0 %5100
      %5102 = vrot.lane.b32.xlu0 %v4336, 96
      %v5103 = vpop.permute.xlu0 %5102
      %5104 = vrot.lane.b32.xlu0 %v4337, 96
      %v5105 = vpop.permute.xlu0 %5104
      %5106 = vrot.lane.b32.xlu0 %v4338, 96
      %v5107 = vpop.permute.xlu0 %5106
      %5108 = vrot.lane.b32.xlu0 %v4339, 96
      %v5109 = vpop.permute.xlu0 %5108
      %5110 = vrot.lane.b32.xlu0 %v4340, 96
      %v5111 = vpop.permute.xlu0 %5110
      %5112 = vrot.lane.b32.xlu0 %v4341, 96
      %v5113 = vpop.permute.xlu0 %5112
      %5114 = vrot.lane.b32.xlu0 %v4342, 96
      %v5115 = vpop.permute.xlu0 %5114
      %5116 = vrot.lane.b32.xlu0 %v4343, 96
      %v5117 = vpop.permute.xlu0 %5116
      %5118 = vrot.lane.b32.xlu0 %v4344, 96
      %v5119 = vpop.permute.xlu0 %5118
      %5120 = vrot.lane.b32.xlu0 %v4345, 96
      %v5121 = vpop.permute.xlu0 %5120
      %5122 = vrot.lane.b32.xlu0 %v4346, 96
      %v5123 = vpop.permute.xlu0 %5122
      %5124 = vrot.lane.b32.xlu0 %v4347, 96
      %v5125 = vpop.permute.xlu0 %5124
      %5126 = vrot.lane.b32.xlu0 %v4348, 96
      %v5127 = vpop.permute.xlu0 %5126
      %5128 = vrot.lane.b32.xlu0 %v4349, 96
      %v5129 = vpop.permute.xlu0 %5128
      %5130 = vrot.lane.b32.xlu0 %v4350, 96
      %v5131 = vpop.permute.xlu0 %5130
      %5132 = vrot.lane.b32.xlu0 %v4351, 96
      %v5133 = vpop.permute.xlu0 %5132
      %5134 = vrot.lane.b32.xlu0 %v4352, 96
      %v5135 = vpop.permute.xlu0 %5134
      %5136 = vrot.lane.b32.xlu0 %v4353, 96
      %v5137 = vpop.permute.xlu0 %5136
      %5138 = vrot.lane.b32.xlu0 %v4354, 96
      %v5139 = vpop.permute.xlu0 %5138
      %5140 = vrot.lane.b32.xlu0 %v4355, 96
      %v5141 = vpop.permute.xlu0 %5140
      %5142 = vrot.lane.b32.xlu0 %v4356, 96
      %v5143 = vpop.permute.xlu0 %5142
      %5144 = vrot.lane.b32.xlu0 %v4357, 96
      %v5145 = vpop.permute.xlu0 %5144
      %5146 = vrot.lane.b32.xlu0 %v4358, 96
      %v5147 = vpop.permute.xlu0 %5146
      %5148 = vrot.lane.b32.xlu0 %v4359, 96
      %v5149 = vpop.permute.xlu0 %5148
      %5150 = vrot.lane.b32.xlu0 %v4360, 96
      %v5151 = vpop.permute.xlu0 %5150
      %5152 = vrot.lane.b32.xlu0 %v4361, 96
      %v5153 = vpop.permute.xlu0 %5152
      %5154 = vrot.lane.b32.xlu0 %v4362, 96
      %v5155 = vpop.permute.xlu0 %5154
      %5156 = vrot.lane.b32.xlu0 %v4363, 96
      %v5157 = vpop.permute.xlu0 %5156
      %5158 = vrot.lane.b32.xlu0 %v4364, 96
      %v5159 = vpop.permute.xlu0 %5158
      %5160 = vrot.lane.b32.xlu0 %v4365, 96
      %v5161 = vpop.permute.xlu0 %5160
      %5162 = vrot.lane.b32.xlu0 %v4366, 96
      %v5163 = vpop.permute.xlu0 %5162
      %5164 = vrot.lane.b32.xlu0 %v4367, 96
      %v5165 = vpop.permute.xlu0 %5164
      %5294 = vrot.lane.b32.xlu0 %v4910, 16
      %v5295 = vpop.permute.xlu0 %5294
      %5296 = vrot.lane.b32.xlu0 %v4911, 16
      %v5297 = vpop.permute.xlu0 %5296
      %5298 = vrot.lane.b32.xlu0 %v4912, 16
      %v5299 = vpop.permute.xlu0 %5298
      %5300 = vrot.lane.b32.xlu0 %v4913, 16
      %v5301 = vpop.permute.xlu0 %5300
      %5302 = vrot.lane.b32.xlu0 %v4914, 16
      %v5303 = vpop.permute.xlu0 %5302
      %5304 = vrot.lane.b32.xlu0 %v4915, 16
      %v5305 = vpop.permute.xlu0 %5304
      %5306 = vrot.lane.b32.xlu0 %v4916, 16
      %v5307 = vpop.permute.xlu0 %5306
      %5308 = vrot.lane.b32.xlu0 %v4917, 16
      %v5309 = vpop.permute.xlu0 %5308
      %5310 = vrot.lane.b32.xlu0 %v4918, 16
      %v5311 = vpop.permute.xlu0 %5310
      %5312 = vrot.lane.b32.xlu0 %v4919, 16
      %v5313 = vpop.permute.xlu0 %5312
      %5314 = vrot.lane.b32.xlu0 %v4920, 16
      %v5315 = vpop.permute.xlu0 %5314
      %5316 = vrot.lane.b32.xlu0 %v4921, 16
      %v5317 = vpop.permute.xlu0 %5316
      %5318 = vrot.lane.b32.xlu0 %v4922, 16
      %v5319 = vpop.permute.xlu0 %5318
      %5320 = vrot.lane.b32.xlu0 %v4923, 16
      %v5321 = vpop.permute.xlu0 %5320
      %5322 = vrot.lane.b32.xlu0 %v4924, 16
      %v5323 = vpop.permute.xlu0 %5322
      %5324 = vrot.lane.b32.xlu0 %v4925, 16
      %v5325 = vpop.permute.xlu0 %5324
      %5326 = vrot.lane.b32.xlu0 %v4926, 16
      %v5327 = vpop.permute.xlu0 %5326
      %5328 = vrot.lane.b32.xlu0 %v4927, 16
      %v5329 = vpop.permute.xlu0 %5328
      %5330 = vrot.lane.b32.xlu0 %v4928, 16
      %v5331 = vpop.permute.xlu0 %5330
      %5332 = vrot.lane.b32.xlu0 %v4929, 16
      %v5333 = vpop.permute.xlu0 %5332
      %5334 = vrot.lane.b32.xlu0 %v4930, 16
      %v5335 = vpop.permute.xlu0 %5334
      %5336 = vrot.lane.b32.xlu0 %v4931, 16
      %v5337 = vpop.permute.xlu0 %5336
      %5338 = vrot.lane.b32.xlu0 %v4932, 16
      %v5339 = vpop.permute.xlu0 %5338
      %5340 = vrot.lane.b32.xlu0 %v4933, 16
      %v5341 = vpop.permute.xlu0 %5340
      %5342 = vrot.lane.b32.xlu0 %v4934, 16
      %v5343 = vpop.permute.xlu0 %5342
      %5344 = vrot.lane.b32.xlu0 %v4935, 16
      %v5345 = vpop.permute.xlu0 %5344
      %5346 = vrot.lane.b32.xlu0 %v4936, 16
      %v5347 = vpop.permute.xlu0 %5346
      %5348 = vrot.lane.b32.xlu0 %v4937, 16
      %v5349 = vpop.permute.xlu0 %5348
      %5350 = vrot.lane.b32.xlu0 %v4938, 16
      %v5351 = vpop.permute.xlu0 %5350
      %5352 = vrot.lane.b32.xlu0 %v4939, 16
      %v5353 = vpop.permute.xlu0 %5352
      %5354 = vrot.lane.b32.xlu0 %v4940, 16
      %v5355 = vpop.permute.xlu0 %5354
      %5356 = vrot.lane.b32.xlu0 %v4941, 16
      %v5357 = vpop.permute.xlu0 %5356
      %5358 = vrot.lane.b32.xlu0 %v4942, 16
      %v5359 = vpop.permute.xlu0 %5358
      %5360 = vrot.lane.b32.xlu0 %v4943, 16
      %v5361 = vpop.permute.xlu0 %5360
      %5362 = vrot.lane.b32.xlu0 %v4944, 16
      %v5363 = vpop.permute.xlu0 %5362
      %5364 = vrot.lane.b32.xlu0 %v4945, 16
      %v5365 = vpop.permute.xlu0 %5364
      %5366 = vrot.lane.b32.xlu0 %v4946, 16
      %v5367 = vpop.permute.xlu0 %5366
      %5368 = vrot.lane.b32.xlu0 %v4947, 16
      %v5369 = vpop.permute.xlu0 %5368
      %5370 = vrot.lane.b32.xlu0 %v4948, 16
      %v5371 = vpop.permute.xlu0 %5370
      %5372 = vrot.lane.b32.xlu0 %v4949, 16
      %v5373 = vpop.permute.xlu0 %5372
      %5374 = vrot.lane.b32.xlu0 %v4950, 16
      %v5375 = vpop.permute.xlu0 %5374
      %5376 = vrot.lane.b32.xlu0 %v4951, 16
      %v5377 = vpop.permute.xlu0 %5376
      %5378 = vrot.lane.b32.xlu0 %v4952, 16
      %v5379 = vpop.permute.xlu0 %5378
      %5380 = vrot.lane.b32.xlu0 %v4953, 16
      %v5381 = vpop.permute.xlu0 %5380
      %5382 = vrot.lane.b32.xlu0 %v4954, 16
      %v5383 = vpop.permute.xlu0 %5382
      %5384 = vrot.lane.b32.xlu0 %v4955, 16
      %v5385 = vpop.permute.xlu0 %5384
      %5386 = vrot.lane.b32.xlu0 %v4956, 16
      %v5387 = vpop.permute.xlu0 %5386
      %5388 = vrot.lane.b32.xlu0 %v4957, 16
      %v5389 = vpop.permute.xlu0 %5388
      %5390 = vrot.lane.b32.xlu0 %v4958, 16
      %v5391 = vpop.permute.xlu0 %5390
      %5392 = vrot.lane.b32.xlu0 %v4959, 16
      %v5393 = vpop.permute.xlu0 %5392
      %5394 = vrot.lane.b32.xlu0 %v4960, 16
      %v5395 = vpop.permute.xlu0 %5394
      %5396 = vrot.lane.b32.xlu0 %v4961, 16
      %v5397 = vpop.permute.xlu0 %5396
      %5398 = vrot.lane.b32.xlu0 %v4962, 16
      %v5399 = vpop.permute.xlu0 %5398
      %5400 = vrot.lane.b32.xlu0 %v4963, 16
      %v5401 = vpop.permute.xlu0 %5400
      %5402 = vrot.lane.b32.xlu0 %v4964, 16
      %v5403 = vpop.permute.xlu0 %5402
      %5404 = vrot.lane.b32.xlu0 %v4965, 16
      %v5405 = vpop.permute.xlu0 %5404
      %5406 = vrot.lane.b32.xlu0 %v4966, 16
      %v5407 = vpop.permute.xlu0 %5406
      %5408 = vrot.lane.b32.xlu0 %v4967, 16
      %v5409 = vpop.permute.xlu0 %5408
      %5410 = vrot.lane.b32.xlu0 %v4968, 16
      %v5411 = vpop.permute.xlu0 %5410
      %5412 = vrot.lane.b32.xlu0 %v4969, 16
      %v5413 = vpop.permute.xlu0 %5412
      %5414 = vrot.lane.b32.xlu0 %v4970, 16
      %v5415 = vpop.permute.xlu0 %5414
      %5416 = vrot.lane.b32.xlu0 %v4971, 16
      %v5417 = vpop.permute.xlu0 %5416
      %5418 = vrot.lane.b32.xlu0 %v4972, 16
      %v5419 = vpop.permute.xlu0 %5418
      %5420 = vrot.lane.b32.xlu0 %v4973, 16
      %v5421 = vpop.permute.xlu0 %5420
      %vm5486 = vcmask 130048
      %v5487 = vsel %vm5486, %v5039, %v5295
      %v5488 = vsel %vm5486, %v5041, %v5297
      %v5489 = vsel %vm5486, %v5043, %v5299
      %v5490 = vsel %vm5486, %v5045, %v5301
      %v5491 = vsel %vm5486, %v5047, %v5303
      %v5492 = vsel %vm5486, %v5049, %v5305
      %v5493 = vsel %vm5486, %v5051, %v5307
      %v5494 = vsel %vm5486, %v5053, %v5309
      %v5495 = vsel %vm5486, %v5055, %v5311
      %v5496 = vsel %vm5486, %v5057, %v5313
      %v5497 = vsel %vm5486, %v5059, %v5315
      %v5498 = vsel %vm5486, %v5061, %v5317
      %v5499 = vsel %vm5486, %v5063, %v5319
      %v5500 = vsel %vm5486, %v5065, %v5321
      %v5501 = vsel %vm5486, %v5067, %v5323
      %v5502 = vsel %vm5486, %v5069, %v5325
      %v5503 = vsel %vm5486, %v5071, %v5327
      %v5504 = vsel %vm5486, %v5073, %v5329
      %v5505 = vsel %vm5486, %v5075, %v5331
      %v5506 = vsel %vm5486, %v5077, %v5333
      %v5507 = vsel %vm5486, %v5079, %v5335
      %v5508 = vsel %vm5486, %v5081, %v5337
      %v5509 = vsel %vm5486, %v5083, %v5339
      %v5510 = vsel %vm5486, %v5085, %v5341
      %v5511 = vsel %vm5486, %v5087, %v5343
      %v5512 = vsel %vm5486, %v5089, %v5345
      %v5513 = vsel %vm5486, %v5091, %v5347
      %v5514 = vsel %vm5486, %v5093, %v5349
      %v5515 = vsel %vm5486, %v5095, %v5351
      %v5516 = vsel %vm5486, %v5097, %v5353
      %v5517 = vsel %vm5486, %v5099, %v5355
      %v5518 = vsel %vm5486, %v5101, %v5357
      %v5519 = vsel %vm5486, %v5103, %v5359
      %v5520 = vsel %vm5486, %v5105, %v5361
      %v5521 = vsel %vm5486, %v5107, %v5363
      %v5522 = vsel %vm5486, %v5109, %v5365
      %v5523 = vsel %vm5486, %v5111, %v5367
      %v5524 = vsel %vm5486, %v5113, %v5369
      %v5525 = vsel %vm5486, %v5115, %v5371
      %v5526 = vsel %vm5486, %v5117, %v5373
      %v5527 = vsel %vm5486, %v5119, %v5375
      %v5528 = vsel %vm5486, %v5121, %v5377
      %v5529 = vsel %vm5486, %v5123, %v5379
      %v5530 = vsel %vm5486, %v5125, %v5381
      %v5531 = vsel %vm5486, %v5127, %v5383
      %v5532 = vsel %vm5486, %v5129, %v5385
      %v5533 = vsel %vm5486, %v5131, %v5387
      %v5534 = vsel %vm5486, %v5133, %v5389
      %v5535 = vsel %vm5486, %v5135, %v5391
      %v5536 = vsel %vm5486, %v5137, %v5393
      %v5537 = vsel %vm5486, %v5139, %v5395
      %v5538 = vsel %vm5486, %v5141, %v5397
      %v5539 = vsel %vm5486, %v5143, %v5399
      %v5540 = vsel %vm5486, %v5145, %v5401
      %v5541 = vsel %vm5486, %v5147, %v5403
      %v5542 = vsel %vm5486, %v5149, %v5405
      %v5543 = vsel %vm5486, %v5151, %v5407
      %v5544 = vsel %vm5486, %v5153, %v5409
      %v5545 = vsel %vm5486, %v5155, %v5411
      %v5546 = vsel %vm5486, %v5157, %v5413
      %v5547 = vsel %vm5486, %v5159, %v5415
      %v5548 = vsel %vm5486, %v5161, %v5417
      %v5549 = vsel %vm5486, %v5163, %v5419
      %v5550 = vsel %vm5486, %v5165, %v5421
      %v5551 = vld [vmem:[%s6] sm:$0xff]
      %v5552 = vld [vmem:[%s6 + $0x8] sm:$0xff]
      %v5553 = vld [vmem:[%s6 + $0x10] sm:$0xff]
      %v5554 = vld [vmem:[%s6 + $0x18] sm:$0xff]
      %v5556 = vsel %vm4508, %v5487, 0
      %v5559 = vsel %vm4508, %v5488, 0
      %v5562 = vsel %vm4508, %v5489, 0
      %v5565 = vsel %vm4508, %v5490, 0
      %v5568 = vsel %vm4508, %v5491, 0
      %v5571 = vsel %vm4508, %v5492, 0
      %v5574 = vsel %vm4508, %v5493, 0
      %v5577 = vsel %vm4508, %v5494, 0
      %v5580 = vsel %vm4508, %v5495, 0
      %v5583 = vsel %vm4508, %v5496, 0
      %v5586 = vsel %vm4508, %v5497, 0
      %v5589 = vsel %vm4508, %v5498, 0
      %v5592 = vsel %vm4508, %v5499, 0
      %v5595 = vsel %vm4508, %v5500, 0
      %v5598 = vsel %vm4508, %v5501, 0
      %v5601 = vsel %vm4508, %v5502, 0
      %v5604 = vsel %vm4508, %v5503, 0
      %v5607 = vsel %vm4508, %v5504, 0
      %v5610 = vsel %vm4508, %v5505, 0
      %v5613 = vsel %vm4508, %v5506, 0
      %v5616 = vsel %vm4508, %v5507, 0
      %v5619 = vsel %vm4508, %v5508, 0
      %v5622 = vsel %vm4508, %v5509, 0
      %v5625 = vsel %vm4508, %v5510, 0
      %v5628 = vsel %vm4508, %v5511, 0
      %v5631 = vsel %vm4508, %v5512, 0
      %v5634 = vsel %vm4508, %v5513, 0
      %v5637 = vsel %vm4508, %v5514, 0
      %v5640 = vsel %vm4508, %v5515, 0
      %v5643 = vsel %vm4508, %v5516, 0
      %v5646 = vsel %vm4508, %v5517, 0
      %v5649 = vsel %vm4508, %v5518, 0
      %v5652 = vsel %vm4508, %v5519, 0
      %v5655 = vsel %vm4508, %v5520, 0
      %v5658 = vsel %vm4508, %v5521, 0
      %v5661 = vsel %vm4508, %v5522, 0
      %v5664 = vsel %vm4508, %v5523, 0
      %v5667 = vsel %vm4508, %v5524, 0
      %v5670 = vsel %vm4508, %v5525, 0
      %v5673 = vsel %vm4508, %v5526, 0
      %v5676 = vsel %vm4508, %v5527, 0
      %v5679 = vsel %vm4508, %v5528, 0
      %v5682 = vsel %vm4508, %v5529, 0
      %v5685 = vsel %vm4508, %v5530, 0
      %v5688 = vsel %vm4508, %v5531, 0
      %v5691 = vsel %vm4508, %v5532, 0
      %v5694 = vsel %vm4508, %v5533, 0
      %v5697 = vsel %vm4508, %v5534, 0
      %v5700 = vsel %vm4508, %v5535, 0
      %v5703 = vsel %vm4508, %v5536, 0
      %v5706 = vsel %vm4508, %v5537, 0
      %v5709 = vsel %vm4508, %v5538, 0
      %v5712 = vsel %vm4508, %v5539, 0
      %v5715 = vsel %vm4508, %v5540, 0
      %v5718 = vsel %vm4508, %v5541, 0
      %v5721 = vsel %vm4508, %v5542, 0
      %v5724 = vsel %vm4508, %v5543, 0
      %v5727 = vsel %vm4508, %v5544, 0
      %v5730 = vsel %vm4508, %v5545, 0
      %v5733 = vsel %vm4508, %v5546, 0
      %v5736 = vsel %vm4508, %v5547, 0
      %v5739 = vsel %vm4508, %v5548, 0
      %v5742 = vsel %vm4508, %v5549, 0
      %v5745 = vsel %vm4508, %v5550, 0
      %5747 = vmatpush.msra.mxu0 0.0
      %5748 = vmatpush.msra.mxu0 0.0
      %5749 = vmatpush.msra.mxu0 0.0
      %5750 = vmatpush.msra.mxu0 0.0
      %5751 = vmatpush.msra.mxu0 0.0
      %5752 = vmatpush.msra.mxu0 0.0
      %5753 = vmatpush.msra.mxu0 0.0
      %5754 = vmatpush.msra.mxu0 0.0
      %5755 = vmatpush.msra.mxu0 0.0
      %5756 = vmatpush.msra.mxu0 0.0
      %5757 = vmatpush.msra.mxu0 0.0
      %5758 = vmatpush.msra.mxu0 0.0
      %5759 = vmatpush.msra.mxu0 %v5554
      %5760 = vmatpush.msra.mxu0 %v5553
      %5761 = vmatpush.msra.mxu0 %v5552
      %5762 = vmatpush.msra.mxu0 %v5551
      %5763 = vmatmul.f32.gmra.mxu0 %v5556
      %v5764 = vpop.f32.mrf.mxu0
      %v5765 = vadd.f32 0.0, %v5764
      %5766 = vmatmul.f32.gmra.mxu0 %v5559
      %v5767 = vpop.f32.mrf.mxu0
      %v5768 = vadd.f32 0.0, %v5767
      %5769 = vmatmul.f32.gmra.mxu0 %v5562
      %v5770 = vpop.f32.mrf.mxu0
      %v5771 = vadd.f32 0.0, %v5770
      %5772 = vmatmul.f32.gmra.mxu0 %v5565
      %v5773 = vpop.f32.mrf.mxu0
      %v5774 = vadd.f32 0.0, %v5773
      %5775 = vmatmul.f32.gmra.mxu0 %v5568
      %v5776 = vpop.f32.mrf.mxu0
      %v5777 = vadd.f32 0.0, %v5776
      %5778 = vmatmul.f32.gmra.mxu0 %v5571
      %v5779 = vpop.f32.mrf.mxu0
      %v5780 = vadd.f32 0.0, %v5779
      %5781 = vmatmul.f32.gmra.mxu0 %v5574
      %v5782 = vpop.f32.mrf.mxu0
      %v5783 = vadd.f32 0.0, %v5782
      %5784 = vmatmul.f32.gmra.mxu0 %v5577
      %v5785 = vpop.f32.mrf.mxu0
      %v5786 = vadd.f32 0.0, %v5785
      %5787 = vmatmul.f32.gmra.mxu0 %v5580
      %v5788 = vpop.f32.mrf.mxu0
      %v5789 = vadd.f32 0.0, %v5788
      %5790 = vmatmul.f32.gmra.mxu0 %v5583
      %v5791 = vpop.f32.mrf.mxu0
      %v5792 = vadd.f32 0.0, %v5791
      %5793 = vmatmul.f32.gmra.mxu0 %v5586
      %v5794 = vpop.f32.mrf.mxu0
      %v5795 = vadd.f32 0.0, %v5794
      %5796 = vmatmul.f32.gmra.mxu0 %v5589
      %v5797 = vpop.f32.mrf.mxu0
      %v5798 = vadd.f32 0.0, %v5797
      %5799 = vmatmul.f32.gmra.mxu0 %v5592
      %v5800 = vpop.f32.mrf.mxu0
      %v5801 = vadd.f32 0.0, %v5800
      %5802 = vmatmul.f32.gmra.mxu0 %v5595
      %v5803 = vpop.f32.mrf.mxu0
      %v5804 = vadd.f32 0.0, %v5803
      %5805 = vmatmul.f32.gmra.mxu0 %v5598
      %v5806 = vpop.f32.mrf.mxu0
      %v5807 = vadd.f32 0.0, %v5806
      %5808 = vmatmul.f32.gmra.mxu0 %v5601
      %v5809 = vpop.f32.mrf.mxu0
      %v5810 = vadd.f32 0.0, %v5809
      %5811 = vmatmul.f32.gmra.mxu0 %v5604
      %v5812 = vpop.f32.mrf.mxu0
      %v5813 = vadd.f32 0.0, %v5812
      %5814 = vmatmul.f32.gmra.mxu0 %v5607
      %v5815 = vpop.f32.mrf.mxu0
      %v5816 = vadd.f32 0.0, %v5815
      %5817 = vmatmul.f32.gmra.mxu0 %v5610
      %v5818 = vpop.f32.mrf.mxu0
      %v5819 = vadd.f32 0.0, %v5818
      %5820 = vmatmul.f32.gmra.mxu0 %v5613
      %v5821 = vpop.f32.mrf.mxu0
      %v5822 = vadd.f32 0.0, %v5821
      %5823 = vmatmul.f32.gmra.mxu0 %v5616
      %v5824 = vpop.f32.mrf.mxu0
      %v5825 = vadd.f32 0.0, %v5824
      %5826 = vmatmul.f32.gmra.mxu0 %v5619
      %v5827 = vpop.f32.mrf.mxu0
      %v5828 = vadd.f32 0.0, %v5827
      %5829 = vmatmul.f32.gmra.mxu0 %v5622
      %v5830 = vpop.f32.mrf.mxu0
      %v5831 = vadd.f32 0.0, %v5830
      %5832 = vmatmul.f32.gmra.mxu0 %v5625
      %v5833 = vpop.f32.mrf.mxu0
      %v5834 = vadd.f32 0.0, %v5833
      %5835 = vmatmul.f32.gmra.mxu0 %v5628
      %v5836 = vpop.f32.mrf.mxu0
      %v5837 = vadd.f32 0.0, %v5836
      %5838 = vmatmul.f32.gmra.mxu0 %v5631
      %v5839 = vpop.f32.mrf.mxu0
      %v5840 = vadd.f32 0.0, %v5839
      %5841 = vmatmul.f32.gmra.mxu0 %v5634
      %v5842 = vpop.f32.mrf.mxu0
      %v5843 = vadd.f32 0.0, %v5842
      %5844 = vmatmul.f32.gmra.mxu0 %v5637
      %v5845 = vpop.f32.mrf.mxu0
      %v5846 = vadd.f32 0.0, %v5845
      %5847 = vmatmul.f32.gmra.mxu0 %v5640
      %v5848 = vpop.f32.mrf.mxu0
      %v5849 = vadd.f32 0.0, %v5848
      %5850 = vmatmul.f32.gmra.mxu0 %v5643
      %v5851 = vpop.f32.mrf.mxu0
      %v5852 = vadd.f32 0.0, %v5851
      %5853 = vmatmul.f32.gmra.mxu0 %v5646
      %v5854 = vpop.f32.mrf.mxu0
      %v5855 = vadd.f32 0.0, %v5854
      %5856 = vmatmul.f32.gmra.mxu0 %v5649
      %v5857 = vpop.f32.mrf.mxu0
      %v5858 = vadd.f32 0.0, %v5857
      %5859 = vmatmul.f32.gmra.mxu0 %v5652
      %v5860 = vpop.f32.mrf.mxu0
      %v5861 = vadd.f32 0.0, %v5860
      %5862 = vmatmul.f32.gmra.mxu0 %v5655
      %v5863 = vpop.f32.mrf.mxu0
      %v5864 = vadd.f32 0.0, %v5863
      %5865 = vmatmul.f32.gmra.mxu0 %v5658
      %v5866 = vpop.f32.mrf.mxu0
      %v5867 = vadd.f32 0.0, %v5866
      %5868 = vmatmul.f32.gmra.mxu0 %v5661
      %v5869 = vpop.f32.mrf.mxu0
      %v5870 = vadd.f32 0.0, %v5869
      %5871 = vmatmul.f32.gmra.mxu0 %v5664
      %v5872 = vpop.f32.mrf.mxu0
      %v5873 = vadd.f32 0.0, %v5872
      %5874 = vmatmul.f32.gmra.mxu0 %v5667
      %v5875 = vpop.f32.mrf.mxu0
      %v5876 = vadd.f32 0.0, %v5875
      %5877 = vmatmul.f32.gmra.mxu0 %v5670
      %v5878 = vpop.f32.mrf.mxu0
      %v5879 = vadd.f32 0.0, %v5878
      %5880 = vmatmul.f32.gmra.mxu0 %v5673
      %v5881 = vpop.f32.mrf.mxu0
      %v5882 = vadd.f32 0.0, %v5881
      %5883 = vmatmul.f32.gmra.mxu0 %v5676
      %v5884 = vpop.f32.mrf.mxu0
      %v5885 = vadd.f32 0.0, %v5884
      %5886 = vmatmul.f32.gmra.mxu0 %v5679
      %v5887 = vpop.f32.mrf.mxu0
      %v5888 = vadd.f32 0.0, %v5887
      %5889 = vmatmul.f32.gmra.mxu0 %v5682
      %v5890 = vpop.f32.mrf.mxu0
      %v5891 = vadd.f32 0.0, %v5890
      %5892 = vmatmul.f32.gmra.mxu0 %v5685
      %v5893 = vpop.f32.mrf.mxu0
      %v5894 = vadd.f32 0.0, %v5893
      %5895 = vmatmul.f32.gmra.mxu0 %v5688
      %v5896 = vpop.f32.mrf.mxu0
      %v5897 = vadd.f32 0.0, %v5896
      %5898 = vmatmul.f32.gmra.mxu0 %v5691
      %v5899 = vpop.f32.mrf.mxu0
      %v5900 = vadd.f32 0.0, %v5899
      %5901 = vmatmul.f32.gmra.mxu0 %v5694
      %v5902 = vpop.f32.mrf.mxu0
      %v5903 = vadd.f32 0.0, %v5902
      %5904 = vmatmul.f32.gmra.mxu0 %v5697
      %v5905 = vpop.f32.mrf.mxu0
      %v5906 = vadd.f32 0.0, %v5905
      %5907 = vmatmul.f32.gmra.mxu0 %v5700
      %v5908 = vpop.f32.mrf.mxu0
      %v5909 = vadd.f32 0.0, %v5908
      %5910 = vmatmul.f32.gmra.mxu0 %v5703
      %v5911 = vpop.f32.mrf.mxu0
      %v5912 = vadd.f32 0.0, %v5911
      %5913 = vmatmul.f32.gmra.mxu0 %v5706
      %v5914 = vpop.f32.mrf.mxu0
      %v5915 = vadd.f32 0.0, %v5914
      %5916 = vmatmul.f32.gmra.mxu0 %v5709
      %v5917 = vpop.f32.mrf.mxu0
      %v5918 = vadd.f32 0.0, %v5917
      %5919 = vmatmul.f32.gmra.mxu0 %v5712
      %v5920 = vpop.f32.mrf.mxu0
      %v5921 = vadd.f32 0.0, %v5920
      %5922 = vmatmul.f32.gmra.mxu0 %v5715
      %v5923 = vpop.f32.mrf.mxu0
      %v5924 = vadd.f32 0.0, %v5923
      %5925 = vmatmul.f32.gmra.mxu0 %v5718
      %v5926 = vpop.f32.mrf.mxu0
      %v5927 = vadd.f32 0.0, %v5926
      %5928 = vmatmul.f32.gmra.mxu0 %v5721
      %v5929 = vpop.f32.mrf.mxu0
      %v5930 = vadd.f32 0.0, %v5929
      %5931 = vmatmul.f32.gmra.mxu0 %v5724
      %v5932 = vpop.f32.mrf.mxu0
      %v5933 = vadd.f32 0.0, %v5932
      %5934 = vmatmul.f32.gmra.mxu0 %v5727
      %v5935 = vpop.f32.mrf.mxu0
      %v5936 = vadd.f32 0.0, %v5935
      %5937 = vmatmul.f32.gmra.mxu0 %v5730
      %v5938 = vpop.f32.mrf.mxu0
      %v5939 = vadd.f32 0.0, %v5938
      %5940 = vmatmul.f32.gmra.mxu0 %v5733
      %v5941 = vpop.f32.mrf.mxu0
      %v5942 = vadd.f32 0.0, %v5941
      %5943 = vmatmul.f32.gmra.mxu0 %v5736
      %v5944 = vpop.f32.mrf.mxu0
      %v5945 = vadd.f32 0.0, %v5944
      %5946 = vmatmul.f32.gmra.mxu0 %v5739
      %v5947 = vpop.f32.mrf.mxu0
      %v5948 = vadd.f32 0.0, %v5947
      %5949 = vmatmul.f32.gmra.mxu0 %v5742
      %v5950 = vpop.f32.mrf.mxu0
      %v5951 = vadd.f32 0.0, %v5950
      %5952 = vmatmul.f32.gmra.mxu0 %v5745
      %v5953 = vpop.f32.mrf.mxu0
      %v5954 = vadd.f32 0.0, %v5953
      %5955 = vdwg.mxu0
      %6020 = vrot.lane.b32.xlu0 %v5765, 64
      %v6021 = vpop.permute.xlu0 %6020
      %6022 = vrot.lane.b32.xlu0 %v5768, 64
      %v6023 = vpop.permute.xlu0 %6022
      %6024 = vrot.lane.b32.xlu0 %v5771, 64
      %v6025 = vpop.permute.xlu0 %6024
      %6026 = vrot.lane.b32.xlu0 %v5774, 64
      %v6027 = vpop.permute.xlu0 %6026
      %6028 = vrot.lane.b32.xlu0 %v5777, 64
      %v6029 = vpop.permute.xlu0 %6028
      %6030 = vrot.lane.b32.xlu0 %v5780, 64
      %v6031 = vpop.permute.xlu0 %6030
      %6032 = vrot.lane.b32.xlu0 %v5783, 64
      %v6033 = vpop.permute.xlu0 %6032
      %6034 = vrot.lane.b32.xlu0 %v5786, 64
      %v6035 = vpop.permute.xlu0 %6034
      %6036 = vrot.lane.b32.xlu0 %v5789, 64
      %v6037 = vpop.permute.xlu0 %6036
      %6038 = vrot.lane.b32.xlu0 %v5792, 64
      %v6039 = vpop.permute.xlu0 %6038
      %6040 = vrot.lane.b32.xlu0 %v5795, 64
      %v6041 = vpop.permute.xlu0 %6040
      %6042 = vrot.lane.b32.xlu0 %v5798, 64
      %v6043 = vpop.permute.xlu0 %6042
      %6044 = vrot.lane.b32.xlu0 %v5801, 64
      %v6045 = vpop.permute.xlu0 %6044
      %6046 = vrot.lane.b32.xlu0 %v5804, 64
      %v6047 = vpop.permute.xlu0 %6046
      %6048 = vrot.lane.b32.xlu0 %v5807, 64
      %v6049 = vpop.permute.xlu0 %6048
      %6050 = vrot.lane.b32.xlu0 %v5810, 64
      %v6051 = vpop.permute.xlu0 %6050
      %6052 = vrot.lane.b32.xlu0 %v5813, 64
      %v6053 = vpop.permute.xlu0 %6052
      %6054 = vrot.lane.b32.xlu0 %v5816, 64
      %v6055 = vpop.permute.xlu0 %6054
      %6056 = vrot.lane.b32.xlu0 %v5819, 64
      %v6057 = vpop.permute.xlu0 %6056
      %6058 = vrot.lane.b32.xlu0 %v5822, 64
      %v6059 = vpop.permute.xlu0 %6058
      %6060 = vrot.lane.b32.xlu0 %v5825, 64
      %v6061 = vpop.permute.xlu0 %6060
      %6062 = vrot.lane.b32.xlu0 %v5828, 64
      %v6063 = vpop.permute.xlu0 %6062
      %6064 = vrot.lane.b32.xlu0 %v5831, 64
      %v6065 = vpop.permute.xlu0 %6064
      %6066 = vrot.lane.b32.xlu0 %v5834, 64
      %v6067 = vpop.permute.xlu0 %6066
      %6068 = vrot.lane.b32.xlu0 %v5837, 64
      %v6069 = vpop.permute.xlu0 %6068
      %6070 = vrot.lane.b32.xlu0 %v5840, 64
      %v6071 = vpop.permute.xlu0 %6070
      %6072 = vrot.lane.b32.xlu0 %v5843, 64
      %v6073 = vpop.permute.xlu0 %6072
      %6074 = vrot.lane.b32.xlu0 %v5846, 64
      %v6075 = vpop.permute.xlu0 %6074
      %6076 = vrot.lane.b32.xlu0 %v5849, 64
      %v6077 = vpop.permute.xlu0 %6076
      %6078 = vrot.lane.b32.xlu0 %v5852, 64
      %v6079 = vpop.permute.xlu0 %6078
      %6080 = vrot.lane.b32.xlu0 %v5855, 64
      %v6081 = vpop.permute.xlu0 %6080
      %6082 = vrot.lane.b32.xlu0 %v5858, 64
      %v6083 = vpop.permute.xlu0 %6082
      %6084 = vrot.lane.b32.xlu0 %v5861, 64
      %v6085 = vpop.permute.xlu0 %6084
      %6086 = vrot.lane.b32.xlu0 %v5864, 64
      %v6087 = vpop.permute.xlu0 %6086
      %6088 = vrot.lane.b32.xlu0 %v5867, 64
      %v6089 = vpop.permute.xlu0 %6088
      %6090 = vrot.lane.b32.xlu0 %v5870, 64
      %v6091 = vpop.permute.xlu0 %6090
      %6092 = vrot.lane.b32.xlu0 %v5873, 64
      %v6093 = vpop.permute.xlu0 %6092
      %6094 = vrot.lane.b32.xlu0 %v5876, 64
      %v6095 = vpop.permute.xlu0 %6094
      %6096 = vrot.lane.b32.xlu0 %v5879, 64
      %v6097 = vpop.permute.xlu0 %6096
      %6098 = vrot.lane.b32.xlu0 %v5882, 64
      %v6099 = vpop.permute.xlu0 %6098
      %6100 = vrot.lane.b32.xlu0 %v5885, 64
      %v6101 = vpop.permute.xlu0 %6100
      %6102 = vrot.lane.b32.xlu0 %v5888, 64
      %v6103 = vpop.permute.xlu0 %6102
      %6104 = vrot.lane.b32.xlu0 %v5891, 64
      %v6105 = vpop.permute.xlu0 %6104
      %6106 = vrot.lane.b32.xlu0 %v5894, 64
      %v6107 = vpop.permute.xlu0 %6106
      %6108 = vrot.lane.b32.xlu0 %v5897, 64
      %v6109 = vpop.permute.xlu0 %6108
      %6110 = vrot.lane.b32.xlu0 %v5900, 64
      %v6111 = vpop.permute.xlu0 %6110
      %6112 = vrot.lane.b32.xlu0 %v5903, 64
      %v6113 = vpop.permute.xlu0 %6112
      %6114 = vrot.lane.b32.xlu0 %v5906, 64
      %v6115 = vpop.permute.xlu0 %6114
      %6116 = vrot.lane.b32.xlu0 %v5909, 64
      %v6117 = vpop.permute.xlu0 %6116
      %6118 = vrot.lane.b32.xlu0 %v5912, 64
      %v6119 = vpop.permute.xlu0 %6118
      %6120 = vrot.lane.b32.xlu0 %v5915, 64
      %v6121 = vpop.permute.xlu0 %6120
      %6122 = vrot.lane.b32.xlu0 %v5918, 64
      %v6123 = vpop.permute.xlu0 %6122
      %6124 = vrot.lane.b32.xlu0 %v5921, 64
      %v6125 = vpop.permute.xlu0 %6124
      %6126 = vrot.lane.b32.xlu0 %v5924, 64
      %v6127 = vpop.permute.xlu0 %6126
      %6128 = vrot.lane.b32.xlu0 %v5927, 64
      %v6129 = vpop.permute.xlu0 %6128
      %6130 = vrot.lane.b32.xlu0 %v5930, 64
      %v6131 = vpop.permute.xlu0 %6130
      %6132 = vrot.lane.b32.xlu0 %v5933, 64
      %v6133 = vpop.permute.xlu0 %6132
      %6134 = vrot.lane.b32.xlu0 %v5936, 64
      %v6135 = vpop.permute.xlu0 %6134
      %6136 = vrot.lane.b32.xlu0 %v5939, 64
      %v6137 = vpop.permute.xlu0 %6136
      %6138 = vrot.lane.b32.xlu0 %v5942, 64
      %v6139 = vpop.permute.xlu0 %6138
      %6140 = vrot.lane.b32.xlu0 %v5945, 64
      %v6141 = vpop.permute.xlu0 %6140
      %6142 = vrot.lane.b32.xlu0 %v5948, 64
      %v6143 = vpop.permute.xlu0 %6142
      %6144 = vrot.lane.b32.xlu0 %v5951, 64
      %v6145 = vpop.permute.xlu0 %6144
      %6146 = vrot.lane.b32.xlu0 %v5954, 64
      %v6147 = vpop.permute.xlu0 %6146
      %v6212 = vadd.f32 %v3856, %v6021
      %v6213 = vadd.f32 %v3857, %v6023
      %v6214 = vadd.f32 %v3858, %v6025
      %v6215 = vadd.f32 %v3859, %v6027
      %v6216 = vadd.f32 %v3860, %v6029
      %v6217 = vadd.f32 %v3861, %v6031
      %v6218 = vadd.f32 %v3862, %v6033
      %v6219 = vadd.f32 %v3863, %v6035
      %v6220 = vadd.f32 %v3864, %v6037
      %v6221 = vadd.f32 %v3865, %v6039
      %v6222 = vadd.f32 %v3866, %v6041
      %v6223 = vadd.f32 %v3867, %v6043
      %v6224 = vadd.f32 %v3868, %v6045
      %v6225 = vadd.f32 %v3869, %v6047
      %v6226 = vadd.f32 %v3870, %v6049
      %v6227 = vadd.f32 %v3871, %v6051
      %v6228 = vadd.f32 %v3872, %v6053
      %v6229 = vadd.f32 %v3873, %v6055
      %v6230 = vadd.f32 %v3874, %v6057
      %v6231 = vadd.f32 %v3875, %v6059
      %v6232 = vadd.f32 %v3876, %v6061
      %v6233 = vadd.f32 %v3877, %v6063
      %v6234 = vadd.f32 %v3878, %v6065
      %v6235 = vadd.f32 %v3879, %v6067
      %v6236 = vadd.f32 %v3880, %v6069
      %v6237 = vadd.f32 %v3881, %v6071
      %v6238 = vadd.f32 %v3882, %v6073
      %v6239 = vadd.f32 %v3883, %v6075
      %v6240 = vadd.f32 %v3884, %v6077
      %v6241 = vadd.f32 %v3885, %v6079
      %v6242 = vadd.f32 %v3886, %v6081
      %v6243 = vadd.f32 %v3887, %v6083
      %v6244 = vadd.f32 %v3888, %v6085
      %v6245 = vadd.f32 %v3889, %v6087
      %v6246 = vadd.f32 %v3890, %v6089
      %v6247 = vadd.f32 %v3891, %v6091
      %v6248 = vadd.f32 %v3892, %v6093
      %v6249 = vadd.f32 %v3893, %v6095
      %v6250 = vadd.f32 %v3894, %v6097
      %v6251 = vadd.f32 %v3895, %v6099
      %v6252 = vadd.f32 %v3896, %v6101
      %v6253 = vadd.f32 %v3897, %v6103
      %v6254 = vadd.f32 %v3898, %v6105
      %v6255 = vadd.f32 %v3899, %v6107
      %v6256 = vadd.f32 %v3900, %v6109
      %v6257 = vadd.f32 %v3901, %v6111
      %v6258 = vadd.f32 %v3902, %v6113
      %v6259 = vadd.f32 %v3903, %v6115
      %v6260 = vadd.f32 %v3904, %v6117
      %v6261 = vadd.f32 %v3905, %v6119
      %v6262 = vadd.f32 %v3906, %v6121
      %v6263 = vadd.f32 %v3907, %v6123
      %v6264 = vadd.f32 %v3908, %v6125
      %v6265 = vadd.f32 %v3909, %v6127
      %v6266 = vadd.f32 %v3910, %v6129
      %v6267 = vadd.f32 %v3911, %v6131
      %v6268 = vadd.f32 %v3912, %v6133
      %v6269 = vadd.f32 %v3913, %v6135
      %v6270 = vadd.f32 %v3914, %v6137
      %v6271 = vadd.f32 %v3915, %v6139
      %v6272 = vadd.f32 %v3916, %v6141
      %v6273 = vadd.f32 %v3917, %v6143
      %v6274 = vadd.f32 %v3918, %v6145
      %v6275 = vadd.f32 %v3919, %v6147
      %v6276 = vld [vmem:[%s7] sm:$0x1]
      %v6278 = vperm.slane %v6276, 0
      %6279 = vrot.lane.b32.xlu0 %v6278, 64
      %v6280 = vpop.permute.xlu0 %6279
      %v6282 = vadd.f32 %v6212, %v6280
      %v6283 = vadd.f32 %v6213, %v6280
      %v6284 = vadd.f32 %v6214, %v6280
      %v6285 = vadd.f32 %v6215, %v6280
      %v6286 = vadd.f32 %v6216, %v6280
      %v6287 = vadd.f32 %v6217, %v6280
      %v6288 = vadd.f32 %v6218, %v6280
      %v6289 = vadd.f32 %v6219, %v6280
      %v6290 = vadd.f32 %v6220, %v6280
      %v6291 = vadd.f32 %v6221, %v6280
      %v6292 = vadd.f32 %v6222, %v6280
      %v6293 = vadd.f32 %v6223, %v6280
      %v6294 = vadd.f32 %v6224, %v6280
      %v6295 = vadd.f32 %v6225, %v6280
      %v6296 = vadd.f32 %v6226, %v6280
      %v6297 = vadd.f32 %v6227, %v6280
      %v6298 = vadd.f32 %v6228, %v6280
      %v6299 = vadd.f32 %v6229, %v6280
      %v6300 = vadd.f32 %v6230, %v6280
      %v6301 = vadd.f32 %v6231, %v6280
      %v6302 = vadd.f32 %v6232, %v6280
      %v6303 = vadd.f32 %v6233, %v6280
      %v6304 = vadd.f32 %v6234, %v6280
      %v6305 = vadd.f32 %v6235, %v6280
      %v6306 = vadd.f32 %v6236, %v6280
      %v6307 = vadd.f32 %v6237, %v6280
      %v6308 = vadd.f32 %v6238, %v6280
      %v6309 = vadd.f32 %v6239, %v6280
      %v6310 = vadd.f32 %v6240, %v6280
      %v6311 = vadd.f32 %v6241, %v6280
      %v6312 = vadd.f32 %v6242, %v6280
      %v6313 = vadd.f32 %v6243, %v6280
      %v6314 = vadd.f32 %v6244, %v6280
      %v6315 = vadd.f32 %v6245, %v6280
      %v6316 = vadd.f32 %v6246, %v6280
      %v6317 = vadd.f32 %v6247, %v6280
      %v6318 = vadd.f32 %v6248, %v6280
      %v6319 = vadd.f32 %v6249, %v6280
      %v6320 = vadd.f32 %v6250, %v6280
      %v6321 = vadd.f32 %v6251, %v6280
      %v6322 = vadd.f32 %v6252, %v6280
      %v6323 = vadd.f32 %v6253, %v6280
      %v6324 = vadd.f32 %v6254, %v6280
      %v6325 = vadd.f32 %v6255, %v6280
      %v6326 = vadd.f32 %v6256, %v6280
      %v6327 = vadd.f32 %v6257, %v6280
      %v6328 = vadd.f32 %v6258, %v6280
      %v6329 = vadd.f32 %v6259, %v6280
      %v6330 = vadd.f32 %v6260, %v6280
      %v6331 = vadd.f32 %v6261, %v6280
      %v6332 = vadd.f32 %v6262, %v6280
      %v6333 = vadd.f32 %v6263, %v6280
      %v6334 = vadd.f32 %v6264, %v6280
      %v6335 = vadd.f32 %v6265, %v6280
      %v6336 = vadd.f32 %v6266, %v6280
      %v6337 = vadd.f32 %v6267, %v6280
      %v6338 = vadd.f32 %v6268, %v6280
      %v6339 = vadd.f32 %v6269, %v6280
      %v6340 = vadd.f32 %v6270, %v6280
      %v6341 = vadd.f32 %v6271, %v6280
      %v6342 = vadd.f32 %v6272, %v6280
      %v6343 = vadd.f32 %v6273, %v6280
      %v6344 = vadd.f32 %v6274, %v6280
      %v6345 = vadd.f32 %v6275, %v6280
      %6410 = vrot.lane.b32.xlu0 %v6282, 64
      %v6411 = vpop.permute.xlu0 %6410
      %6412 = vrot.lane.b32.xlu0 %v6283, 64
      %v6413 = vpop.permute.xlu0 %6412
      %6414 = vrot.lane.b32.xlu0 %v6284, 64
      %v6415 = vpop.permute.xlu0 %6414
      %6416 = vrot.lane.b32.xlu0 %v6285, 64
      %v6417 = vpop.permute.xlu0 %6416
      %6418 = vrot.lane.b32.xlu0 %v6286, 64
      %v6419 = vpop.permute.xlu0 %6418
      %6420 = vrot.lane.b32.xlu0 %v6287, 64
      %v6421 = vpop.permute.xlu0 %6420
      %6422 = vrot.lane.b32.xlu0 %v6288, 64
      %v6423 = vpop.permute.xlu0 %6422
      %6424 = vrot.lane.b32.xlu0 %v6289, 64
      %v6425 = vpop.permute.xlu0 %6424
      %6426 = vrot.lane.b32.xlu0 %v6290, 64
      %v6427 = vpop.permute.xlu0 %6426
      %6428 = vrot.lane.b32.xlu0 %v6291, 64
      %v6429 = vpop.permute.xlu0 %6428
      %6430 = vrot.lane.b32.xlu0 %v6292, 64
      %v6431 = vpop.permute.xlu0 %6430
      %6432 = vrot.lane.b32.xlu0 %v6293, 64
      %v6433 = vpop.permute.xlu0 %6432
      %6434 = vrot.lane.b32.xlu0 %v6294, 64
      %v6435 = vpop.permute.xlu0 %6434
      %6436 = vrot.lane.b32.xlu0 %v6295, 64
      %v6437 = vpop.permute.xlu0 %6436
      %6438 = vrot.lane.b32.xlu0 %v6296, 64
      %v6439 = vpop.permute.xlu0 %6438
      %6440 = vrot.lane.b32.xlu0 %v6297, 64
      %v6441 = vpop.permute.xlu0 %6440
      %6442 = vrot.lane.b32.xlu0 %v6298, 64
      %v6443 = vpop.permute.xlu0 %6442
      %6444 = vrot.lane.b32.xlu0 %v6299, 64
      %v6445 = vpop.permute.xlu0 %6444
      %6446 = vrot.lane.b32.xlu0 %v6300, 64
      %v6447 = vpop.permute.xlu0 %6446
      %6448 = vrot.lane.b32.xlu0 %v6301, 64
      %v6449 = vpop.permute.xlu0 %6448
      %6450 = vrot.lane.b32.xlu0 %v6302, 64
      %v6451 = vpop.permute.xlu0 %6450
      %6452 = vrot.lane.b32.xlu0 %v6303, 64
      %v6453 = vpop.permute.xlu0 %6452
      %6454 = vrot.lane.b32.xlu0 %v6304, 64
      %v6455 = vpop.permute.xlu0 %6454
      %6456 = vrot.lane.b32.xlu0 %v6305, 64
      %v6457 = vpop.permute.xlu0 %6456
      %6458 = vrot.lane.b32.xlu0 %v6306, 64
      %v6459 = vpop.permute.xlu0 %6458
      %6460 = vrot.lane.b32.xlu0 %v6307, 64
      %v6461 = vpop.permute.xlu0 %6460
      %6462 = vrot.lane.b32.xlu0 %v6308, 64
      %v6463 = vpop.permute.xlu0 %6462
      %6464 = vrot.lane.b32.xlu0 %v6309, 64
      %v6465 = vpop.permute.xlu0 %6464
      %6466 = vrot.lane.b32.xlu0 %v6310, 64
      %v6467 = vpop.permute.xlu0 %6466
      %6468 = vrot.lane.b32.xlu0 %v6311, 64
      %v6469 = vpop.permute.xlu0 %6468
      %6470 = vrot.lane.b32.xlu0 %v6312, 64
      %v6471 = vpop.permute.xlu0 %6470
      %6472 = vrot.lane.b32.xlu0 %v6313, 64
      %v6473 = vpop.permute.xlu0 %6472
      %6474 = vrot.lane.b32.xlu0 %v6314, 64
      %v6475 = vpop.permute.xlu0 %6474
      %6476 = vrot.lane.b32.xlu0 %v6315, 64
      %v6477 = vpop.permute.xlu0 %6476
      %6478 = vrot.lane.b32.xlu0 %v6316, 64
      %v6479 = vpop.permute.xlu0 %6478
      %6480 = vrot.lane.b32.xlu0 %v6317, 64
      %v6481 = vpop.permute.xlu0 %6480
      %6482 = vrot.lane.b32.xlu0 %v6318, 64
      %v6483 = vpop.permute.xlu0 %6482
      %6484 = vrot.lane.b32.xlu0 %v6319, 64
      %v6485 = vpop.permute.xlu0 %6484
      %6486 = vrot.lane.b32.xlu0 %v6320, 64
      %v6487 = vpop.permute.xlu0 %6486
      %6488 = vrot.lane.b32.xlu0 %v6321, 64
      %v6489 = vpop.permute.xlu0 %6488
      %6490 = vrot.lane.b32.xlu0 %v6322, 64
      %v6491 = vpop.permute.xlu0 %6490
      %6492 = vrot.lane.b32.xlu0 %v6323, 64
      %v6493 = vpop.permute.xlu0 %6492
      %6494 = vrot.lane.b32.xlu0 %v6324, 64
      %v6495 = vpop.permute.xlu0 %6494
      %6496 = vrot.lane.b32.xlu0 %v6325, 64
      %v6497 = vpop.permute.xlu0 %6496
      %6498 = vrot.lane.b32.xlu0 %v6326, 64
      %v6499 = vpop.permute.xlu0 %6498
      %6500 = vrot.lane.b32.xlu0 %v6327, 64
      %v6501 = vpop.permute.xlu0 %6500
      %6502 = vrot.lane.b32.xlu0 %v6328, 64
      %v6503 = vpop.permute.xlu0 %6502
      %6504 = vrot.lane.b32.xlu0 %v6329, 64
      %v6505 = vpop.permute.xlu0 %6504
      %6506 = vrot.lane.b32.xlu0 %v6330, 64
      %v6507 = vpop.permute.xlu0 %6506
      %6508 = vrot.lane.b32.xlu0 %v6331, 64
      %v6509 = vpop.permute.xlu0 %6508
      %6510 = vrot.lane.b32.xlu0 %v6332, 64
      %v6511 = vpop.permute.xlu0 %6510
      %6512 = vrot.lane.b32.xlu0 %v6333, 64
      %v6513 = vpop.permute.xlu0 %6512
      %6514 = vrot.lane.b32.xlu0 %v6334, 64
      %v6515 = vpop.permute.xlu0 %6514
      %6516 = vrot.lane.b32.xlu0 %v6335, 64
      %v6517 = vpop.permute.xlu0 %6516
      %6518 = vrot.lane.b32.xlu0 %v6336, 64
      %v6519 = vpop.permute.xlu0 %6518
      %6520 = vrot.lane.b32.xlu0 %v6337, 64
      %v6521 = vpop.permute.xlu0 %6520
      %6522 = vrot.lane.b32.xlu0 %v6338, 64
      %v6523 = vpop.permute.xlu0 %6522
      %6524 = vrot.lane.b32.xlu0 %v6339, 64
      %v6525 = vpop.permute.xlu0 %6524
      %6526 = vrot.lane.b32.xlu0 %v6340, 64
      %v6527 = vpop.permute.xlu0 %6526
      %6528 = vrot.lane.b32.xlu0 %v6341, 64
      %v6529 = vpop.permute.xlu0 %6528
      %6530 = vrot.lane.b32.xlu0 %v6342, 64
      %v6531 = vpop.permute.xlu0 %6530
      %6532 = vrot.lane.b32.xlu0 %v6343, 64
      %v6533 = vpop.permute.xlu0 %6532
      %6534 = vrot.lane.b32.xlu0 %v6344, 64
      %v6535 = vpop.permute.xlu0 %6534
      %6536 = vrot.lane.b32.xlu0 %v6345, 64
      %v6537 = vpop.permute.xlu0 %6536
      %6602 = vst.msk [vmem:[%s307] sm:$0xff] %vm5486, %v6411
      %6603 = vst.msk [vmem:[%s307 + $0x8] sm:$0xff] %vm5486, %v6413
      %6604 = vst.msk [vmem:[%s307 + $0x10] sm:$0xff] %vm5486, %v6415
      %6605 = vst.msk [vmem:[%s307 + $0x18] sm:$0xff] %vm5486, %v6417
      %6606 = vst.msk [vmem:[%s307 + $0x20] sm:$0xff] %vm5486, %v6419
      %6607 = vst.msk [vmem:[%s307 + $0x28] sm:$0xff] %vm5486, %v6421
      %6608 = vst.msk [vmem:[%s307 + $0x30] sm:$0xff] %vm5486, %v6423
      %6609 = vst.msk [vmem:[%s307 + $0x38] sm:$0xff] %vm5486, %v6425
      %6610 = vst.msk [vmem:[%s307 + $0x40] sm:$0xff] %vm5486, %v6427
      %6611 = vst.msk [vmem:[%s307 + $0x48] sm:$0xff] %vm5486, %v6429
      %6612 = vst.msk [vmem:[%s307 + $0x50] sm:$0xff] %vm5486, %v6431
      %6613 = vst.msk [vmem:[%s307 + $0x58] sm:$0xff] %vm5486, %v6433
      %6614 = vst.msk [vmem:[%s307 + $0x60] sm:$0xff] %vm5486, %v6435
      %6615 = vst.msk [vmem:[%s307 + $0x68] sm:$0xff] %vm5486, %v6437
      %6616 = vst.msk [vmem:[%s307 + $0x70] sm:$0xff] %vm5486, %v6439
      %6617 = vst.msk [vmem:[%s307 + $0x78] sm:$0xff] %vm5486, %v6441
      %6618 = vst.msk [vmem:[%s307 + $0x80] sm:$0xff] %vm5486, %v6443
      %6619 = vst.msk [vmem:[%s307 + $0x88] sm:$0xff] %vm5486, %v6445
      %6620 = vst.msk [vmem:[%s307 + $0x90] sm:$0xff] %vm5486, %v6447
      %6621 = vst.msk [vmem:[%s307 + $0x98] sm:$0xff] %vm5486, %v6449
      %6622 = vst.msk [vmem:[%s307 + $0xa0] sm:$0xff] %vm5486, %v6451
      %6623 = vst.msk [vmem:[%s307 + $0xa8] sm:$0xff] %vm5486, %v6453
      %6624 = vst.msk [vmem:[%s307 + $0xb0] sm:$0xff] %vm5486, %v6455
      %6625 = vst.msk [vmem:[%s307 + $0xb8] sm:$0xff] %vm5486, %v6457
      %6626 = vst.msk [vmem:[%s307 + $0xc0] sm:$0xff] %vm5486, %v6459
      %6627 = vst.msk [vmem:[%s307 + $0xc8] sm:$0xff] %vm5486, %v6461
      %6628 = vst.msk [vmem:[%s307 + $0xd0] sm:$0xff] %vm5486, %v6463
      %6629 = vst.msk [vmem:[%s307 + $0xd8] sm:$0xff] %vm5486, %v6465
      %6630 = vst.msk [vmem:[%s307 + $0xe0] sm:$0xff] %vm5486, %v6467
      %6631 = vst.msk [vmem:[%s307 + $0xe8] sm:$0xff] %vm5486, %v6469
      %6632 = vst.msk [vmem:[%s307 + $0xf0] sm:$0xff] %vm5486, %v6471
      %6633 = vst.msk [vmem:[%s307 + $0xf8] sm:$0xff] %vm5486, %v6473
      %6634 = vst.msk [vmem:[%s307 + $0x100] sm:$0xff] %vm5486, %v6475
      %6635 = vst.msk [vmem:[%s307 + $0x108] sm:$0xff] %vm5486, %v6477
      %6636 = vst.msk [vmem:[%s307 + $0x110] sm:$0xff] %vm5486, %v6479
      %6637 = vst.msk [vmem:[%s307 + $0x118] sm:$0xff] %vm5486, %v6481
      %6638 = vst.msk [vmem:[%s307 + $0x120] sm:$0xff] %vm5486, %v6483
      %6639 = vst.msk [vmem:[%s307 + $0x128] sm:$0xff] %vm5486, %v6485
      %6640 = vst.msk [vmem:[%s307 + $0x130] sm:$0xff] %vm5486, %v6487
      %6641 = vst.msk [vmem:[%s307 + $0x138] sm:$0xff] %vm5486, %v6489
      %6642 = vst.msk [vmem:[%s307 + $0x140] sm:$0xff] %vm5486, %v6491
      %6643 = vst.msk [vmem:[%s307 + $0x148] sm:$0xff] %vm5486, %v6493
      %6644 = vst.msk [vmem:[%s307 + $0x150] sm:$0xff] %vm5486, %v6495
      %6645 = vst.msk [vmem:[%s307 + $0x158] sm:$0xff] %vm5486, %v6497
      %6646 = vst.msk [vmem:[%s307 + $0x160] sm:$0xff] %vm5486, %v6499
      %6647 = vst.msk [vmem:[%s307 + $0x168] sm:$0xff] %vm5486, %v6501
      %6648 = vst.msk [vmem:[%s307 + $0x170] sm:$0xff] %vm5486, %v6503
      %6649 = vst.msk [vmem:[%s307 + $0x178] sm:$0xff] %vm5486, %v6505
      %6650 = vst.msk [vmem:[%s307 + $0x180] sm:$0xff] %vm5486, %v6507
      %6651 = vst.msk [vmem:[%s307 + $0x188] sm:$0xff] %vm5486, %v6509
      %6652 = vst.msk [vmem:[%s307 + $0x190] sm:$0xff] %vm5486, %v6511
      %6653 = vst.msk [vmem:[%s307 + $0x198] sm:$0xff] %vm5486, %v6513
      %6654 = vst.msk [vmem:[%s307 + $0x1a0] sm:$0xff] %vm5486, %v6515
      %6655 = vst.msk [vmem:[%s307 + $0x1a8] sm:$0xff] %vm5486, %v6517
      %6656 = vst.msk [vmem:[%s307 + $0x1b0] sm:$0xff] %vm5486, %v6519
      %6657 = vst.msk [vmem:[%s307 + $0x1b8] sm:$0xff] %vm5486, %v6521
      %6658 = vst.msk [vmem:[%s307 + $0x1c0] sm:$0xff] %vm5486, %v6523
      %6659 = vst.msk [vmem:[%s307 + $0x1c8] sm:$0xff] %vm5486, %v6525
      %6660 = vst.msk [vmem:[%s307 + $0x1d0] sm:$0xff] %vm5486, %v6527
      %6661 = vst.msk [vmem:[%s307 + $0x1d8] sm:$0xff] %vm5486, %v6529
      %6662 = vst.msk [vmem:[%s307 + $0x1e0] sm:$0xff] %vm5486, %v6531
      %6663 = vst.msk [vmem:[%s307 + $0x1e8] sm:$0xff] %vm5486, %v6533
      %6664 = vst.msk [vmem:[%s307 + $0x1f0] sm:$0xff] %vm5486, %v6535
      %6665 = vst.msk [vmem:[%s307 + $0x1f8] sm:$0xff] %vm5486, %v6537
      %s6666 = smul.u32 64, %s19
      %p6667 = scmp.lt.s32.totalorder %s6666, 127
      %s6668 = scalar_select %p6667, %s6666, 127
      %s6669 = smul.addr %s6668, 8
      %s6670 = scalar_lea.vmem %s8, %s6669
      // Predicated region
      $region53: #{tpu_custom_call.1} parent=51 // pred_check
        %p6671 = pneg %p210
      $region54: #{tpu_custom_call.1} parent=51 // pred_check_branch
        %6673 = sbr.rel (%p6671) target = $region56
      $region55: #{tpu_custom_call.1} parent=51 // pred_region
        %s6674 = smul.u32 64, %s19
      $region56: #{tpu_custom_call.1} parent=51 // pred_fallthru
        _
    $region52: #{tpu_custom_call.1} parent=5 // pred_fallthru
      _
    %p6675 = scmp.le.s32.totalorder 2, %s14
    // Predicated region
    $region57: #{tpu_custom_call.1} parent=5 // pred_check
      %p6676 = pneg %p6675
    $region58: #{tpu_custom_call.1} parent=5 // pred_check_branch
      %6678 = sbr.rel (%p6676) target = $region60
    $region59: #{tpu_custom_call.1} parent=5 // pred_region
      %s6679 = ssub.s32 %s14, 2
      // Predicated region
      $region61: #{tpu_custom_call.1} parent=59 // pred_check
        %p6680 = pneg %p216
      $region62: #{tpu_custom_call.1} parent=59 // pred_check_branch
        %6682 = sbr.rel (%p6680) target = $region64
      $region63: #{tpu_custom_call.1} parent=59 // pred_region
        %s6683 = smul.u32 64, %s20
        %p6684 = scmp.lt.s32.totalorder %s6683, 127
        %s6685 = scalar_select %p6684, %s6683, 127
        %s6686 = smul.addr %s6685, 8
        %s6687 = scalar_lea.vmem %s8, %s6686
      $region64: #{tpu_custom_call.1} parent=59 // pred_fallthru
        _
    $region60: #{tpu_custom_call.1} parent=5 // pred_fallthru
      _
  $region6: #{tpu_custom_call.1} parent=0 // loop_footer
    %s18 = sadd.s32 1, %s14
  $region7: #{tpu_custom_call.1} parent=0 // loop_footer_branch
    %13 = sbr.rel target = $region3
  $region8: #{tpu_custom_call.1} parent=0 // loop_exit
    _

</llo_original>
